<compile_context>
chip_gen: v6e
topology: v6e:2x2x1
jax: 0.10.0
libtpu: 0.0.40
codegen_flags: <defaults>
</compile_context>

<pallas_src>
import jax
import jax.numpy as jnp
from jax.experimental import pallas as pl
from jax.experimental.pallas import tpu as pltpu

BN_EPS = 1e-5
MXU_DTYPE = jnp.bfloat16   # MXU operand precision (accumulation stays f32)


# ----------------------------------------------------------------------------
# In-kernel helpers
# ----------------------------------------------------------------------------
def _conv3x3_accumulate(x_hwc, w_ref, acc_ref):
    """acc_ref <- conv3x3(x_hwc, w) as three row contractions with K=3*Cin.

    x_hwc:   (H, W, Cin) float32 value (already pooled / normalized).
    w_ref:   (3, 3*Cin, Cout) bf16 ref; row dy flattened over (dx, ci).
    acc_ref: (H*W, Cout) float32 VMEM scratch accumulator.
    """
    h, w, cin = x_hwc.shape
    # padding=1 built as values (no misaligned scratch stores, no full zero fill)
    zc = jnp.zeros((h, 1, cin), jnp.float32)
    xp = jnp.concatenate([zc, x_hwc, zc], axis=1)            # (H, W+2, Cin)
    zr = jnp.zeros((1, w + 2, cin), jnp.float32)
    xp = jnp.concatenate([zr, xp, zr], axis=0)               # (H+2, W+2, Cin)
    for dy in range(3):
        rows = xp[dy:dy + h]                                 # (H, W+2, Cin)
        patch = jnp.concatenate(                             # (H, W, 3*Cin)
            [rows[:, 0:w], rows[:, 1:w + 1], rows[:, 2:w + 2]], axis=-1)
        patch = patch.reshape(h * w, 3 * cin).astype(MXU_DTYPE)
        contrib = jnp.dot(patch, w_ref[dy],
                          preferred_element_type=jnp.float32)
        if dy == 0:
            acc_ref[...] = contrib
        else:
            acc_ref[...] += contrib


def _write_partial_stats(stats_ref, acc):
    """Per-image partial [sum, sum_of_squares] over the H*W axis."""
    stats_ref[0] = jnp.concatenate(
        [jnp.sum(acc, axis=0, keepdims=True),
         jnp.sum(acc * acc, axis=0, keepdims=True)], axis=0)


# ----------------------------------------------------------------------------
# Kernels (grid = (N,), one pooled image per step)
# ----------------------------------------------------------------------------
def _pool_conv1_kernel(x_ref, w_ref, y_ref, stats_ref, acc_ref):
    # x_ref: (1, H, 2, W, 2, Cin) with the 2x2 pooling windows as explicit axes
    _, h, _, w, _, _ = x_ref.shape
    cout = y_ref.shape[-1]
    xw = x_ref[0]                              # (H, 2, W, 2, Cin)
    xw = jnp.max(xw, axis=3)                   # (H, 2, W, Cin)
    pooled = jnp.max(xw, axis=1)               # (H, W, Cin)  == MaxPool2d(2)
    _conv3x3_accumulate(pooled, w_ref, acc_ref)
    acc = acc_ref[...]                         # raw conv1 output (H*W, Cout)
    _write_partial_stats(stats_ref, acc)
    y_ref[0] = acc.reshape(h, w, cout)


def _bn_conv2_kernel(y1_ref, scale_ref, shift_ref, w_ref, y_ref, stats_ref,
                     acc_ref):
    # y1_ref: (1, H, W, C) raw conv1 output; scale/shift: (1, C) folded BN1.
    _, h, w, c = y1_ref.shape
    x = jnp.maximum(y1_ref[0] * scale_ref[0] + shift_ref[0], 0.0)  # BN1 + ReLU
    _conv3x3_accumulate(x, w_ref, acc_ref)
    acc = acc_ref[...]                         # raw conv2 output (H*W, C)
    _write_partial_stats(stats_ref, acc)
    y_ref[0] = acc.reshape(h, w, c)


def _bn_relu_kernel(y2_ref, scale_ref, shift_ref, o_ref):
    # Final BN2 + ReLU once the global statistics are known (single FMA).
    o_ref[0] = jnp.maximum(y2_ref[0] * scale_ref[0] + shift_ref[0], 0.0)


# ----------------------------------------------------------------------------
# Host-side helpers
# ----------------------------------------------------------------------------
def _fold_bn(partial_stats, gamma, beta, m_total):
    """(N, 2, C) per-image [sum, sum_sq] -> folded per-channel scale/shift."""
    s = jnp.sum(partial_stats, axis=0)                    # (2, C)
    mean = s[0] / m_total
    var = s[1] / m_total - mean * mean                    # biased (train mode)
    scale = gamma * jax.lax.rsqrt(var + BN_EPS)
    shift = beta - mean * scale
    return scale.reshape(1, -1), shift.reshape(1, -1)


def _mosaic_params(block_bytes):
    """Parallel batch axis + explicit VMEM limit (valid on v5e/v6e/v7x)."""
    limit = int(min(max(block_bytes + (4 << 20), 8 << 20), 64 << 20))
    return pltpu.CompilerParams(dimension_semantics=("parallel",),
                                vmem_limit_bytes=limit)


@jax.jit
def down_forward_nhwc(x_nhwc, w1_hwio, g1, b1, w2_hwio, g2, b2):
    """Down.forward on an NHWC input, NHWC output (transpose-free path)."""
    n, hin, win, cin = x_nhwc.shape
    assert hin % 2 == 0 and win % 2 == 0, "MaxPool2d(2) needs even H and W"
    h, w = hin // 2, win // 2
    cout = w1_hwio.shape[-1]
    m_total = float(n * h * w)

    # Expose 2x2 pooling windows; flatten each weight row over (dx, ci); bf16
    # MXU operands are prepared once here.
    x_win = x_nhwc.reshape(n, h, 2, w, 2, cin)
    w1_rows = w1_hwio.reshape(3, 3 * cin, cout).astype(MXU_DTYPE)
    w2_rows = w2_hwio.reshape(3, 3 * cout, cout).astype(MXU_DTYPE)

    # Per-block byte estimates (x2 for pipeline double buffering) + in-kernel
    # temporaries (padded image, patch matrices, VMEM accumulator).
    f32b, bf16b = 4, 2
    blk_x = h * 2 * w * 2 * cin * f32b
    blk_mid = h * w * cout * f32b
    blk_stats = 2 * cout * f32b
    blk_vec = cout * f32b
    blk_w1 = 9 * cin * cout * bf16b
    blk_w2 = 9 * cout * cout * bf16b
    scratch = h * w * cout * f32b
    tmp1 = (h + 2) * (w + 2) * cin * f32b + h * w * 3 * cin * (f32b + bf16b)
    tmp2 = (h + 2) * (w + 2) * cout * f32b + h * w * 3 * cout * (f32b + bf16b)

    # ---- Phase 1: MaxPool + conv1, per-image partial BN1 statistics --------
    y1_raw, stats1 = pl.pallas_call(
        _pool_conv1_kernel,
        grid=(n,),
        in_specs=[
            pl.BlockSpec((1, h, 2, w, 2, cin), lambda i: (i, 0, 0, 0, 0, 0)),
            pl.BlockSpec((3, 3 * cin, cout), lambda i: (0, 0, 0)),
        ],
        out_specs=[
            pl.BlockSpec((1, h, w, cout), lambda i: (i, 0, 0, 0)),
            pl.BlockSpec((1, 2, cout), lambda i: (i, 0, 0)),
        ],
        out_shape=(jax.ShapeDtypeStruct((n, h, w, cout), jnp.float32),
                   jax.ShapeDtypeStruct((n, 2, cout), jnp.float32)),
        scratch_shapes=[pltpu.VMEM((h * w, cout), jnp.float32)],
        compiler_params=_mosaic_params(
            2 * (blk_x + blk_w1 + blk_mid + blk_stats) + scratch + tmp1),
    )(x_win, w1_rows)

    scale1, shift1 = _fold_bn(stats1, g1, b1, m_total)

    # ---- Phase 2: BN1+ReLU (folded FMA) + conv2, partial BN2 statistics ----
    y2_raw, stats2 = pl.pallas_call(
        _bn_conv2_kernel,
        grid=(n,),
        in_specs=[
            pl.BlockSpec((1, h, w, cout), lambda i: (i, 0, 0, 0)),
            pl.BlockSpec((1, cout), lambda i: (0, 0)),
            pl.BlockSpec((1, cout), lambda i: (0, 0)),
            pl.BlockSpec((3, 3 * cout, cout), lambda i: (0, 0, 0)),
        ],
        out_specs=[
            pl.BlockSpec((1, h, w, cout), lambda i: (i, 0, 0, 0)),
            pl.BlockSpec((1, 2, cout), lambda i: (i, 0, 0)),
        ],
        out_shape=(jax.ShapeDtypeStruct((n, h, w, cout), jnp.float32),
                   jax.ShapeDtypeStruct((n, 2, cout), jnp.float32)),
        scratch_shapes=[pltpu.VMEM((h * w, cout), jnp.float32)],
        compiler_params=_mosaic_params(
            2 * (2 * blk_mid + 2 * blk_vec + blk_w2 + blk_stats)
            + scratch + tmp2),
    )(y1_raw, scale1, shift1, w2_rows)

    scale2, shift2 = _fold_bn(stats2, g2, b2, m_total)
    # TODO(synk): BatchNorm running_mean/running_var momentum updates (a
    # training-time side effect that does not change this forward output) are
    # not reproduced.

    # ---- Phase 3: BN2 + ReLU with the finished statistics ------------------
    out = pl.pallas_call(
        _bn_relu_kernel,
        grid=(n,),
        in_specs=[
            pl.BlockSpec((1, h, w, cout), lambda i: (i, 0, 0, 0)),
            pl.BlockSpec((1, cout), lambda i: (0, 0)),
            pl.BlockSpec((1, cout), lambda i: (0, 0)),
        ],
        out_specs=pl.BlockSpec((1, h, w, cout), lambda i: (i, 0, 0, 0)),
        out_shape=jax.ShapeDtypeStruct((n, h, w, cout), jnp.float32),
        compiler_params=_mosaic_params(2 * (2 * blk_mid + 2 * blk_vec)),
    )(y2_raw, scale2, shift2)
    return out


@jax.jit
def down_forward(x_nchw, w1_hwio, g1, b1, w2_hwio, g2, b2):
    """Drop-in NCHW interface matching the PyTorch module.

    The two transposes are interface plumbing only; an NHWC-native caller
    should use `down_forward_nhwc` directly and skip both HBM passes.
    """
    x_nhwc = jnp.transpose(x_nchw, (0, 2, 3, 1))
    y = down_forward_nhwc(x_nhwc, w1_hwio, g1, b1, w2_hwio, g2, b2)
    return jnp.transpose(y, (0, 3, 1, 2))


# ----------------------------------------------------------------------------
# Pure-JAX reference (train-mode BatchNorm), for validation only
# ----------------------------------------------------------------------------
def down_reference(x_nchw, w1_hwio, g1, b1, w2_hwio, g2, b2,
                   matmul_dtype=jnp.float32):
    """matmul_dtype=bfloat16 mirrors the kernel's MXU operand precision
    (f32 accumulation, f32 BN math) for a tight structural check."""
    def conv_block(x, w_hwio, g, b):
        y = jax.lax.conv_general_dilated(
            x.astype(matmul_dtype), w_hwio.astype(matmul_dtype),
            window_strides=(1, 1), padding=((1, 1), (1, 1)),
            dimension_numbers=("NCHW", "HWIO", "NCHW"),
            preferred_element_type=jnp.float32,
            precision=jax.lax.Precision.HIGHEST)
        mu = jnp.mean(y, axis=(0, 2, 3), keepdims=True)
        var = jnp.mean((y - mu) ** 2, axis=(0, 2, 3), keepdims=True)
        y = (y - mu) * jax.lax.rsqrt(var + BN_EPS)
        y = y * g.reshape(1, -1, 1, 1) + b.reshape(1, -1, 1, 1)
        return jnp.maximum(y, 0.0)

    n, c, hin, win = x_nchw.shape
    xp = x_nchw.reshape(n, c, hin // 2, 2, win // 2, 2).max(axis=(3, 5))
    return conv_block(conv_block(xp, w1_hwio, g1, b1), w2_hwio, g2, b2)


if __name__ == "__main__":
    # Small but channel-realistic Down(4, 128): Cout = 128 keeps conv outputs
    # and intermediates lane-dense (last dim fills a full 128-lane vreg row).
    N, CIN, COUT, HIN, WIN = 2, 4, 128, 16, 16
    key = jax.random.PRNGKey(0)
    kx, kw1, kg1, kb1, kw2, kg2, kb2 = jax.random.split(key, 7)

    x = jax.random.normal(kx, (N, CIN, HIN, WIN), jnp.float32)
    # Conv2d weights: PyTorch layout (Cout, Cin, 3, 3) -> HWIO.
    w1 = jnp.transpose(0.20 * jax.random.normal(kw1, (COUT, CIN, 3, 3),
                                                jnp.float32), (2, 3, 1, 0))
    w2 = jnp.transpose(0.15 * jax.random.normal(kw2, (COUT, COUT, 3, 3),
                                                jnp.float32), (2, 3, 1, 0))
    # BatchNorm2d affine parameters (gamma, beta).
    g1 = 1.0 + 0.1 * jax.random.normal(kg1, (COUT,), jnp.float32)
    b1 = 0.1 * jax.random.normal(kb1, (COUT,), jnp.float32)
    g2 = 1.0 + 0.1 * jax.random.normal(kg2, (COUT,), jnp.float32)
    b2 = 0.1 * jax.random.normal(kb2, (COUT,), jnp.float32)

    out = jax.block_until_ready(down_forward(x, w1, g1, b1, w2, g2, b2))
    assert out.shape == (N, COUT, HIN // 2, WIN // 2), out.shape

    # Tight structural check: reference that feeds the MXU the same
    # bf16-rounded operands (f32 accumulation / f32 BN, like the kernel).
    ref_bf16 = down_reference(x, w1, g1, b1, w2, g2, b2,
                              matmul_dtype=jnp.bfloat16)
    err_bf16 = float(jnp.max(jnp.abs(out - ref_bf16)))
    assert err_bf16 < 5e-3, f"bf16-matmul reference mismatch: {err_bf16}"

    # Fidelity check vs. the full-f32 module forward; the gap is the
    # documented bf16-MXU operand rounding (~1% relative on the O(1),
    # batch-normalized outputs, max over all elements).
    ref_f32 = down_reference(x, w1, g1, b1, w2, g2, b2,
                             matmul_dtype=jnp.float32)
    err_f32 = float(jnp.max(jnp.abs(out - ref_f32)))
    assert err_f32 < 8e-2, f"f32 reference mismatch: {err_f32}"

    print("KERNEL_OK")
</pallas_src>

<mosaic_0001>
module attributes {stable_mosaic.version = 11 : i64} {
  func.func @_pool_conv1_kernel(%arg0: i32, %arg1: memref<1x8x2x8x2x4xf32, #tpu.memory_space<vmem>>, %arg2: memref<3x12x128xbf16, #tpu.memory_space<vmem>>, %arg3: memref<1x8x8x128xf32, #tpu.memory_space<vmem>>, %arg4: memref<1x2x128xf32, #tpu.memory_space<vmem>>, %arg5: memref<64x128xf32, #tpu.memory_space<vmem>>) attributes {dimension_semantics = [#tpu.dimension_semantics<parallel>], iteration_bounds = array<i64: 2>, scalar_prefetch = 0 : i64, scratch_operands = 1 : i64, tpu.core_type = #tpu.core_type<tc>, window_params = [{transform_indices = @transform_0, window_bounds = array<i64: 1, 8, 2, 8, 2, 4>}, {pipeline_mode = #tpu.pipeline_mode<synchronous>, transform_indices = @transform_1, window_bounds = array<i64: 3, 12, 128>}, {transform_indices = @transform_2, window_bounds = array<i64: 1, 8, 8, 128>}, {transform_indices = @transform_3, window_bounds = array<i64: 1, 2, 128>}]} {
    %c0 = arith.constant 0 : index
    %c0_0 = arith.constant 0 : index
    %c0_1 = arith.constant 0 : index
    %c0_2 = arith.constant 0 : index
    %c0_3 = arith.constant 0 : index
    %c0_4 = arith.constant 0 : index
    %0 = vector.load %arg1[%c0, %c0_0, %c0_1, %c0_2, %c0_3, %c0_4] : memref<1x8x2x8x2x4xf32, #tpu.memory_space<vmem>>, vector<1x8x2x8x2x4xf32>
    %1 = vector.shape_cast %0 : vector<1x8x2x8x2x4xf32> to vector<8x2x8x2x4xf32>
    %cst = arith.constant dense<0xFF800000> : vector<8x2x8x4xf32>
    %2 = vector.multi_reduction <maximumf>, %1, %cst [3] : vector<8x2x8x2x4xf32> to vector<8x2x8x4xf32>
    %cst_5 = arith.constant dense<0xFF800000> : vector<8x8x4xf32>
    %3 = vector.multi_reduction <maximumf>, %2, %cst_5 [1] : vector<8x2x8x4xf32> to vector<8x8x4xf32>
    %cst_6 = arith.constant 0.000000e+00 : f32
    %4 = vector.broadcast %cst_6 : f32 to vector<8x1x4xf32>
    %5 = tpu.concatenate %4, %3, %4 in 1 : vector<8x1x4xf32>, vector<8x8x4xf32>, vector<8x1x4xf32> -> vector<8x10x4xf32>
    %cst_7 = arith.constant 0.000000e+00 : f32
    %6 = vector.broadcast %cst_7 : f32 to vector<1x10x4xf32>
    %7 = tpu.concatenate %6, %5, %6 in 0 : vector<1x10x4xf32>, vector<8x10x4xf32>, vector<1x10x4xf32> -> vector<10x10x4xf32>
    %8 = vector.extract_strided_slice %7 {offsets = [0, 0, 0], sizes = [8, 10, 4], strides = [1, 1, 1]} : vector<10x10x4xf32> to vector<8x10x4xf32>
    %9 = vector.extract_strided_slice %8 {offsets = [0, 0, 0], sizes = [8, 8, 4], strides = [1, 1, 1]} : vector<8x10x4xf32> to vector<8x8x4xf32>
    %10 = vector.extract_strided_slice %8 {offsets = [0, 1, 0], sizes = [8, 8, 4], strides = [1, 1, 1]} : vector<8x10x4xf32> to vector<8x8x4xf32>
    %11 = vector.extract_strided_slice %8 {offsets = [0, 2, 0], sizes = [8, 8, 4], strides = [1, 1, 1]} : vector<8x10x4xf32> to vector<8x8x4xf32>
    %12 = tpu.concatenate %9, %10, %11 in 2 : vector<8x8x4xf32>, vector<8x8x4xf32>, vector<8x8x4xf32> -> vector<8x8x12xf32>
    %13 = vector.shape_cast %12 : vector<8x8x12xf32> to vector<64x12xf32>
    %14 = arith.truncf %13 : vector<64x12xf32> to vector<64x12xbf16>
    %c0_8 = arith.constant 0 : index
    %c0_9 = arith.constant 0 : index
    %c0_10 = arith.constant 0 : index
    %15 = vector.load %arg2[%c0_8, %c0_9, %c0_10] : memref<3x12x128xbf16, #tpu.memory_space<vmem>>, vector<1x12x128xbf16>
    %16 = vector.shape_cast %15 : vector<1x12x128xbf16> to vector<12x128xbf16>
    %cst_11 = arith.constant dense<0.000000e+00> : vector<64x128xf32>
    %17 = tpu.matmul %14, %16, %cst_11 {dimension_numbers = #tpu.dot_dimension_numbers<[1], [0], [0], [1], [0, 0, 1, 1], [], []>} : vector<64x12xbf16>, vector<12x128xbf16>, vector<64x128xf32> -> vector<64x128xf32>
    %c0_12 = arith.constant 0 : index
    %c0_13 = arith.constant 0 : index
    %18 = vector.load %arg5[%c0_12, %c0_13] : memref<64x128xf32, #tpu.memory_space<vmem>>, vector<64x128xf32>
    tpu.vector_store %arg5[%c0_12, %c0_13], %17 {strides = array<i32>} : memref<64x128xf32, #tpu.memory_space<vmem>>, vector<64x128xf32>,
    %19 = vector.extract_strided_slice %7 {offsets = [1, 0, 0], sizes = [8, 10, 4], strides = [1, 1, 1]} : vector<10x10x4xf32> to vector<8x10x4xf32>
    %20 = vector.extract_strided_slice %19 {offsets = [0, 0, 0], sizes = [8, 8, 4], strides = [1, 1, 1]} : vector<8x10x4xf32> to vector<8x8x4xf32>
    %21 = vector.extract_strided_slice %19 {offsets = [0, 1, 0], sizes = [8, 8, 4], strides = [1, 1, 1]} : vector<8x10x4xf32> to vector<8x8x4xf32>
    %22 = vector.extract_strided_slice %19 {offsets = [0, 2, 0], sizes = [8, 8, 4], strides = [1, 1, 1]} : vector<8x10x4xf32> to vector<8x8x4xf32>
    %23 = tpu.concatenate %20, %21, %22 in 2 : vector<8x8x4xf32>, vector<8x8x4xf32>, vector<8x8x4xf32> -> vector<8x8x12xf32>
    %24 = vector.shape_cast %23 : vector<8x8x12xf32> to vector<64x12xf32>
    %25 = arith.truncf %24 : vector<64x12xf32> to vector<64x12xbf16>
    %c1 = arith.constant 1 : index
    %c0_14 = arith.constant 0 : index
    %c0_15 = arith.constant 0 : index
    %26 = vector.load %arg2[%c1, %c0_14, %c0_15] : memref<3x12x128xbf16, #tpu.memory_space<vmem>>, vector<1x12x128xbf16>
    %27 = vector.shape_cast %26 : vector<1x12x128xbf16> to vector<12x128xbf16>
    %cst_16 = arith.constant dense<0.000000e+00> : vector<64x128xf32>
    %28 = tpu.matmul %25, %27, %cst_16 {dimension_numbers = #tpu.dot_dimension_numbers<[1], [0], [0], [1], [0, 0, 1, 1], [], []>} : vector<64x12xbf16>, vector<12x128xbf16>, vector<64x128xf32> -> vector<64x128xf32>
    %c0_17 = arith.constant 0 : index
    %c0_18 = arith.constant 0 : index
    %29 = vector.load %arg5[%c0_17, %c0_18] : memref<64x128xf32, #tpu.memory_space<vmem>>, vector<64x128xf32>
    %30 = arith.addf %29, %28 : vector<64x128xf32>
    %c0_19 = arith.constant 0 : index
    %c0_20 = arith.constant 0 : index
    %31 = vector.load %arg5[%c0_19, %c0_20] : memref<64x128xf32, #tpu.memory_space<vmem>>, vector<64x128xf32>
    tpu.vector_store %arg5[%c0_19, %c0_20], %30 {strides = array<i32>} : memref<64x128xf32, #tpu.memory_space<vmem>>, vector<64x128xf32>,
    %32 = vector.extract_strided_slice %7 {offsets = [2, 0, 0], sizes = [8, 10, 4], strides = [1, 1, 1]} : vector<10x10x4xf32> to vector<8x10x4xf32>
    %33 = vector.extract_strided_slice %32 {offsets = [0, 0, 0], sizes = [8, 8, 4], strides = [1, 1, 1]} : vector<8x10x4xf32> to vector<8x8x4xf32>
    %34 = vector.extract_strided_slice %32 {offsets = [0, 1, 0], sizes = [8, 8, 4], strides = [1, 1, 1]} : vector<8x10x4xf32> to vector<8x8x4xf32>
    %35 = vector.extract_strided_slice %32 {offsets = [0, 2, 0], sizes = [8, 8, 4], strides = [1, 1, 1]} : vector<8x10x4xf32> to vector<8x8x4xf32>
    %36 = tpu.concatenate %33, %34, %35 in 2 : vector<8x8x4xf32>, vector<8x8x4xf32>, vector<8x8x4xf32> -> vector<8x8x12xf32>
    %37 = vector.shape_cast %36 : vector<8x8x12xf32> to vector<64x12xf32>
    %38 = arith.truncf %37 : vector<64x12xf32> to vector<64x12xbf16>
    %c2 = arith.constant 2 : index
    %c0_21 = arith.constant 0 : index
    %c0_22 = arith.constant 0 : index
    %39 = vector.load %arg2[%c2, %c0_21, %c0_22] : memref<3x12x128xbf16, #tpu.memory_space<vmem>>, vector<1x12x128xbf16>
    %40 = vector.shape_cast %39 : vector<1x12x128xbf16> to vector<12x128xbf16>
    %cst_23 = arith.constant dense<0.000000e+00> : vector<64x128xf32>
    %41 = tpu.matmul %38, %40, %cst_23 {dimension_numbers = #tpu.dot_dimension_numbers<[1], [0], [0], [1], [0, 0, 1, 1], [], []>} : vector<64x12xbf16>, vector<12x128xbf16>, vector<64x128xf32> -> vector<64x128xf32>
    %c0_24 = arith.constant 0 : index
    %c0_25 = arith.constant 0 : index
    %42 = vector.load %arg5[%c0_24, %c0_25] : memref<64x128xf32, #tpu.memory_space<vmem>>, vector<64x128xf32>
    %43 = arith.addf %42, %41 : vector<64x128xf32>
    %c0_26 = arith.constant 0 : index
    %c0_27 = arith.constant 0 : index
    %44 = vector.load %arg5[%c0_26, %c0_27] : memref<64x128xf32, #tpu.memory_space<vmem>>, vector<64x128xf32>
    tpu.vector_store %arg5[%c0_26, %c0_27], %43 {strides = array<i32>} : memref<64x128xf32, #tpu.memory_space<vmem>>, vector<64x128xf32>,
    %c0_28 = arith.constant 0 : index
    %c0_29 = arith.constant 0 : index
    %45 = vector.load %arg5[%c0_28, %c0_29] : memref<64x128xf32, #tpu.memory_space<vmem>>, vector<64x128xf32>
    %cst_30 = arith.constant dense<0.000000e+00> : vector<128xf32>
    %46 = vector.multi_reduction <add>, %45, %cst_30 [0] : vector<64x128xf32> to vector<128xf32>
    %47 = vector.shape_cast %46 : vector<128xf32> to vector<1x128xf32>
    %48 = arith.mulf %45, %45 : vector<64x128xf32>
    %cst_31 = arith.constant dense<0.000000e+00> : vector<128xf32>
    %49 = vector.multi_reduction <add>, %48, %cst_31 [0] : vector<64x128xf32> to vector<128xf32>
    %50 = vector.shape_cast %49 : vector<128xf32> to vector<1x128xf32>
    %51 = tpu.concatenate %47, %50 in 0 : vector<1x128xf32>, vector<1x128xf32> -> vector<2x128xf32>
    %c0_32 = arith.constant 0 : index
    %c0_33 = arith.constant 0 : index
    %c0_34 = arith.constant 0 : index
    %52 = vector.load %arg4[%c0_32, %c0_33, %c0_34] : memref<1x2x128xf32, #tpu.memory_space<vmem>>, vector<1x2x128xf32>
    %53 = vector.shape_cast %52 : vector<1x2x128xf32> to vector<2x128xf32>
    %54 = vector.shape_cast %51 : vector<2x128xf32> to vector<1x2x128xf32>
    tpu.vector_store %arg4[%c0_32, %c0_33, %c0_34], %54 {strides = array<i32>} : memref<1x2x128xf32, #tpu.memory_space<vmem>>, vector<1x2x128xf32>,
    %55 = vector.shape_cast %45 : vector<64x128xf32> to vector<8x8x128xf32>
    %c0_35 = arith.constant 0 : index
    %c0_36 = arith.constant 0 : index
    %c0_37 = arith.constant 0 : index
    %c0_38 = arith.constant 0 : index
    %56 = vector.load %arg3[%c0_35, %c0_36, %c0_37, %c0_38] : memref<1x8x8x128xf32, #tpu.memory_space<vmem>>, vector<1x8x8x128xf32>
    %57 = vector.shape_cast %56 : vector<1x8x8x128xf32> to vector<8x8x128xf32>
    %58 = vector.shape_cast %55 : vector<8x8x128xf32> to vector<1x8x8x128xf32>
    tpu.vector_store %arg3[%c0_35, %c0_36, %c0_37, %c0_38], %58 {strides = array<i32>} : memref<1x8x8x128xf32, #tpu.memory_space<vmem>>, vector<1x8x8x128xf32>,
    return
  }
  func.func @transform_0(%arg0: i32) -> (i32, i32, i32, i32, i32, i32) {
    %c0_i32 = arith.constant 0 : i32
    %c0_i32_0 = arith.constant 0 : i32
    %c0_i32_1 = arith.constant 0 : i32
    %c0_i32_2 = arith.constant 0 : i32
    %c0_i32_3 = arith.constant 0 : i32
    %c0_i32_4 = arith.constant 0 : i32
    return %arg0, %c0_i32, %c0_i32_0, %c0_i32_1, %c0_i32_2, %c0_i32_3 : i32, i32, i32, i32, i32, i32
  }
  func.func @transform_1(%arg0: i32) -> (i32, i32, i32) {
    %c0_i32 = arith.constant 0 : i32
    %c0_i32_0 = arith.constant 0 : i32
    %c0_i32_1 = arith.constant 0 : i32
    %c0_i32_2 = arith.constant 0 : i32
    return %c0_i32, %c0_i32_0, %c0_i32_1 : i32, i32, i32
  }
  func.func @transform_2(%arg0: i32) -> (i32, i32, i32, i32) {
    %c0_i32 = arith.constant 0 : i32
    %c0_i32_0 = arith.constant 0 : i32
    %c0_i32_1 = arith.constant 0 : i32
    %c0_i32_2 = arith.constant 0 : i32
    return %arg0, %c0_i32, %c0_i32_0, %c0_i32_1 : i32, i32, i32, i32
  }
  func.func @transform_3(%arg0: i32) -> (i32, i32, i32) {
    %c0_i32 = arith.constant 0 : i32
    %c0_i32_0 = arith.constant 0 : i32
    %c0_i32_1 = arith.constant 0 : i32
    return %arg0, %c0_i32, %c0_i32_0 : i32, i32, i32
  }
}

module attributes {stable_mosaic.version = 11 : i64} {
  func.func @_bn_conv2_kernel(%arg0: i32, %arg1: memref<1x8x8x128xf32, #tpu.memory_space<vmem>>, %arg2: memref<1x128xf32, #tpu.memory_space<vmem>>, %arg3: memref<1x128xf32, #tpu.memory_space<vmem>>, %arg4: memref<3x384x128xbf16, #tpu.memory_space<vmem>>, %arg5: memref<1x8x8x128xf32, #tpu.memory_space<vmem>>, %arg6: memref<1x2x128xf32, #tpu.memory_space<vmem>>, %arg7: memref<64x128xf32, #tpu.memory_space<vmem>>) attributes {dimension_semantics = [#tpu.dimension_semantics<parallel>], iteration_bounds = array<i64: 2>, scalar_prefetch = 0 : i64, scratch_operands = 1 : i64, tpu.core_type = #tpu.core_type<tc>, window_params = [{transform_indices = @transform_0, window_bounds = array<i64: 1, 8, 8, 128>}, {pipeline_mode = #tpu.pipeline_mode<synchronous>, transform_indices = @transform_1, window_bounds = array<i64: 1, 128>}, {pipeline_mode = #tpu.pipeline_mode<synchronous>, transform_indices = @transform_2, window_bounds = array<i64: 1, 128>}, {pipeline_mode = #tpu.pipeline_mode<synchronous>, transform_indices = @transform_3, window_bounds = array<i64: 3, 384, 128>}, {transform_indices = @transform_4, window_bounds = array<i64: 1, 8, 8, 128>}, {transform_indices = @transform_5, window_bounds = array<i64: 1, 2, 128>}]} {
    %c0 = arith.constant 0 : index
    %c0_0 = arith.constant 0 : index
    %c0_1 = arith.constant 0 : index
    %c0_2 = arith.constant 0 : index
    %0 = vector.load %arg1[%c0, %c0_0, %c0_1, %c0_2] : memref<1x8x8x128xf32, #tpu.memory_space<vmem>>, vector<1x8x8x128xf32>
    %1 = vector.shape_cast %0 : vector<1x8x8x128xf32> to vector<8x8x128xf32>
    %c0_3 = arith.constant 0 : index
    %c0_4 = arith.constant 0 : index
    %2 = vector.load %arg2[%c0_3, %c0_4] : memref<1x128xf32, #tpu.memory_space<vmem>>, vector<1x128xf32>
    %3 = vector.shape_cast %2 : vector<1x128xf32> to vector<128xf32>
    %4 = vector.shape_cast %3 : vector<128xf32> to vector<1x1x128xf32>
    %5 = vector.broadcast %4 : vector<1x1x128xf32> to vector<8x8x128xf32>
    %6 = arith.mulf %1, %5 : vector<8x8x128xf32>
    %c0_5 = arith.constant 0 : index
    %c0_6 = arith.constant 0 : index
    %7 = vector.load %arg3[%c0_5, %c0_6] : memref<1x128xf32, #tpu.memory_space<vmem>>, vector<1x128xf32>
    %8 = vector.shape_cast %7 : vector<1x128xf32> to vector<128xf32>
    %9 = vector.shape_cast %8 : vector<128xf32> to vector<1x1x128xf32>
    %10 = vector.broadcast %9 : vector<1x1x128xf32> to vector<8x8x128xf32>
    %11 = arith.addf %6, %10 : vector<8x8x128xf32>
    %cst = arith.constant 0.000000e+00 : f32
    %12 = vector.broadcast %cst : f32 to vector<8x8x128xf32>
    %13 = arith.maximumf %11, %12 : vector<8x8x128xf32>
    %cst_7 = arith.constant 0.000000e+00 : f32
    %14 = vector.broadcast %cst_7 : f32 to vector<8x1x128xf32>
    %15 = tpu.concatenate %14, %13, %14 in 1 : vector<8x1x128xf32>, vector<8x8x128xf32>, vector<8x1x128xf32> -> vector<8x10x128xf32>
    %cst_8 = arith.constant 0.000000e+00 : f32
    %16 = vector.broadcast %cst_8 : f32 to vector<1x10x128xf32>
    %17 = tpu.concatenate %16, %15, %16 in 0 : vector<1x10x128xf32>, vector<8x10x128xf32>, vector<1x10x128xf32> -> vector<10x10x128xf32>
    %18 = vector.extract_strided_slice %17 {offsets = [0, 0, 0], sizes = [8, 10, 128], strides = [1, 1, 1]} : vector<10x10x128xf32> to vector<8x10x128xf32>
    %19 = vector.extract_strided_slice %18 {offsets = [0, 0, 0], sizes = [8, 8, 128], strides = [1, 1, 1]} : vector<8x10x128xf32> to vector<8x8x128xf32>
    %20 = vector.extract_strided_slice %18 {offsets = [0, 1, 0], sizes = [8, 8, 128], strides = [1, 1, 1]} : vector<8x10x128xf32> to vector<8x8x128xf32>
    %21 = vector.extract_strided_slice %18 {offsets = [0, 2, 0], sizes = [8, 8, 128], strides = [1, 1, 1]} : vector<8x10x128xf32> to vector<8x8x128xf32>
    %22 = tpu.concatenate %19, %20, %21 in 2 : vector<8x8x128xf32>, vector<8x8x128xf32>, vector<8x8x128xf32> -> vector<8x8x384xf32>
    %23 = vector.shape_cast %22 : vector<8x8x384xf32> to vector<64x384xf32>
    %24 = arith.truncf %23 : vector<64x384xf32> to vector<64x384xbf16>
    %c0_9 = arith.constant 0 : index
    %c0_10 = arith.constant 0 : index
    %c0_11 = arith.constant 0 : index
    %25 = vector.load %arg4[%c0_9, %c0_10, %c0_11] : memref<3x384x128xbf16, #tpu.memory_space<vmem>>, vector<1x384x128xbf16>
    %26 = vector.shape_cast %25 : vector<1x384x128xbf16> to vector<384x128xbf16>
    %cst_12 = arith.constant dense<0.000000e+00> : vector<64x128xf32>
    %27 = tpu.matmul %24, %26, %cst_12 {dimension_numbers = #tpu.dot_dimension_numbers<[1], [0], [0], [1], [0, 0, 1, 1], [], []>} : vector<64x384xbf16>, vector<384x128xbf16>, vector<64x128xf32> -> vector<64x128xf32>
    %c0_13 = arith.constant 0 : index
    %c0_14 = arith.constant 0 : index
    %28 = vector.load %arg7[%c0_13, %c0_14] : memref<64x128xf32, #tpu.memory_space<vmem>>, vector<64x128xf32>
    tpu.vector_store %arg7[%c0_13, %c0_14], %27 {strides = array<i32>} : memref<64x128xf32, #tpu.memory_space<vmem>>, vector<64x128xf32>,
    %29 = vector.extract_strided_slice %17 {offsets = [1, 0, 0], sizes = [8, 10, 128], strides = [1, 1, 1]} : vector<10x10x128xf32> to vector<8x10x128xf32>
    %30 = vector.extract_strided_slice %29 {offsets = [0, 0, 0], sizes = [8, 8, 128], strides = [1, 1, 1]} : vector<8x10x128xf32> to vector<8x8x128xf32>
    %31 = vector.extract_strided_slice %29 {offsets = [0, 1, 0], sizes = [8, 8, 128], strides = [1, 1, 1]} : vector<8x10x128xf32> to vector<8x8x128xf32>
    %32 = vector.extract_strided_slice %29 {offsets = [0, 2, 0], sizes = [8, 8, 128], strides = [1, 1, 1]} : vector<8x10x128xf32> to vector<8x8x128xf32>
    %33 = tpu.concatenate %30, %31, %32 in 2 : vector<8x8x128xf32>, vector<8x8x128xf32>, vector<8x8x128xf32> -> vector<8x8x384xf32>
    %34 = vector.shape_cast %33 : vector<8x8x384xf32> to vector<64x384xf32>
    %35 = arith.truncf %34 : vector<64x384xf32> to vector<64x384xbf16>
    %c1 = arith.constant 1 : index
    %c0_15 = arith.constant 0 : index
    %c0_16 = arith.constant 0 : index
    %36 = vector.load %arg4[%c1, %c0_15, %c0_16] : memref<3x384x128xbf16, #tpu.memory_space<vmem>>, vector<1x384x128xbf16>
    %37 = vector.shape_cast %36 : vector<1x384x128xbf16> to vector<384x128xbf16>
    %cst_17 = arith.constant dense<0.000000e+00> : vector<64x128xf32>
    %38 = tpu.matmul %35, %37, %cst_17 {dimension_numbers = #tpu.dot_dimension_numbers<[1], [0], [0], [1], [0, 0, 1, 1], [], []>} : vector<64x384xbf16>, vector<384x128xbf16>, vector<64x128xf32> -> vector<64x128xf32>
    %c0_18 = arith.constant 0 : index
    %c0_19 = arith.constant 0 : index
    %39 = vector.load %arg7[%c0_18, %c0_19] : memref<64x128xf32, #tpu.memory_space<vmem>>, vector<64x128xf32>
    %40 = arith.addf %39, %38 : vector<64x128xf32>
    %c0_20 = arith.constant 0 : index
    %c0_21 = arith.constant 0 : index
    %41 = vector.load %arg7[%c0_20, %c0_21] : memref<64x128xf32, #tpu.memory_space<vmem>>, vector<64x128xf32>
    tpu.vector_store %arg7[%c0_20, %c0_21], %40 {strides = array<i32>} : memref<64x128xf32, #tpu.memory_space<vmem>>, vector<64x128xf32>,
    %42 = vector.extract_strided_slice %17 {offsets = [2, 0, 0], sizes = [8, 10, 128], strides = [1, 1, 1]} : vector<10x10x128xf32> to vector<8x10x128xf32>
    %43 = vector.extract_strided_slice %42 {offsets = [0, 0, 0], sizes = [8, 8, 128], strides = [1, 1, 1]} : vector<8x10x128xf32> to vector<8x8x128xf32>
    %44 = vector.extract_strided_slice %42 {offsets = [0, 1, 0], sizes = [8, 8, 128], strides = [1, 1, 1]} : vector<8x10x128xf32> to vector<8x8x128xf32>
    %45 = vector.extract_strided_slice %42 {offsets = [0, 2, 0], sizes = [8, 8, 128], strides = [1, 1, 1]} : vector<8x10x128xf32> to vector<8x8x128xf32>
    %46 = tpu.concatenate %43, %44, %45 in 2 : vector<8x8x128xf32>, vector<8x8x128xf32>, vector<8x8x128xf32> -> vector<8x8x384xf32>
    %47 = vector.shape_cast %46 : vector<8x8x384xf32> to vector<64x384xf32>
    %48 = arith.truncf %47 : vector<64x384xf32> to vector<64x384xbf16>
    %c2 = arith.constant 2 : index
    %c0_22 = arith.constant 0 : index
    %c0_23 = arith.constant 0 : index
    %49 = vector.load %arg4[%c2, %c0_22, %c0_23] : memref<3x384x128xbf16, #tpu.memory_space<vmem>>, vector<1x384x128xbf16>
    %50 = vector.shape_cast %49 : vector<1x384x128xbf16> to vector<384x128xbf16>
    %cst_24 = arith.constant dense<0.000000e+00> : vector<64x128xf32>
    %51 = tpu.matmul %48, %50, %cst_24 {dimension_numbers = #tpu.dot_dimension_numbers<[1], [0], [0], [1], [0, 0, 1, 1], [], []>} : vector<64x384xbf16>, vector<384x128xbf16>, vector<64x128xf32> -> vector<64x128xf32>
    %c0_25 = arith.constant 0 : index
    %c0_26 = arith.constant 0 : index
    %52 = vector.load %arg7[%c0_25, %c0_26] : memref<64x128xf32, #tpu.memory_space<vmem>>, vector<64x128xf32>
    %53 = arith.addf %52, %51 : vector<64x128xf32>
    %c0_27 = arith.constant 0 : index
    %c0_28 = arith.constant 0 : index
    %54 = vector.load %arg7[%c0_27, %c0_28] : memref<64x128xf32, #tpu.memory_space<vmem>>, vector<64x128xf32>
    tpu.vector_store %arg7[%c0_27, %c0_28], %53 {strides = array<i32>} : memref<64x128xf32, #tpu.memory_space<vmem>>, vector<64x128xf32>,
    %c0_29 = arith.constant 0 : index
    %c0_30 = arith.constant 0 : index
    %55 = vector.load %arg7[%c0_29, %c0_30] : memref<64x128xf32, #tpu.memory_space<vmem>>, vector<64x128xf32>
    %cst_31 = arith.constant dense<0.000000e+00> : vector<128xf32>
    %56 = vector.multi_reduction <add>, %55, %cst_31 [0] : vector<64x128xf32> to vector<128xf32>
    %57 = vector.shape_cast %56 : vector<128xf32> to vector<1x128xf32>
    %58 = arith.mulf %55, %55 : vector<64x128xf32>
    %cst_32 = arith.constant dense<0.000000e+00> : vector<128xf32>
    %59 = vector.multi_reduction <add>, %58, %cst_32 [0] : vector<64x128xf32> to vector<128xf32>
    %60 = vector.shape_cast %59 : vector<128xf32> to vector<1x128xf32>
    %61 = tpu.concatenate %57, %60 in 0 : vector<1x128xf32>, vector<1x128xf32> -> vector<2x128xf32>
    %c0_33 = arith.constant 0 : index
    %c0_34 = arith.constant 0 : index
    %c0_35 = arith.constant 0 : index
    %62 = vector.load %arg6[%c0_33, %c0_34, %c0_35] : memref<1x2x128xf32, #tpu.memory_space<vmem>>, vector<1x2x128xf32>
    %63 = vector.shape_cast %62 : vector<1x2x128xf32> to vector<2x128xf32>
    %64 = vector.shape_cast %61 : vector<2x128xf32> to vector<1x2x128xf32>
    tpu.vector_store %arg6[%c0_33, %c0_34, %c0_35], %64 {strides = array<i32>} : memref<1x2x128xf32, #tpu.memory_space<vmem>>, vector<1x2x128xf32>,
    %65 = vector.shape_cast %55 : vector<64x128xf32> to vector<8x8x128xf32>
    %c0_36 = arith.constant 0 : index
    %c0_37 = arith.constant 0 : index
    %c0_38 = arith.constant 0 : index
    %c0_39 = arith.constant 0 : index
    %66 = vector.load %arg5[%c0_36, %c0_37, %c0_38, %c0_39] : memref<1x8x8x128xf32, #tpu.memory_space<vmem>>, vector<1x8x8x128xf32>
    %67 = vector.shape_cast %66 : vector<1x8x8x128xf32> to vector<8x8x128xf32>
    %68 = vector.shape_cast %65 : vector<8x8x128xf32> to vector<1x8x8x128xf32>
    tpu.vector_store %arg5[%c0_36, %c0_37, %c0_38, %c0_39], %68 {strides = array<i32>} : memref<1x8x8x128xf32, #tpu.memory_space<vmem>>, vector<1x8x8x128xf32>,
    return
  }
  func.func @transform_0(%arg0: i32) -> (i32, i32, i32, i32) {
    %c0_i32 = arith.constant 0 : i32
    %c0_i32_0 = arith.constant 0 : i32
    %c0_i32_1 = arith.constant 0 : i32
    %c0_i32_2 = arith.constant 0 : i32
    return %arg0, %c0_i32, %c0_i32_0, %c0_i32_1 : i32, i32, i32, i32
  }
  func.func @transform_1(%arg0: i32) -> (i32, i32) {
    %c0_i32 = arith.constant 0 : i32
    %c0_i32_0 = arith.constant 0 : i32
    %c0_i32_1 = arith.constant 0 : i32
    return %c0_i32, %c0_i32_0 : i32, i32
  }
  func.func @transform_2(%arg0: i32) -> (i32, i32) {
    %c0_i32 = arith.constant 0 : i32
    %c0_i32_0 = arith.constant 0 : i32
    %c0_i32_1 = arith.constant 0 : i32
    return %c0_i32, %c0_i32_0 : i32, i32
  }
  func.func @transform_3(%arg0: i32) -> (i32, i32, i32) {
    %c0_i32 = arith.constant 0 : i32
    %c0_i32_0 = arith.constant 0 : i32
    %c0_i32_1 = arith.constant 0 : i32
    %c0_i32_2 = arith.constant 0 : i32
    return %c0_i32, %c0_i32_0, %c0_i32_1 : i32, i32, i32
  }
  func.func @transform_4(%arg0: i32) -> (i32, i32, i32, i32) {
    %c0_i32 = arith.constant 0 : i32
    %c0_i32_0 = arith.constant 0 : i32
    %c0_i32_1 = arith.constant 0 : i32
    %c0_i32_2 = arith.constant 0 : i32
    return %arg0, %c0_i32, %c0_i32_0, %c0_i32_1 : i32, i32, i32, i32
  }
  func.func @transform_5(%arg0: i32) -> (i32, i32, i32) {
    %c0_i32 = arith.constant 0 : i32
    %c0_i32_0 = arith.constant 0 : i32
    %c0_i32_1 = arith.constant 0 : i32
    return %arg0, %c0_i32, %c0_i32_0 : i32, i32, i32
  }
}

module attributes {stable_mosaic.version = 11 : i64} {
  func.func @_bn_relu_kernel(%arg0: i32, %arg1: memref<1x8x8x128xf32, #tpu.memory_space<vmem>>, %arg2: memref<1x128xf32, #tpu.memory_space<vmem>>, %arg3: memref<1x128xf32, #tpu.memory_space<vmem>>, %arg4: memref<1x8x8x128xf32, #tpu.memory_space<vmem>>) attributes {dimension_semantics = [#tpu.dimension_semantics<parallel>], iteration_bounds = array<i64: 2>, scalar_prefetch = 0 : i64, scratch_operands = 0 : i64, tpu.core_type = #tpu.core_type<tc>, window_params = [{transform_indices = @transform_0, window_bounds = array<i64: 1, 8, 8, 128>}, {pipeline_mode = #tpu.pipeline_mode<synchronous>, transform_indices = @transform_1, window_bounds = array<i64: 1, 128>}, {pipeline_mode = #tpu.pipeline_mode<synchronous>, transform_indices = @transform_2, window_bounds = array<i64: 1, 128>}, {transform_indices = @transform_3, window_bounds = array<i64: 1, 8, 8, 128>}]} {
    %c0 = arith.constant 0 : index
    %c0_0 = arith.constant 0 : index
    %c0_1 = arith.constant 0 : index
    %c0_2 = arith.constant 0 : index
    %0 = vector.load %arg1[%c0, %c0_0, %c0_1, %c0_2] : memref<1x8x8x128xf32, #tpu.memory_space<vmem>>, vector<1x8x8x128xf32>
    %1 = vector.shape_cast %0 : vector<1x8x8x128xf32> to vector<8x8x128xf32>
    %c0_3 = arith.constant 0 : index
    %c0_4 = arith.constant 0 : index
    %2 = vector.load %arg2[%c0_3, %c0_4] : memref<1x128xf32, #tpu.memory_space<vmem>>, vector<1x128xf32>
    %3 = vector.shape_cast %2 : vector<1x128xf32> to vector<128xf32>
    %4 = vector.shape_cast %3 : vector<128xf32> to vector<1x1x128xf32>
    %5 = vector.broadcast %4 : vector<1x1x128xf32> to vector<8x8x128xf32>
    %6 = arith.mulf %1, %5 : vector<8x8x128xf32>
    %c0_5 = arith.constant 0 : index
    %c0_6 = arith.constant 0 : index
    %7 = vector.load %arg3[%c0_5, %c0_6] : memref<1x128xf32, #tpu.memory_space<vmem>>, vector<1x128xf32>
    %8 = vector.shape_cast %7 : vector<1x128xf32> to vector<128xf32>
    %9 = vector.shape_cast %8 : vector<128xf32> to vector<1x1x128xf32>
    %10 = vector.broadcast %9 : vector<1x1x128xf32> to vector<8x8x128xf32>
    %11 = arith.addf %6, %10 : vector<8x8x128xf32>
    %cst = arith.constant 0.000000e+00 : f32
    %12 = vector.broadcast %cst : f32 to vector<8x8x128xf32>
    %13 = arith.maximumf %11, %12 : vector<8x8x128xf32>
    %c0_7 = arith.constant 0 : index
    %c0_8 = arith.constant 0 : index
    %c0_9 = arith.constant 0 : index
    %c0_10 = arith.constant 0 : index
    %14 = vector.load %arg4[%c0_7, %c0_8, %c0_9, %c0_10] : memref<1x8x8x128xf32, #tpu.memory_space<vmem>>, vector<1x8x8x128xf32>
    %15 = vector.shape_cast %14 : vector<1x8x8x128xf32> to vector<8x8x128xf32>
    %16 = vector.shape_cast %13 : vector<8x8x128xf32> to vector<1x8x8x128xf32>
    tpu.vector_store %arg4[%c0_7, %c0_8, %c0_9, %c0_10], %16 {strides = array<i32>} : memref<1x8x8x128xf32, #tpu.memory_space<vmem>>, vector<1x8x8x128xf32>,
    return
  }
  func.func @transform_0(%arg0: i32) -> (i32, i32, i32, i32) {
    %c0_i32 = arith.constant 0 : i32
    %c0_i32_0 = arith.constant 0 : i32
    %c0_i32_1 = arith.constant 0 : i32
    %c0_i32_2 = arith.constant 0 : i32
    return %arg0, %c0_i32, %c0_i32_0, %c0_i32_1 : i32, i32, i32, i32
  }
  func.func @transform_1(%arg0: i32) -> (i32, i32) {
    %c0_i32 = arith.constant 0 : i32
    %c0_i32_0 = arith.constant 0 : i32
    %c0_i32_1 = arith.constant 0 : i32
    return %c0_i32, %c0_i32_0 : i32, i32
  }
  func.func @transform_2(%arg0: i32) -> (i32, i32) {
    %c0_i32 = arith.constant 0 : i32
    %c0_i32_0 = arith.constant 0 : i32
    %c0_i32_1 = arith.constant 0 : i32
    return %c0_i32, %c0_i32_0 : i32, i32
  }
  func.func @transform_3(%arg0: i32) -> (i32, i32, i32, i32) {
    %c0_i32 = arith.constant 0 : i32
    %c0_i32_0 = arith.constant 0 : i32
    %c0_i32_1 = arith.constant 0 : i32
    %c0_i32_2 = arith.constant 0 : i32
    return %arg0, %c0_i32, %c0_i32_0, %c0_i32_1 : i32, i32, i32, i32
  }
}

</mosaic_0001>

<llo_original>
// kernel: down_forward_nhwc.5
$region0: #{down_forward_nhwc.5}
  #allocation0 [shape = 'u32[]', space=smem, size = 0x4, offset = 0x4, fixed_abs, tag = 'smem constant byte address 0x4 - core index']
  #allocation1 [shape = 'u32[144,128]{1,0:T(1,128)}', space=vmem, size = 0x12000, scoped, tag = 'internal scratch']
  %s0 = inlined_call_operand.vmem [shape: f32[2,8,8,128], index: 0, kind: input, shape index: {}]
  %s1 = inlined_call_operand.vmem [shape: f32[1,128], index: 1, kind: input, shape index: {}]
  %s2 = inlined_call_operand.vmem [shape: f32[1,128], index: 2, kind: input, shape index: {}]
  %s3 = inlined_call_operand.hbm [shape: f32[2,8,8,128], index: 3, kind: output, shape index: {}]
  %s4 = sld [smem:[#allocation0]]
  $region45: #{down_forward_nhwc.5} parent=0
    _
  %s6 = ssub.s32 1, %s4
  %s7 = scalar_select 0, %s6, %s4
  $region1: #{down_forward_nhwc.5} parent=0
    #allocation2 [shape = 'u8[65536]{0}', space=vmem, size = 0x10000, scoped, tag = 'output window, operand 0']
    #allocation3 [shape = 's32[2]{0}', space=sflag, size = 0x8, scoped, tag = 'scoped memory for down_forward_nhwc.5']
    %8 = vsyncpa [#allocation3], 0
    %s9 = scalar_lea.sflag [#allocation3], 1
    %10 = vsyncpa %s9, 0
    loop: start=0, step=1, limit=4
    $region2: #{down_forward_nhwc.5} parent=1 // loop_pre_header
      _
    $region3: #{down_forward_nhwc.5} parent=1 // loop_header
      %s12 = sphi 0, %s16
      %p13 = scmp.ge.s32.totalorder %s12, 4
      %s22 = sphi 0, %s24
      %s25 = sphi 0, %s22
      %s26 = sphi 0, %s25
      %s42 = sphi 0, %s26
      %s46 = sphi 0, %s46
      %s48 = sphi 0, %s46
      %s49 = sphi 0, %s48
      %s63 = sphi 0, %s49
      %s67 = sphi 0, %s67
      %s69 = sphi 0, %s67
      %s70 = sphi 0, %s69
      %s84 = sphi 0, %s70
      %s90 = sphi 0, %s92
      %s93 = sphi 0, %s90
      %s94 = sphi 0, %s93
      %s110 = sphi 0, %s94
    $region4: #{down_forward_nhwc.5} parent=1 // loop_header_branch
      %15 = sbr.rel (%p13) target = $region8
    $region5: #{down_forward_nhwc.5} parent=1 // loop_body
      %s17 = ssub.s32 %s12, 1
      %s18 = ssub.s32 %s12, 2
      %s19 = sadd.s32 %s12, 1
      %s20 = ssub.s32 %s12, %s19
      %p21 = scmp.eq.s32.totalorder %s20, 0
      %s23 = sadd.s32 %s22, 1
      %s24 = scalar_select %p21, %s22, %s23
      %p27 = pneg %p21
      %p28 = scmp.eq.s32.totalorder %s12, 1
      %p29 = por %p27, %p28
      %p30 = scmp.ne.s32.totalorder %s22, %s25
      %p31 = scmp.eq.s32.totalorder %s12, 0
      %p32 = por %p30, %p31
      %p33 = scmp.ne.s32.totalorder %s22, %s25
      %p34 = scmp.eq.s32.totalorder %s17, 1
      %p35 = por %p33, %p34
      %p36 = scmp.ne.s32.totalorder %s25, %s26
      %p37 = scmp.eq.s32.totalorder %s17, 0
      %p38 = por %p36, %p37
      %p39 = scmp.ne.s32.totalorder %s25, %s26
      %p40 = scmp.eq.s32.totalorder %s18, 1
      %p41 = por %p39, %p40
      %p43 = scmp.ne.s32.totalorder %s26, %s42
      %p44 = scmp.eq.s32.totalorder %s18, 0
      %p45 = por %p43, %p44
      %s47 = sadd.s32 %s46, 1
      %p50 = scmp.eq.s32.totalorder %s12, 1
      %p51 = scmp.ne.s32.totalorder %s46, %s48
      %p52 = scmp.eq.s32.totalorder %s12, 0
      %p53 = por %p51, %p52
      %p54 = scmp.ne.s32.totalorder %s46, %s48
      %p55 = scmp.eq.s32.totalorder %s17, 1
      %p56 = por %p54, %p55
      %p57 = scmp.ne.s32.totalorder %s48, %s49
      %p58 = scmp.eq.s32.totalorder %s17, 0
      %p59 = por %p57, %p58
      %p60 = scmp.ne.s32.totalorder %s48, %s49
      %p61 = scmp.eq.s32.totalorder %s18, 1
      %p62 = por %p60, %p61
      %p64 = scmp.ne.s32.totalorder %s49, %s63
      %p65 = scmp.eq.s32.totalorder %s18, 0
      %p66 = por %p64, %p65
      %s68 = sadd.s32 %s67, 1
      %p71 = scmp.eq.s32.totalorder %s12, 1
      %p72 = scmp.ne.s32.totalorder %s67, %s69
      %p73 = scmp.eq.s32.totalorder %s12, 0
      %p74 = por %p72, %p73
      %p75 = scmp.ne.s32.totalorder %s67, %s69
      %p76 = scmp.eq.s32.totalorder %s17, 1
      %p77 = por %p75, %p76
      %p78 = scmp.ne.s32.totalorder %s69, %s70
      %p79 = scmp.eq.s32.totalorder %s17, 0
      %p80 = por %p78, %p79
      %p81 = scmp.ne.s32.totalorder %s69, %s70
      %p82 = scmp.eq.s32.totalorder %s18, 1
      %p83 = por %p81, %p82
      %p85 = scmp.ne.s32.totalorder %s70, %s84
      %p86 = scmp.eq.s32.totalorder %s18, 0
      %p87 = por %p85, %p86
      %s88 = ssub.s32 %s12, %s19
      %p89 = scmp.eq.s32.totalorder %s88, 0
      %s91 = sadd.s32 %s90, 1
      %s92 = scalar_select %p89, %s90, %s91
      %p95 = pneg %p89
      %p96 = scmp.eq.s32.totalorder %s12, 1
      %p97 = por %p95, %p96
      %p98 = scmp.ne.s32.totalorder %s90, %s93
      %p99 = scmp.eq.s32.totalorder %s12, 0
      %p100 = por %p98, %p99
      %p101 = scmp.ne.s32.totalorder %s90, %s93
      %p102 = scmp.eq.s32.totalorder %s17, 1
      %p103 = por %p101, %p102
      %p104 = scmp.ne.s32.totalorder %s93, %s94
      %p105 = scmp.eq.s32.totalorder %s17, 0
      %p106 = por %p104, %p105
      %p107 = scmp.ne.s32.totalorder %s93, %s94
      %p108 = scmp.eq.s32.totalorder %s18, 1
      %p109 = por %p107, %p108
      %p111 = scmp.ne.s32.totalorder %s94, %s110
      %p112 = scmp.eq.s32.totalorder %s18, 0
      %p113 = por %p111, %p112
      %p114 = scmp.le.s32.totalorder 1, %s12
      %p115 = scmp.lt.s32.totalorder %s12, 3
      %p116 = pnand %p114, %p115
      %p117 = pneg %p116
      // Predicated region
      $region9: #{down_forward_nhwc.5} parent=5 // pred_check
        _
      $region10: #{down_forward_nhwc.5} parent=5 // pred_check_branch
        %119 = sbr.rel (%p116) target = $region12
      $region11: #{down_forward_nhwc.5} parent=5 // pred_region
        %s120 = ssub.s32 %s12, 1
        // Predicated region
        $region13: #{down_forward_nhwc.5} parent=11 // pred_check
          %p121 = pneg %p59
        $region14: #{down_forward_nhwc.5} parent=11 // pred_check_branch
          %123 = sbr.rel (%p121) target = $region16
        $region15: #{down_forward_nhwc.5} parent=11 // pred_region
          _
        $region16: #{down_forward_nhwc.5} parent=11 // pred_fallthru
          _
        // Predicated region
        $region17: #{down_forward_nhwc.5} parent=11 // pred_check
          %p124 = pneg %p80
        $region18: #{down_forward_nhwc.5} parent=11 // pred_check_branch
          %126 = sbr.rel (%p124) target = $region20
        $region19: #{down_forward_nhwc.5} parent=11 // pred_region
          _
        $region20: #{down_forward_nhwc.5} parent=11 // pred_fallthru
          _
      $region12: #{down_forward_nhwc.5} parent=5 // pred_fallthru
        _
      %p127 = scmp.lt.s32.totalorder %s12, 2
      // Predicated region
      $region21: #{down_forward_nhwc.5} parent=5 // pred_check
        %p128 = pneg %p127
      $region22: #{down_forward_nhwc.5} parent=5 // pred_check_branch
        %130 = sbr.rel (%p128) target = $region24
      $region23: #{down_forward_nhwc.5} parent=5 // pred_region
        // Predicated region
        $region25: #{down_forward_nhwc.5} parent=23 // pred_check
          %p131 = pneg %p32
        $region26: #{down_forward_nhwc.5} parent=23 // pred_check_branch
          %133 = sbr.rel (%p131) target = $region28
        $region27: #{down_forward_nhwc.5} parent=23 // pred_region
          %p134 = scmp.lt.s32.totalorder %s12, 1
          %s135 = scalar_select %p134, %s12, 1
          %s136 = smul.addr %s135, 8
          %s137 = smul.addr %s136, 8
          %s138 = scalar_lea.vmem %s0, %s137
        $region28: #{down_forward_nhwc.5} parent=23 // pred_fallthru
          _
      $region24: #{down_forward_nhwc.5} parent=5 // pred_fallthru
        _
      %p139 = scmp.le.s32.totalorder 1, %s12
      %p140 = scmp.lt.s32.totalorder %s12, 3
      %p141 = pnand %p139, %p140
      %p142 = pneg %p141
      // Predicated region
      $region29: #{down_forward_nhwc.5} parent=5 // pred_check
        _
      $region30: #{down_forward_nhwc.5} parent=5 // pred_check_branch
        %144 = sbr.rel (%p141) target = $region32
      $region31: #{down_forward_nhwc.5} parent=5 // pred_region
        %s145 = ssub.s32 %s12, 1
        %p146 = scmp.lt.s32.totalorder %s17, 1
        %s147 = scalar_select %p146, %s17, 1
        %s148 = smul.addr %s147, 8
        %s149 = smul.addr %s148, 8
        %s150 = scalar_lea.vmem %s0, %s149
        %p151 = pneg %p38
        %p152 = pneg %p35
        %p153 = pneg %p59
        %p154 = pneg %p56
        %p155 = pneg %p80
        %p156 = pneg %p77
        %p157 = pneg %p106
        %p158 = pneg %p103
        %s159 = sand.u32 %s93, 1
        %s160 = scalar_lea.sflag [#allocation3], %s159
        %s161 = sand.u32 %s93, 1
        %s162 = smul.addr %s161, 64
        %s163 = scalar_lea.vmem [#allocation2], %s162
        %p164 = scmp.lt.s32.totalorder %s17, 1
        %s165 = scalar_select %p164, %s17, 1
        %s166 = smul.addr %s165, 8
        %s167 = smul.addr %s166, 8
        %s168 = scalar_lea.vmem %s0, %s167
        %v169 = vld [vmem:[%s168] sm:$0xff]
        %v170 = vld [vmem:[%s168 + $0x8] sm:$0xff]
        %v171 = vld [vmem:[%s168 + $0x10] sm:$0xff]
        %v172 = vld [vmem:[%s168 + $0x18] sm:$0xff]
        %v173 = vld [vmem:[%s168 + $0x20] sm:$0xff]
        %v174 = vld [vmem:[%s168 + $0x28] sm:$0xff]
        %v175 = vld [vmem:[%s168 + $0x30] sm:$0xff]
        %v176 = vld [vmem:[%s168 + $0x38] sm:$0xff]
        %v177 = vld [vmem:[%s1] sm:$0x1]
        %v179 = vlaneseq
        %v180 = vshrl.u32 %v179, 7
        %v181 = vsub.s32 0, %v180
        %v182 = vrot.slane %v177, %v181
        %v184 = vmul.f32 %v169, %v182
        %v185 = vmul.f32 %v170, %v182
        %v186 = vmul.f32 %v171, %v182
        %v187 = vmul.f32 %v172, %v182
        %v188 = vmul.f32 %v173, %v182
        %v189 = vmul.f32 %v174, %v182
        %v190 = vmul.f32 %v175, %v182
        %v191 = vmul.f32 %v176, %v182
        %v192 = vld [vmem:[%s2] sm:$0x1]
        %v194 = vlaneseq
        %v195 = vshrl.u32 %v194, 7
        %v196 = vsub.s32 0, %v195
        %v197 = vrot.slane %v192, %v196
        %v199 = vadd.f32 %v184, %v197
        %v200 = vadd.f32 %v185, %v197
        %v201 = vadd.f32 %v186, %v197
        %v202 = vadd.f32 %v187, %v197
        %v203 = vadd.f32 %v188, %v197
        %v204 = vadd.f32 %v189, %v197
        %v205 = vadd.f32 %v190, %v197
        %v206 = vadd.f32 %v191, %v197
        %v207 = vmax.f32 %v199, 0.0
        %v208 = vmax.f32 %v200, 0.0
        %v209 = vmax.f32 %v201, 0.0
        %v210 = vmax.f32 %v202, 0.0
        %v211 = vmax.f32 %v203, 0.0
        %v212 = vmax.f32 %v204, 0.0
        %v213 = vmax.f32 %v205, 0.0
        %v214 = vmax.f32 %v206, 0.0
        %215 = vst [vmem:[%s163] sm:$0xff] %v207
        %216 = vst [vmem:[%s163 + $0x8] sm:$0xff] %v208
        %217 = vst [vmem:[%s163 + $0x10] sm:$0xff] %v209
        %218 = vst [vmem:[%s163 + $0x18] sm:$0xff] %v210
        %219 = vst [vmem:[%s163 + $0x20] sm:$0xff] %v211
        %220 = vst [vmem:[%s163 + $0x28] sm:$0xff] %v212
        %221 = vst [vmem:[%s163 + $0x30] sm:$0xff] %v213
        %222 = vst [vmem:[%s163 + $0x38] sm:$0xff] %v214
        %s223 = sand.u32 %s93, 1
        %s224 = scalar_lea.sflag [#allocation3], %s223
        %s225 = sand.u32 %s93, 1
        %s226 = smul.addr %s225, 64
        %s227 = scalar_lea.vmem [#allocation2], %s226
        // Predicated region
        $region33: #{down_forward_nhwc.5} parent=31 // pred_check
          %p228 = pneg %p103
        $region34: #{down_forward_nhwc.5} parent=31 // pred_check_branch
          %230 = sbr.rel (%p228) target = $region36
        $region35: #{down_forward_nhwc.5} parent=31 // pred_region
          %s232 = ssub.s32 1024, 1024
          %233 = vsyncadd %s224, %s232
          %s234 = smul.addr %s17, 8
          %s235 = smul.addr %s234, 128
          %s236 = scalar_lea.hbm %s3, %s235
          %s237 = sshll.u32 %s227, 4
          %s238 = int_to_ptr.vmem [resolvable:$true] %s237
          %243 = dma.vmem_to_hbm [thread:$0]  %s238, 1024, %s236, %s224, 128, 128, 8
        $region36: #{down_forward_nhwc.5} parent=31 // pred_fallthru
          _
      $region32: #{down_forward_nhwc.5} parent=5 // pred_fallthru
        _
      %p244 = scmp.le.s32.totalorder 2, %s12
      // Predicated region
      $region37: #{down_forward_nhwc.5} parent=5 // pred_check
        %p245 = pneg %p244
      $region38: #{down_forward_nhwc.5} parent=5 // pred_check_branch
        %247 = sbr.rel (%p245) target = $region40
      $region39: #{down_forward_nhwc.5} parent=5 // pred_region
        %s248 = ssub.s32 %s12, 2
        // Predicated region
        $region41: #{down_forward_nhwc.5} parent=39 // pred_check
          %p249 = pneg %p109
        $region42: #{down_forward_nhwc.5} parent=39 // pred_check_branch
          %251 = sbr.rel (%p249) target = $region44
        $region43: #{down_forward_nhwc.5} parent=39 // pred_region
          %s252 = sand.u32 %s94, 1
          %s253 = scalar_lea.sflag [#allocation3], %s252
          %s254 = sand.u32 %s94, 1
          %s255 = smul.addr %s254, 64
          %s256 = scalar_lea.vmem [#allocation2], %s255
          %257 = dma.done %s253, 1024
        $region44: #{down_forward_nhwc.5} parent=39 // pred_fallthru
          _
      $region40: #{down_forward_nhwc.5} parent=5 // pred_fallthru
        _
    $region6: #{down_forward_nhwc.5} parent=1 // loop_footer
      %s16 = sadd.s32 1, %s12
    $region7: #{down_forward_nhwc.5} parent=1 // loop_footer_branch
      %11 = sbr.rel target = $region3
    $region8: #{down_forward_nhwc.5} parent=1 // loop_exit
      _
    %258 = vsyncpa [#allocation3], 1
    %s259 = scalar_lea.sflag [#allocation3], 1
    %260 = vsyncpa %s259, 1

// kernel: down_forward_nhwc.4
$region0: #{down_forward_nhwc.4}
  #allocation0 [shape = 'u32[]', space=smem, size = 0x4, offset = 0x4, fixed_abs, tag = 'smem constant byte address 0x4 - core index']
  #allocation1 [shape = 'u32[144,128]{1,0:T(1,128)}', space=vmem, size = 0x12000, scoped, tag = 'internal scratch']
  #allocation2 [shape = 'f32[64,128]{1,0:T(8,128)}', space=vmem, size = 0x8000, scoped, tag = 'scratch operand']
  %s0 = inlined_call_operand.vmem [shape: f32[2,8,8,128], index: 0, kind: input, shape index: {}]
  %s1 = inlined_call_operand.vmem [shape: f32[1,128], index: 1, kind: input, shape index: {}]
  %s2 = inlined_call_operand.vmem [shape: f32[1,128], index: 2, kind: input, shape index: {}]
  %s3 = inlined_call_operand.vmem [shape: bf16[3,384,128], index: 3, kind: input, shape index: {}]
  %s4 = inlined_call_operand.vmem [shape: f32[2,8,8,128], index: 4, kind: output, shape index: {0}]
  %s5 = inlined_call_operand.vmem [shape: f32[2,2,128], index: 5, kind: output, shape index: {1}]
  %6 = xla_tuple %s4, %s5
  %s7 = sld [smem:[#allocation0]]
  $region57: #{down_forward_nhwc.4} parent=0
    _
  %s9 = ssub.s32 1, %s7
  %s10 = scalar_select 0, %s9, %s7
  loop: start=0, step=1, limit=4
  $region2: #{down_forward_nhwc.4} parent=0 // loop_pre_header
    _
  $region3: #{down_forward_nhwc.4} parent=0 // loop_header
    %s12 = sphi 0, %s16
    %p13 = scmp.ge.s32.totalorder %s12, 4
    %s22 = sphi 0, %s24
    %s25 = sphi 0, %s22
    %s26 = sphi 0, %s25
    %s42 = sphi 0, %s26
    %s46 = sphi 0, %s46
    %s48 = sphi 0, %s46
    %s49 = sphi 0, %s48
    %s63 = sphi 0, %s49
    %s67 = sphi 0, %s67
    %s69 = sphi 0, %s67
    %s70 = sphi 0, %s69
    %s84 = sphi 0, %s70
    %s88 = sphi 0, %s88
    %s90 = sphi 0, %s88
    %s91 = sphi 0, %s90
    %s105 = sphi 0, %s91
    %s111 = sphi 0, %s113
    %s114 = sphi 0, %s111
    %s115 = sphi 0, %s114
    %s131 = sphi 0, %s115
    %s137 = sphi 0, %s139
    %s140 = sphi 0, %s137
    %s141 = sphi 0, %s140
    %s157 = sphi 0, %s141
  $region4: #{down_forward_nhwc.4} parent=0 // loop_header_branch
    %15 = sbr.rel (%p13) target = $region8
  $region5: #{down_forward_nhwc.4} parent=0 // loop_body
    %s17 = ssub.s32 %s12, 1
    %s18 = ssub.s32 %s12, 2
    %s19 = sadd.s32 %s12, 1
    %s20 = ssub.s32 %s12, %s19
    %p21 = scmp.eq.s32.totalorder %s20, 0
    %s23 = sadd.s32 %s22, 1
    %s24 = scalar_select %p21, %s22, %s23
    %p27 = pneg %p21
    %p28 = scmp.eq.s32.totalorder %s12, 1
    %p29 = por %p27, %p28
    %p30 = scmp.ne.s32.totalorder %s22, %s25
    %p31 = scmp.eq.s32.totalorder %s12, 0
    %p32 = por %p30, %p31
    %p33 = scmp.ne.s32.totalorder %s22, %s25
    %p34 = scmp.eq.s32.totalorder %s17, 1
    %p35 = por %p33, %p34
    %p36 = scmp.ne.s32.totalorder %s25, %s26
    %p37 = scmp.eq.s32.totalorder %s17, 0
    %p38 = por %p36, %p37
    %p39 = scmp.ne.s32.totalorder %s25, %s26
    %p40 = scmp.eq.s32.totalorder %s18, 1
    %p41 = por %p39, %p40
    %p43 = scmp.ne.s32.totalorder %s26, %s42
    %p44 = scmp.eq.s32.totalorder %s18, 0
    %p45 = por %p43, %p44
    %s47 = sadd.s32 %s46, 1
    %p50 = scmp.eq.s32.totalorder %s12, 1
    %p51 = scmp.ne.s32.totalorder %s46, %s48
    %p52 = scmp.eq.s32.totalorder %s12, 0
    %p53 = por %p51, %p52
    %p54 = scmp.ne.s32.totalorder %s46, %s48
    %p55 = scmp.eq.s32.totalorder %s17, 1
    %p56 = por %p54, %p55
    %p57 = scmp.ne.s32.totalorder %s48, %s49
    %p58 = scmp.eq.s32.totalorder %s17, 0
    %p59 = por %p57, %p58
    %p60 = scmp.ne.s32.totalorder %s48, %s49
    %p61 = scmp.eq.s32.totalorder %s18, 1
    %p62 = por %p60, %p61
    %p64 = scmp.ne.s32.totalorder %s49, %s63
    %p65 = scmp.eq.s32.totalorder %s18, 0
    %p66 = por %p64, %p65
    %s68 = sadd.s32 %s67, 1
    %p71 = scmp.eq.s32.totalorder %s12, 1
    %p72 = scmp.ne.s32.totalorder %s67, %s69
    %p73 = scmp.eq.s32.totalorder %s12, 0
    %p74 = por %p72, %p73
    %p75 = scmp.ne.s32.totalorder %s67, %s69
    %p76 = scmp.eq.s32.totalorder %s17, 1
    %p77 = por %p75, %p76
    %p78 = scmp.ne.s32.totalorder %s69, %s70
    %p79 = scmp.eq.s32.totalorder %s17, 0
    %p80 = por %p78, %p79
    %p81 = scmp.ne.s32.totalorder %s69, %s70
    %p82 = scmp.eq.s32.totalorder %s18, 1
    %p83 = por %p81, %p82
    %p85 = scmp.ne.s32.totalorder %s70, %s84
    %p86 = scmp.eq.s32.totalorder %s18, 0
    %p87 = por %p85, %p86
    %s89 = sadd.s32 %s88, 1
    %p92 = scmp.eq.s32.totalorder %s12, 1
    %p93 = scmp.ne.s32.totalorder %s88, %s90
    %p94 = scmp.eq.s32.totalorder %s12, 0
    %p95 = por %p93, %p94
    %p96 = scmp.ne.s32.totalorder %s88, %s90
    %p97 = scmp.eq.s32.totalorder %s17, 1
    %p98 = por %p96, %p97
    %p99 = scmp.ne.s32.totalorder %s90, %s91
    %p100 = scmp.eq.s32.totalorder %s17, 0
    %p101 = por %p99, %p100
    %p102 = scmp.ne.s32.totalorder %s90, %s91
    %p103 = scmp.eq.s32.totalorder %s18, 1
    %p104 = por %p102, %p103
    %p106 = scmp.ne.s32.totalorder %s91, %s105
    %p107 = scmp.eq.s32.totalorder %s18, 0
    %p108 = por %p106, %p107
    %s109 = ssub.s32 %s12, %s19
    %p110 = scmp.eq.s32.totalorder %s109, 0
    %s112 = sadd.s32 %s111, 1
    %s113 = scalar_select %p110, %s111, %s112
    %p116 = pneg %p110
    %p117 = scmp.eq.s32.totalorder %s12, 1
    %p118 = por %p116, %p117
    %p119 = scmp.ne.s32.totalorder %s111, %s114
    %p120 = scmp.eq.s32.totalorder %s12, 0
    %p121 = por %p119, %p120
    %p122 = scmp.ne.s32.totalorder %s111, %s114
    %p123 = scmp.eq.s32.totalorder %s17, 1
    %p124 = por %p122, %p123
    %p125 = scmp.ne.s32.totalorder %s114, %s115
    %p126 = scmp.eq.s32.totalorder %s17, 0
    %p127 = por %p125, %p126
    %p128 = scmp.ne.s32.totalorder %s114, %s115
    %p129 = scmp.eq.s32.totalorder %s18, 1
    %p130 = por %p128, %p129
    %p132 = scmp.ne.s32.totalorder %s115, %s131
    %p133 = scmp.eq.s32.totalorder %s18, 0
    %p134 = por %p132, %p133
    %s135 = ssub.s32 %s12, %s19
    %p136 = scmp.eq.s32.totalorder %s135, 0
    %s138 = sadd.s32 %s137, 1
    %s139 = scalar_select %p136, %s137, %s138
    %p142 = pneg %p136
    %p143 = scmp.eq.s32.totalorder %s12, 1
    %p144 = por %p142, %p143
    %p145 = scmp.ne.s32.totalorder %s137, %s140
    %p146 = scmp.eq.s32.totalorder %s12, 0
    %p147 = por %p145, %p146
    %p148 = scmp.ne.s32.totalorder %s137, %s140
    %p149 = scmp.eq.s32.totalorder %s17, 1
    %p150 = por %p148, %p149
    %p151 = scmp.ne.s32.totalorder %s140, %s141
    %p152 = scmp.eq.s32.totalorder %s17, 0
    %p153 = por %p151, %p152
    %p154 = scmp.ne.s32.totalorder %s140, %s141
    %p155 = scmp.eq.s32.totalorder %s18, 1
    %p156 = por %p154, %p155
    %p158 = scmp.ne.s32.totalorder %s141, %s157
    %p159 = scmp.eq.s32.totalorder %s18, 0
    %p160 = por %p158, %p159
    %p161 = scmp.le.s32.totalorder 1, %s12
    %p162 = scmp.lt.s32.totalorder %s12, 3
    %p163 = pnand %p161, %p162
    %p164 = pneg %p163
    // Predicated region
    $region9: #{down_forward_nhwc.4} parent=5 // pred_check
      _
    $region10: #{down_forward_nhwc.4} parent=5 // pred_check_branch
      %166 = sbr.rel (%p163) target = $region12
    $region11: #{down_forward_nhwc.4} parent=5 // pred_region
      %s167 = ssub.s32 %s12, 1
      // Predicated region
      $region13: #{down_forward_nhwc.4} parent=11 // pred_check
        %p168 = pneg %p59
      $region14: #{down_forward_nhwc.4} parent=11 // pred_check_branch
        %170 = sbr.rel (%p168) target = $region16
      $region15: #{down_forward_nhwc.4} parent=11 // pred_region
        _
      $region16: #{down_forward_nhwc.4} parent=11 // pred_fallthru
        _
      // Predicated region
      $region17: #{down_forward_nhwc.4} parent=11 // pred_check
        %p171 = pneg %p80
      $region18: #{down_forward_nhwc.4} parent=11 // pred_check_branch
        %173 = sbr.rel (%p171) target = $region20
      $region19: #{down_forward_nhwc.4} parent=11 // pred_region
        _
      $region20: #{down_forward_nhwc.4} parent=11 // pred_fallthru
        _
      // Predicated region
      $region21: #{down_forward_nhwc.4} parent=11 // pred_check
        %p174 = pneg %p101
      $region22: #{down_forward_nhwc.4} parent=11 // pred_check_branch
        %176 = sbr.rel (%p174) target = $region24
      $region23: #{down_forward_nhwc.4} parent=11 // pred_region
        _
      $region24: #{down_forward_nhwc.4} parent=11 // pred_fallthru
        _
    $region12: #{down_forward_nhwc.4} parent=5 // pred_fallthru
      _
    %p177 = scmp.lt.s32.totalorder %s12, 2
    // Predicated region
    $region25: #{down_forward_nhwc.4} parent=5 // pred_check
      %p178 = pneg %p177
    $region26: #{down_forward_nhwc.4} parent=5 // pred_check_branch
      %180 = sbr.rel (%p178) target = $region28
    $region27: #{down_forward_nhwc.4} parent=5 // pred_region
      // Predicated region
      $region29: #{down_forward_nhwc.4} parent=27 // pred_check
        %p181 = pneg %p32
      $region30: #{down_forward_nhwc.4} parent=27 // pred_check_branch
        %183 = sbr.rel (%p181) target = $region32
      $region31: #{down_forward_nhwc.4} parent=27 // pred_region
        %p184 = scmp.lt.s32.totalorder %s12, 1
        %s185 = scalar_select %p184, %s12, 1
        %s186 = smul.addr %s185, 8
        %s187 = smul.addr %s186, 8
        %s188 = scalar_lea.vmem %s0, %s187
      $region32: #{down_forward_nhwc.4} parent=27 // pred_fallthru
        _
    $region28: #{down_forward_nhwc.4} parent=5 // pred_fallthru
      _
    %p189 = scmp.le.s32.totalorder 1, %s12
    %p190 = scmp.lt.s32.totalorder %s12, 3
    %p191 = pnand %p189, %p190
    %p192 = pneg %p191
    // Predicated region
    $region33: #{down_forward_nhwc.4} parent=5 // pred_check
      _
    $region34: #{down_forward_nhwc.4} parent=5 // pred_check_branch
      %194 = sbr.rel (%p191) target = $region36
    $region35: #{down_forward_nhwc.4} parent=5 // pred_region
      %s195 = ssub.s32 %s12, 1
      %p196 = scmp.lt.s32.totalorder %s17, 1
      %s197 = scalar_select %p196, %s17, 1
      %s198 = smul.addr %s197, 8
      %s199 = smul.addr %s198, 8
      %s200 = scalar_lea.vmem %s0, %s199
      %p201 = pneg %p38
      %p202 = pneg %p35
      %p203 = pneg %p59
      %p204 = pneg %p56
      %p205 = pneg %p80
      %p206 = pneg %p77
      %p207 = pneg %p101
      %p208 = pneg %p98
      %p209 = pneg %p127
      %p210 = pneg %p124
      %p211 = scmp.lt.s32.totalorder %s17, 1
      %s212 = scalar_select %p211, %s17, 1
      %s213 = smul.addr %s212, 8
      %s214 = smul.addr %s213, 8
      %s215 = scalar_lea.vmem %s4, %s214
      %p216 = pneg %p153
      %p217 = pneg %p150
      %p218 = scmp.lt.s32.totalorder %s17, 1
      %s219 = scalar_select %p218, %s17, 1
      %s220 = smul.addr %s219, 2
      %s221 = scalar_lea.vmem %s5, %s220
      %p222 = scmp.lt.s32.totalorder %s17, 1
      %s223 = scalar_select %p222, %s17, 1
      %s224 = smul.addr %s223, 8
      %s225 = smul.addr %s224, 8
      %s226 = scalar_lea.vmem %s0, %s225
      %p227 = scmp.lt.s32.totalorder %s17, 1
      %s228 = scalar_select %p227, %s17, 1
      %s229 = smul.addr %s228, 8
      %s230 = smul.addr %s229, 8
      %s231 = scalar_lea.vmem %s4, %s230
      %p232 = scmp.lt.s32.totalorder %s17, 1
      %s233 = scalar_select %p232, %s17, 1
      %s234 = smul.addr %s233, 2
      %s235 = scalar_lea.vmem %s5, %s234
      %v237 = vld [vmem:[%s226] sm:$0xff]
      %v238 = vld [vmem:[%s226 + $0x8] sm:$0xff]
      %v239 = vld [vmem:[%s226 + $0x10] sm:$0xff]
      %v240 = vld [vmem:[%s226 + $0x18] sm:$0xff]
      %v241 = vld [vmem:[%s226 + $0x20] sm:$0xff]
      %v242 = vld [vmem:[%s226 + $0x28] sm:$0xff]
      %v243 = vld [vmem:[%s226 + $0x30] sm:$0xff]
      %v244 = vld [vmem:[%s226 + $0x38] sm:$0xff]
      %v245 = vld [vmem:[%s1] sm:$0x1]
      %v247 = vlaneseq
      %v248 = vshrl.u32 %v247, 7
      %v249 = vsub.s32 0, %v248
      %v250 = vrot.slane %v245, %v249
      %v252 = vmul.f32 %v237, %v250
      %v253 = vmul.f32 %v238, %v250
      %v254 = vmul.f32 %v239, %v250
      %v255 = vmul.f32 %v240, %v250
      %v256 = vmul.f32 %v241, %v250
      %v257 = vmul.f32 %v242, %v250
      %v258 = vmul.f32 %v243, %v250
      %v259 = vmul.f32 %v244, %v250
      %v260 = vld [vmem:[%s2] sm:$0x1]
      %v262 = vlaneseq
      %v263 = vshrl.u32 %v262, 7
      %v264 = vsub.s32 0, %v263
      %v265 = vrot.slane %v260, %v264
      %v267 = vadd.f32 %v252, %v265
      %v268 = vadd.f32 %v253, %v265
      %v269 = vadd.f32 %v254, %v265
      %v270 = vadd.f32 %v255, %v265
      %v271 = vadd.f32 %v256, %v265
      %v272 = vadd.f32 %v257, %v265
      %v273 = vadd.f32 %v258, %v265
      %v274 = vadd.f32 %v259, %v265
      %v275 = vmax.f32 %v267, 0.0
      %v276 = vmax.f32 %v268, 0.0
      %v277 = vmax.f32 %v269, 0.0
      %v278 = vmax.f32 %v270, 0.0
      %v279 = vmax.f32 %v271, 0.0
      %v280 = vmax.f32 %v272, 0.0
      %v281 = vmax.f32 %v273, 0.0
      %v282 = vmax.f32 %v274, 0.0
      %v291 = vrot.slane %v275, 7
      %v292 = vrot.slane %v276, 7
      %v293 = vrot.slane %v277, 7
      %v294 = vrot.slane %v278, 7
      %v295 = vrot.slane %v279, 7
      %v296 = vrot.slane %v280, 7
      %v297 = vrot.slane %v281, 7
      %v298 = vrot.slane %v282, 7
      %vm307 = vcmask 1040384
      %v308 = vsel %vm307, 0.0, %v291
      %v309 = vsel %vm307, 0.0, %v292
      %v310 = vsel %vm307, 0.0, %v293
      %v311 = vsel %vm307, 0.0, %v294
      %v312 = vsel %vm307, 0.0, %v295
      %v313 = vsel %vm307, 0.0, %v296
      %v314 = vsel %vm307, 0.0, %v297
      %v315 = vsel %vm307, 0.0, %v298
      %v316 = vsel %vm307, %v291, 0.0
      %v317 = vsel %vm307, %v292, 0.0
      %v318 = vsel %vm307, %v293, 0.0
      %v319 = vsel %vm307, %v294, 0.0
      %v320 = vsel %vm307, %v295, 0.0
      %v321 = vsel %vm307, %v296, 0.0
      %v322 = vsel %vm307, %v297, 0.0
      %v323 = vsel %vm307, %v298, 0.0
      %vm339 = vcmask 1046528
      %v340 = vrot.slane 0.0, 1
      %v341 = vsel %vm339, %v340, %v340
      %v342 = vrot.slane %v308, 1
      %v343 = vrot.slane %v316, 1
      %v344 = vsel %vm339, %v342, %v343
      %v345 = vrot.slane %v309, 1
      %v346 = vrot.slane %v317, 1
      %v347 = vsel %vm339, %v345, %v346
      %v348 = vrot.slane %v310, 1
      %v349 = vrot.slane %v318, 1
      %v350 = vsel %vm339, %v348, %v349
      %v351 = vrot.slane %v311, 1
      %v352 = vrot.slane %v319, 1
      %v353 = vsel %vm339, %v351, %v352
      %v354 = vrot.slane %v312, 1
      %v355 = vrot.slane %v320, 1
      %v356 = vsel %vm339, %v354, %v355
      %v357 = vrot.slane %v313, 1
      %v358 = vrot.slane %v321, 1
      %v359 = vsel %vm339, %v357, %v358
      %v360 = vrot.slane %v314, 1
      %v361 = vrot.slane %v322, 1
      %v362 = vsel %vm339, %v360, %v361
      %vm371 = vcmask 1045504
      %v372 = vrot.slane 0.0, 2
      %v373 = vsel %vm371, %v372, %v372
      %v374 = vrot.slane %v308, 2
      %v375 = vrot.slane %v316, 2
      %v376 = vsel %vm371, %v374, %v375
      %v377 = vrot.slane %v309, 2
      %v378 = vrot.slane %v317, 2
      %v379 = vsel %vm371, %v377, %v378
      %v380 = vrot.slane %v310, 2
      %v381 = vrot.slane %v318, 2
      %v382 = vsel %vm371, %v380, %v381
      %v383 = vrot.slane %v311, 2
      %v384 = vrot.slane %v319, 2
      %v385 = vsel %vm371, %v383, %v384
      %v386 = vrot.slane %v312, 2
      %v387 = vrot.slane %v320, 2
      %v388 = vsel %vm371, %v386, %v387
      %v389 = vrot.slane %v313, 2
      %v390 = vrot.slane %v321, 2
      %v391 = vsel %vm371, %v389, %v390
      %v392 = vrot.slane %v314, 2
      %v393 = vrot.slane %v322, 2
      %v394 = vsel %vm371, %v392, %v393
      %v403 = vpack.c.bf16 %v308, 0.0
      %v404 = vpack.c.bf16 %v344, %v341
      %v405 = vpack.c.bf16 %v376, %v373
      %v406 = vpack.c.bf16 %v310, %v309
      %v407 = vpack.c.bf16 %v350, %v347
      %v408 = vpack.c.bf16 %v382, %v379
      %v409 = vpack.c.bf16 %v312, %v311
      %v410 = vpack.c.bf16 %v356, %v353
      %v411 = vpack.c.bf16 %v388, %v385
      %v412 = vpack.c.bf16 %v314, %v313
      %v413 = vpack.c.bf16 %v362, %v359
      %v414 = vpack.c.bf16 %v394, %v391
      %v415 = vld [vmem:[%s3] sm:$0xf]
      %v416 = vld [vmem:[%s3 + $0x4] sm:$0xf]
      %v417 = vld [vmem:[%s3 + $0x8] sm:$0xf]
      %v418 = vld [vmem:[%s3 + $0xc] sm:$0xf]
      %v419 = vld [vmem:[%s3 + $0x10] sm:$0xf]
      %v420 = vld [vmem:[%s3 + $0x14] sm:$0xf]
      %v421 = vld [vmem:[%s3 + $0x18] sm:$0xf]
      %v422 = vld [vmem:[%s3 + $0x1c] sm:$0xf]
      %v423 = vld [vmem:[%s3 + $0x20] sm:$0xf]
      %v424 = vld [vmem:[%s3 + $0x24] sm:$0xf]
      %v425 = vld [vmem:[%s3 + $0x28] sm:$0xf]
      %v426 = vld [vmem:[%s3 + $0x2c] sm:$0xf]
      %v427 = vld [vmem:[%s3 + $0x30] sm:$0xf]
      %v428 = vld [vmem:[%s3 + $0x34] sm:$0xf]
      %v429 = vld [vmem:[%s3 + $0x38] sm:$0xf]
      %v430 = vld [vmem:[%s3 + $0x3c] sm:$0xf]
      %v431 = vld [vmem:[%s3 + $0x40] sm:$0xf]
      %v432 = vld [vmem:[%s3 + $0x44] sm:$0xf]
      %v433 = vld [vmem:[%s3 + $0x48] sm:$0xf]
      %v434 = vld [vmem:[%s3 + $0x4c] sm:$0xf]
      %v435 = vld [vmem:[%s3 + $0x50] sm:$0xf]
      %v436 = vld [vmem:[%s3 + $0x54] sm:$0xf]
      %v437 = vld [vmem:[%s3 + $0x58] sm:$0xf]
      %v438 = vld [vmem:[%s3 + $0x5c] sm:$0xf]
      %v439 = vld [vmem:[%s3 + $0x60] sm:$0xf]
      %v440 = vld [vmem:[%s3 + $0x64] sm:$0xf]
      %v441 = vld [vmem:[%s3 + $0x68] sm:$0xf]
      %v442 = vld [vmem:[%s3 + $0x6c] sm:$0xf]
      %v443 = vld [vmem:[%s3 + $0x70] sm:$0xf]
      %v444 = vld [vmem:[%s3 + $0x74] sm:$0xf]
      %v445 = vld [vmem:[%s3 + $0x78] sm:$0xf]
      %v446 = vld [vmem:[%s3 + $0x7c] sm:$0xf]
      %v447 = vld [vmem:[%s3 + $0x80] sm:$0xf]
      %v448 = vld [vmem:[%s3 + $0x84] sm:$0xf]
      %v449 = vld [vmem:[%s3 + $0x88] sm:$0xf]
      %v450 = vld [vmem:[%s3 + $0x8c] sm:$0xf]
      %v451 = vld [vmem:[%s3 + $0x90] sm:$0xf]
      %v452 = vld [vmem:[%s3 + $0x94] sm:$0xf]
      %v453 = vld [vmem:[%s3 + $0x98] sm:$0xf]
      %v454 = vld [vmem:[%s3 + $0x9c] sm:$0xf]
      %v455 = vld [vmem:[%s3 + $0xa0] sm:$0xf]
      %v456 = vld [vmem:[%s3 + $0xa4] sm:$0xf]
      %v457 = vld [vmem:[%s3 + $0xa8] sm:$0xf]
      %v458 = vld [vmem:[%s3 + $0xac] sm:$0xf]
      %v459 = vld [vmem:[%s3 + $0xb0] sm:$0xf]
      %v460 = vld [vmem:[%s3 + $0xb4] sm:$0xf]
      %v461 = vld [vmem:[%s3 + $0xb8] sm:$0xf]
      %v462 = vld [vmem:[%s3 + $0xbc] sm:$0xf]
      %v511 = vunpack.c.l.b16 %v415
      %v512 = vunpack.c.l.b16 %v416
      %v513 = vunpack.c.l.b16 %v417
      %v514 = vunpack.c.l.b16 %v418
      %v515 = vunpack.c.l.b16 %v419
      %v516 = vunpack.c.l.b16 %v420
      %v517 = vunpack.c.l.b16 %v421
      %v518 = vunpack.c.l.b16 %v422
      %v519 = vunpack.c.l.b16 %v423
      %v520 = vunpack.c.l.b16 %v424
      %v521 = vunpack.c.l.b16 %v425
      %v522 = vunpack.c.l.b16 %v426
      %v523 = vunpack.c.l.b16 %v427
      %v524 = vunpack.c.l.b16 %v428
      %v525 = vunpack.c.l.b16 %v429
      %v526 = vunpack.c.l.b16 %v430
      %v527 = vunpack.c.l.b16 %v431
      %v528 = vunpack.c.l.b16 %v432
      %v529 = vunpack.c.l.b16 %v433
      %v530 = vunpack.c.l.b16 %v434
      %v531 = vunpack.c.l.b16 %v435
      %v532 = vunpack.c.l.b16 %v436
      %v533 = vunpack.c.l.b16 %v437
      %v534 = vunpack.c.l.b16 %v438
      %v535 = vunpack.c.l.b16 %v439
      %v536 = vunpack.c.l.b16 %v440
      %v537 = vunpack.c.l.b16 %v441
      %v538 = vunpack.c.l.b16 %v442
      %v539 = vunpack.c.l.b16 %v443
      %v540 = vunpack.c.l.b16 %v444
      %v541 = vunpack.c.l.b16 %v445
      %v542 = vunpack.c.l.b16 %v446
      %v543 = vunpack.c.l.b16 %v447
      %v544 = vunpack.c.l.b16 %v448
      %v545 = vunpack.c.l.b16 %v449
      %v546 = vunpack.c.l.b16 %v450
      %v547 = vunpack.c.l.b16 %v451
      %v548 = vunpack.c.l.b16 %v452
      %v549 = vunpack.c.l.b16 %v453
      %v550 = vunpack.c.l.b16 %v454
      %v551 = vunpack.c.l.b16 %v455
      %v552 = vunpack.c.l.b16 %v456
      %v553 = vunpack.c.l.b16 %v457
      %v554 = vunpack.c.l.b16 %v458
      %v555 = vunpack.c.l.b16 %v459
      %v556 = vunpack.c.l.b16 %v460
      %v557 = vunpack.c.l.b16 %v461
      %v558 = vunpack.c.l.b16 %v462
      %v559 = vpack.c.b16 %v512, %v511
      %v560 = vpack.c.b16 %v514, %v513
      %v561 = vpack.c.b16 %v516, %v515
      %v562 = vpack.c.b16 %v518, %v517
      %v563 = vpack.c.b16 %v520, %v519
      %v564 = vpack.c.b16 %v522, %v521
      %v565 = vpack.c.b16 %v524, %v523
      %v566 = vpack.c.b16 %v526, %v525
      %v567 = vpack.c.b16 %v528, %v527
      %v568 = vpack.c.b16 %v530, %v529
      %v569 = vpack.c.b16 %v532, %v531
      %v570 = vpack.c.b16 %v534, %v533
      %v571 = vpack.c.b16 %v536, %v535
      %v572 = vpack.c.b16 %v538, %v537
      %v573 = vpack.c.b16 %v540, %v539
      %v574 = vpack.c.b16 %v542, %v541
      %v575 = vpack.c.b16 %v544, %v543
      %v576 = vpack.c.b16 %v546, %v545
      %v577 = vpack.c.b16 %v548, %v547
      %v578 = vpack.c.b16 %v550, %v549
      %v579 = vpack.c.b16 %v552, %v551
      %v580 = vpack.c.b16 %v554, %v553
      %v581 = vpack.c.b16 %v556, %v555
      %v582 = vpack.c.b16 %v558, %v557
      %607 = vmatprep.subr.bf16.mxu0 0
      %608 = vmatpush1.bf16.msra.mxu0 %v566
      %609 = vmatprep.subr.bf16.mxu0 0
      %610 = vmatpush1.bf16.msra.mxu0 %v565
      %611 = vmatprep.subr.bf16.mxu0 0
      %612 = vmatpush1.bf16.msra.mxu0 %v564
      %613 = vmatprep.subr.bf16.mxu0 0
      %614 = vmatpush1.bf16.msra.mxu0 %v563
      %615 = vmatprep.subr.bf16.mxu0 0
      %616 = vmatpush1.bf16.msra.mxu0 %v562
      %617 = vmatprep.subr.bf16.mxu0 0
      %618 = vmatpush1.bf16.msra.mxu0 %v561
      %619 = vmatprep.subr.bf16.mxu0 0
      %620 = vmatpush1.bf16.msra.mxu0 %v560
      %621 = vmatprep.subr.bf16.mxu0 0
      %622 = vmatpush1.bf16.msra.mxu0 %v559
      %623 = vmatprep.subr.bf16.mxu0 0
      %624 = vmatpush2.bf16.msra.mxu0 %v574
      %625 = vmatprep.subr.bf16.mxu0 0
      %626 = vmatpush2.bf16.msra.mxu0 %v573
      %627 = vmatprep.subr.bf16.mxu0 0
      %628 = vmatpush2.bf16.msra.mxu0 %v572
      %629 = vmatprep.subr.bf16.mxu0 0
      %630 = vmatpush2.bf16.msra.mxu0 %v571
      %631 = vmatprep.subr.bf16.mxu0 0
      %632 = vmatpush2.bf16.msra.mxu0 %v570
      %633 = vmatprep.subr.bf16.mxu0 0
      %634 = vmatpush2.bf16.msra.mxu0 %v569
      %635 = vmatprep.subr.bf16.mxu0 0
      %636 = vmatpush2.bf16.msra.mxu0 %v568
      %637 = vmatprep.subr.bf16.mxu0 0
      %638 = vmatpush2.bf16.msra.mxu0 %v567
      %639 = vmatprep.mubr.bf16.mxu0 %v404
      %640 = vmatmul.mubr.bf16.gmra.mxu0 %v403
      %v641 = vpop.f32.mrf.mxu0
      %v642 = vadd.f32 0.0, %v641
      %v643 = vpop.f32.mrf.mxu0
      %v644 = vpop.f32.mrf.mxu0
      %v645 = vadd.f32 0.0, %v644
      %v646 = vpop.f32.mrf.mxu0
      %647 = vmatprep.mubr.bf16.mxu0 %v407
      %648 = vmatmul.mubr.bf16.gmra.mxu0 %v406
      %v649 = vpop.f32.mrf.mxu0
      %v650 = vadd.f32 0.0, %v649
      %v651 = vpop.f32.mrf.mxu0
      %v652 = vpop.f32.mrf.mxu0
      %v653 = vadd.f32 0.0, %v652
      %v654 = vpop.f32.mrf.mxu0
      %655 = vmatprep.mubr.bf16.mxu0 %v410
      %656 = vmatmul.mubr.bf16.gmra.mxu0 %v409
      %v657 = vpop.f32.mrf.mxu0
      %v658 = vadd.f32 0.0, %v657
      %v659 = vpop.f32.mrf.mxu0
      %v660 = vpop.f32.mrf.mxu0
      %v661 = vadd.f32 0.0, %v660
      %v662 = vpop.f32.mrf.mxu0
      %663 = vmatprep.mubr.bf16.mxu0 %v413
      %664 = vmatmul.mubr.bf16.gmra.mxu0 %v412
      %v665 = vpop.f32.mrf.mxu0
      %v666 = vadd.f32 0.0, %v665
      %v667 = vpop.f32.mrf.mxu0
      %v668 = vpop.f32.mrf.mxu0
      %v669 = vadd.f32 0.0, %v668
      %v670 = vpop.f32.mrf.mxu0
      %671 = vdwg.mxu0
      %672 = vmatprep.subr.bf16.mxu0 0
      %673 = vmatpush1.bf16.msra.mxu0 %v582
      %674 = vmatprep.subr.bf16.mxu0 0
      %675 = vmatpush1.bf16.msra.mxu0 %v581
      %676 = vmatprep.subr.bf16.mxu0 0
      %677 = vmatpush1.bf16.msra.mxu0 %v580
      %678 = vmatprep.subr.bf16.mxu0 0
      %679 = vmatpush1.bf16.msra.mxu0 %v579
      %680 = vmatprep.subr.bf16.mxu0 0
      %681 = vmatpush1.bf16.msra.mxu0 %v578
      %682 = vmatprep.subr.bf16.mxu0 0
      %683 = vmatpush1.bf16.msra.mxu0 %v577
      %684 = vmatprep.subr.bf16.mxu0 0
      %685 = vmatpush1.bf16.msra.mxu0 %v576
      %686 = vmatprep.subr.bf16.mxu0 0
      %687 = vmatpush1.bf16.msra.mxu0 %v575
      %688 = vmatprep.subr.bf16.mxu0 0
      %689 = vmatpush2.bf16.msra.mxu0 0
      %690 = vmatprep.subr.bf16.mxu0 0
      %691 = vmatpush2.bf16.msra.mxu0 0
      %692 = vmatprep.subr.bf16.mxu0 0
      %693 = vmatpush2.bf16.msra.mxu0 0
      %694 = vmatprep.subr.bf16.mxu0 0
      %695 = vmatpush2.bf16.msra.mxu0 0
      %696 = vmatprep.subr.bf16.mxu0 0
      %697 = vmatpush2.bf16.msra.mxu0 0
      %698 = vmatprep.subr.bf16.mxu0 0
      %699 = vmatpush2.bf16.msra.mxu0 0
      %700 = vmatprep.subr.bf16.mxu0 0
      %701 = vmatpush2.bf16.msra.mxu0 0
      %702 = vmatprep.subr.bf16.mxu0 0
      %703 = vmatpush2.bf16.msra.mxu0 0
      %704 = vmatprep.mubr.bf16.mxu0 0
      %705 = vmatmul.mubr.bf16.gmra.mxu0 %v405
      %v706 = vpop.f32.mrf.mxu0
      %v707 = vadd.f32 %v642, %v706
      %v708 = vpop.f32.mrf.mxu0
      %v709 = vpop.f32.mrf.mxu0
      %v710 = vadd.f32 %v645, %v709
      %v711 = vpop.f32.mrf.mxu0
      %712 = vmatprep.mubr.bf16.mxu0 0
      %713 = vmatmul.mubr.bf16.gmra.mxu0 %v408
      %v714 = vpop.f32.mrf.mxu0
      %v715 = vadd.f32 %v650, %v714
      %v716 = vpop.f32.mrf.mxu0
      %v717 = vpop.f32.mrf.mxu0
      %v718 = vadd.f32 %v653, %v717
      %v719 = vpop.f32.mrf.mxu0
      %720 = vmatprep.mubr.bf16.mxu0 0
      %721 = vmatmul.mubr.bf16.gmra.mxu0 %v411
      %v722 = vpop.f32.mrf.mxu0
      %v723 = vadd.f32 %v658, %v722
      %v724 = vpop.f32.mrf.mxu0
      %v725 = vpop.f32.mrf.mxu0
      %v726 = vadd.f32 %v661, %v725
      %v727 = vpop.f32.mrf.mxu0
      %728 = vmatprep.mubr.bf16.mxu0 0
      %729 = vmatmul.mubr.bf16.gmra.mxu0 %v414
      %v730 = vpop.f32.mrf.mxu0
      %v731 = vadd.f32 %v666, %v730
      %v732 = vpop.f32.mrf.mxu0
      %v733 = vpop.f32.mrf.mxu0
      %v734 = vadd.f32 %v669, %v733
      %v735 = vpop.f32.mrf.mxu0
      %736 = vdwg.mxu0
      %737 = vst [vmem:[#allocation2] sm:$0xff] %v707
      %738 = vst [vmem:[#allocation2 + $0x8] sm:$0xff] %v710
      %739 = vst [vmem:[#allocation2 + $0x10] sm:$0xff] %v715
      %740 = vst [vmem:[#allocation2 + $0x18] sm:$0xff] %v718
      %741 = vst [vmem:[#allocation2 + $0x20] sm:$0xff] %v723
      %742 = vst [vmem:[#allocation2 + $0x28] sm:$0xff] %v726
      %743 = vst [vmem:[#allocation2 + $0x30] sm:$0xff] %v731
      %744 = vst [vmem:[#allocation2 + $0x38] sm:$0xff] %v734
      %v747 = vrot.slane %v315, 1
      %v748 = vrot.slane %v323, 1
      %v749 = vsel %vm339, %v747, %v748
      %v751 = vrot.slane %v315, 2
      %v752 = vrot.slane %v323, 2
      %v753 = vsel %vm371, %v751, %v752
      %v755 = vpack.c.bf16 %v309, %v308
      %v756 = vpack.c.bf16 %v347, %v344
      %v757 = vpack.c.bf16 %v379, %v376
      %v758 = vpack.c.bf16 %v311, %v310
      %v759 = vpack.c.bf16 %v353, %v350
      %v760 = vpack.c.bf16 %v385, %v382
      %v761 = vpack.c.bf16 %v313, %v312
      %v762 = vpack.c.bf16 %v359, %v356
      %v763 = vpack.c.bf16 %v391, %v388
      %v764 = vpack.c.bf16 %v315, %v314
      %v765 = vpack.c.bf16 %v749, %v362
      %v766 = vpack.c.bf16 %v753, %v394
      %s767 = scalar_lea.vmem %s3, 192
      %v768 = vld [vmem:[%s767] sm:$0xf]
      %v769 = vld [vmem:[%s767 + $0x4] sm:$0xf]
      %v770 = vld [vmem:[%s767 + $0x8] sm:$0xf]
      %v771 = vld [vmem:[%s767 + $0xc] sm:$0xf]
      %v772 = vld [vmem:[%s767 + $0x10] sm:$0xf]
      %v773 = vld [vmem:[%s767 + $0x14] sm:$0xf]
      %v774 = vld [vmem:[%s767 + $0x18] sm:$0xf]
      %v775 = vld [vmem:[%s767 + $0x1c] sm:$0xf]
      %v776 = vld [vmem:[%s767 + $0x20] sm:$0xf]
      %v777 = vld [vmem:[%s767 + $0x24] sm:$0xf]
      %v778 = vld [vmem:[%s767 + $0x28] sm:$0xf]
      %v779 = vld [vmem:[%s767 + $0x2c] sm:$0xf]
      %v780 = vld [vmem:[%s767 + $0x30] sm:$0xf]
      %v781 = vld [vmem:[%s767 + $0x34] sm:$0xf]
      %v782 = vld [vmem:[%s767 + $0x38] sm:$0xf]
      %v783 = vld [vmem:[%s767 + $0x3c] sm:$0xf]
      %v784 = vld [vmem:[%s767 + $0x40] sm:$0xf]
      %v785 = vld [vmem:[%s767 + $0x44] sm:$0xf]
      %v786 = vld [vmem:[%s767 + $0x48] sm:$0xf]
      %v787 = vld [vmem:[%s767 + $0x4c] sm:$0xf]
      %v788 = vld [vmem:[%s767 + $0x50] sm:$0xf]
      %v789 = vld [vmem:[%s767 + $0x54] sm:$0xf]
      %v790 = vld [vmem:[%s767 + $0x58] sm:$0xf]
      %v791 = vld [vmem:[%s767 + $0x5c] sm:$0xf]
      %v792 = vld [vmem:[%s767 + $0x60] sm:$0xf]
      %v793 = vld [vmem:[%s767 + $0x64] sm:$0xf]
      %v794 = vld [vmem:[%s767 + $0x68] sm:$0xf]
      %v795 = vld [vmem:[%s767 + $0x6c] sm:$0xf]
      %v796 = vld [vmem:[%s767 + $0x70] sm:$0xf]
      %v797 = vld [vmem:[%s767 + $0x74] sm:$0xf]
      %v798 = vld [vmem:[%s767 + $0x78] sm:$0xf]
      %v799 = vld [vmem:[%s767 + $0x7c] sm:$0xf]
      %v800 = vld [vmem:[%s767 + $0x80] sm:$0xf]
      %v801 = vld [vmem:[%s767 + $0x84] sm:$0xf]
      %v802 = vld [vmem:[%s767 + $0x88] sm:$0xf]
      %v803 = vld [vmem:[%s767 + $0x8c] sm:$0xf]
      %v804 = vld [vmem:[%s767 + $0x90] sm:$0xf]
      %v805 = vld [vmem:[%s767 + $0x94] sm:$0xf]
      %v806 = vld [vmem:[%s767 + $0x98] sm:$0xf]
      %v807 = vld [vmem:[%s767 + $0x9c] sm:$0xf]
      %v808 = vld [vmem:[%s767 + $0xa0] sm:$0xf]
      %v809 = vld [vmem:[%s767 + $0xa4] sm:$0xf]
      %v810 = vld [vmem:[%s767 + $0xa8] sm:$0xf]
      %v811 = vld [vmem:[%s767 + $0xac] sm:$0xf]
      %v812 = vld [vmem:[%s767 + $0xb0] sm:$0xf]
      %v813 = vld [vmem:[%s767 + $0xb4] sm:$0xf]
      %v814 = vld [vmem:[%s767 + $0xb8] sm:$0xf]
      %v815 = vld [vmem:[%s767 + $0xbc] sm:$0xf]
      %v864 = vunpack.c.l.b16 %v768
      %v865 = vunpack.c.l.b16 %v769
      %v866 = vunpack.c.l.b16 %v770
      %v867 = vunpack.c.l.b16 %v771
      %v868 = vunpack.c.l.b16 %v772
      %v869 = vunpack.c.l.b16 %v773
      %v870 = vunpack.c.l.b16 %v774
      %v871 = vunpack.c.l.b16 %v775
      %v872 = vunpack.c.l.b16 %v776
      %v873 = vunpack.c.l.b16 %v777
      %v874 = vunpack.c.l.b16 %v778
      %v875 = vunpack.c.l.b16 %v779
      %v876 = vunpack.c.l.b16 %v780
      %v877 = vunpack.c.l.b16 %v781
      %v878 = vunpack.c.l.b16 %v782
      %v879 = vunpack.c.l.b16 %v783
      %v880 = vunpack.c.l.b16 %v784
      %v881 = vunpack.c.l.b16 %v785
      %v882 = vunpack.c.l.b16 %v786
      %v883 = vunpack.c.l.b16 %v787
      %v884 = vunpack.c.l.b16 %v788
      %v885 = vunpack.c.l.b16 %v789
      %v886 = vunpack.c.l.b16 %v790
      %v887 = vunpack.c.l.b16 %v791
      %v888 = vunpack.c.l.b16 %v792
      %v889 = vunpack.c.l.b16 %v793
      %v890 = vunpack.c.l.b16 %v794
      %v891 = vunpack.c.l.b16 %v795
      %v892 = vunpack.c.l.b16 %v796
      %v893 = vunpack.c.l.b16 %v797
      %v894 = vunpack.c.l.b16 %v798
      %v895 = vunpack.c.l.b16 %v799
      %v896 = vunpack.c.l.b16 %v800
      %v897 = vunpack.c.l.b16 %v801
      %v898 = vunpack.c.l.b16 %v802
      %v899 = vunpack.c.l.b16 %v803
      %v900 = vunpack.c.l.b16 %v804
      %v901 = vunpack.c.l.b16 %v805
      %v902 = vunpack.c.l.b16 %v806
      %v903 = vunpack.c.l.b16 %v807
      %v904 = vunpack.c.l.b16 %v808
      %v905 = vunpack.c.l.b16 %v809
      %v906 = vunpack.c.l.b16 %v810
      %v907 = vunpack.c.l.b16 %v811
      %v908 = vunpack.c.l.b16 %v812
      %v909 = vunpack.c.l.b16 %v813
      %v910 = vunpack.c.l.b16 %v814
      %v911 = vunpack.c.l.b16 %v815
      %v912 = vpack.c.b16 %v865, %v864
      %v913 = vpack.c.b16 %v867, %v866
      %v914 = vpack.c.b16 %v869, %v868
      %v915 = vpack.c.b16 %v871, %v870
      %v916 = vpack.c.b16 %v873, %v872
      %v917 = vpack.c.b16 %v875, %v874
      %v918 = vpack.c.b16 %v877, %v876
      %v919 = vpack.c.b16 %v879, %v878
      %v920 = vpack.c.b16 %v881, %v880
      %v921 = vpack.c.b16 %v883, %v882
      %v922 = vpack.c.b16 %v885, %v884
      %v923 = vpack.c.b16 %v887, %v886
      %v924 = vpack.c.b16 %v889, %v888
      %v925 = vpack.c.b16 %v891, %v890
      %v926 = vpack.c.b16 %v893, %v892
      %v927 = vpack.c.b16 %v895, %v894
      %v928 = vpack.c.b16 %v897, %v896
      %v929 = vpack.c.b16 %v899, %v898
      %v930 = vpack.c.b16 %v901, %v900
      %v931 = vpack.c.b16 %v903, %v902
      %v932 = vpack.c.b16 %v905, %v904
      %v933 = vpack.c.b16 %v907, %v906
      %v934 = vpack.c.b16 %v909, %v908
      %v935 = vpack.c.b16 %v911, %v910
      %960 = vmatprep.subr.bf16.mxu0 0
      %961 = vmatpush1.bf16.msra.mxu0 %v919
      %962 = vmatprep.subr.bf16.mxu0 0
      %963 = vmatpush1.bf16.msra.mxu0 %v918
      %964 = vmatprep.subr.bf16.mxu0 0
      %965 = vmatpush1.bf16.msra.mxu0 %v917
      %966 = vmatprep.subr.bf16.mxu0 0
      %967 = vmatpush1.bf16.msra.mxu0 %v916
      %968 = vmatprep.subr.bf16.mxu0 0
      %969 = vmatpush1.bf16.msra.mxu0 %v915
      %970 = vmatprep.subr.bf16.mxu0 0
      %971 = vmatpush1.bf16.msra.mxu0 %v914
      %972 = vmatprep.subr.bf16.mxu0 0
      %973 = vmatpush1.bf16.msra.mxu0 %v913
      %974 = vmatprep.subr.bf16.mxu0 0
      %975 = vmatpush1.bf16.msra.mxu0 %v912
      %976 = vmatprep.subr.bf16.mxu0 0
      %977 = vmatpush2.bf16.msra.mxu0 %v927
      %978 = vmatprep.subr.bf16.mxu0 0
      %979 = vmatpush2.bf16.msra.mxu0 %v926
      %980 = vmatprep.subr.bf16.mxu0 0
      %981 = vmatpush2.bf16.msra.mxu0 %v925
      %982 = vmatprep.subr.bf16.mxu0 0
      %983 = vmatpush2.bf16.msra.mxu0 %v924
      %984 = vmatprep.subr.bf16.mxu0 0
      %985 = vmatpush2.bf16.msra.mxu0 %v923
      %986 = vmatprep.subr.bf16.mxu0 0
      %987 = vmatpush2.bf16.msra.mxu0 %v922
      %988 = vmatprep.subr.bf16.mxu0 0
      %989 = vmatpush2.bf16.msra.mxu0 %v921
      %990 = vmatprep.subr.bf16.mxu0 0
      %991 = vmatpush2.bf16.msra.mxu0 %v920
      %992 = vmatprep.mubr.bf16.mxu0 %v756
      %993 = vmatmul.mubr.bf16.gmra.mxu0 %v755
      %v994 = vpop.f32.mrf.mxu0
      %v995 = vadd.f32 0.0, %v994
      %v996 = vpop.f32.mrf.mxu0
      %v997 = vpop.f32.mrf.mxu0
      %v998 = vadd.f32 0.0, %v997
      %v999 = vpop.f32.mrf.mxu0
      %1000 = vmatprep.mubr.bf16.mxu0 %v759
      %1001 = vmatmul.mubr.bf16.gmra.mxu0 %v758
      %v1002 = vpop.f32.mrf.mxu0
      %v1003 = vadd.f32 0.0, %v1002
      %v1004 = vpop.f32.mrf.mxu0
      %v1005 = vpop.f32.mrf.mxu0
      %v1006 = vadd.f32 0.0, %v1005
      %v1007 = vpop.f32.mrf.mxu0
      %1008 = vmatprep.mubr.bf16.mxu0 %v762
      %1009 = vmatmul.mubr.bf16.gmra.mxu0 %v761
      %v1010 = vpop.f32.mrf.mxu0
      %v1011 = vadd.f32 0.0, %v1010
      %v1012 = vpop.f32.mrf.mxu0
      %v1013 = vpop.f32.mrf.mxu0
      %v1014 = vadd.f32 0.0, %v1013
      %v1015 = vpop.f32.mrf.mxu0
      %1016 = vmatprep.mubr.bf16.mxu0 %v765
      %1017 = vmatmul.mubr.bf16.gmra.mxu0 %v764
      %v1018 = vpop.f32.mrf.mxu0
      %v1019 = vadd.f32 0.0, %v1018
      %v1020 = vpop.f32.mrf.mxu0
      %v1021 = vpop.f32.mrf.mxu0
      %v1022 = vadd.f32 0.0, %v1021
      %v1023 = vpop.f32.mrf.mxu0
      %1024 = vdwg.mxu0
      %1025 = vmatprep.subr.bf16.mxu0 0
      %1026 = vmatpush1.bf16.msra.mxu0 %v935
      %1027 = vmatprep.subr.bf16.mxu0 0
      %1028 = vmatpush1.bf16.msra.mxu0 %v934
      %1029 = vmatprep.subr.bf16.mxu0 0
      %1030 = vmatpush1.bf16.msra.mxu0 %v933
      %1031 = vmatprep.subr.bf16.mxu0 0
      %1032 = vmatpush1.bf16.msra.mxu0 %v932
      %1033 = vmatprep.subr.bf16.mxu0 0
      %1034 = vmatpush1.bf16.msra.mxu0 %v931
      %1035 = vmatprep.subr.bf16.mxu0 0
      %1036 = vmatpush1.bf16.msra.mxu0 %v930
      %1037 = vmatprep.subr.bf16.mxu0 0
      %1038 = vmatpush1.bf16.msra.mxu0 %v929
      %1039 = vmatprep.subr.bf16.mxu0 0
      %1040 = vmatpush1.bf16.msra.mxu0 %v928
      %1041 = vmatprep.subr.bf16.mxu0 0
      %1042 = vmatpush2.bf16.msra.mxu0 0
      %1043 = vmatprep.subr.bf16.mxu0 0
      %1044 = vmatpush2.bf16.msra.mxu0 0
      %1045 = vmatprep.subr.bf16.mxu0 0
      %1046 = vmatpush2.bf16.msra.mxu0 0
      %1047 = vmatprep.subr.bf16.mxu0 0
      %1048 = vmatpush2.bf16.msra.mxu0 0
      %1049 = vmatprep.subr.bf16.mxu0 0
      %1050 = vmatpush2.bf16.msra.mxu0 0
      %1051 = vmatprep.subr.bf16.mxu0 0
      %1052 = vmatpush2.bf16.msra.mxu0 0
      %1053 = vmatprep.subr.bf16.mxu0 0
      %1054 = vmatpush2.bf16.msra.mxu0 0
      %1055 = vmatprep.subr.bf16.mxu0 0
      %1056 = vmatpush2.bf16.msra.mxu0 0
      %1057 = vmatprep.mubr.bf16.mxu0 0
      %1058 = vmatmul.mubr.bf16.gmra.mxu0 %v757
      %v1059 = vpop.f32.mrf.mxu0
      %v1060 = vadd.f32 %v995, %v1059
      %v1061 = vpop.f32.mrf.mxu0
      %v1062 = vpop.f32.mrf.mxu0
      %v1063 = vadd.f32 %v998, %v1062
      %v1064 = vpop.f32.mrf.mxu0
      %1065 = vmatprep.mubr.bf16.mxu0 0
      %1066 = vmatmul.mubr.bf16.gmra.mxu0 %v760
      %v1067 = vpop.f32.mrf.mxu0
      %v1068 = vadd.f32 %v1003, %v1067
      %v1069 = vpop.f32.mrf.mxu0
      %v1070 = vpop.f32.mrf.mxu0
      %v1071 = vadd.f32 %v1006, %v1070
      %v1072 = vpop.f32.mrf.mxu0
      %1073 = vmatprep.mubr.bf16.mxu0 0
      %1074 = vmatmul.mubr.bf16.gmra.mxu0 %v763
      %v1075 = vpop.f32.mrf.mxu0
      %v1076 = vadd.f32 %v1011, %v1075
      %v1077 = vpop.f32.mrf.mxu0
      %v1078 = vpop.f32.mrf.mxu0
      %v1079 = vadd.f32 %v1014, %v1078
      %v1080 = vpop.f32.mrf.mxu0
      %1081 = vmatprep.mubr.bf16.mxu0 0
      %1082 = vmatmul.mubr.bf16.gmra.mxu0 %v766
      %v1083 = vpop.f32.mrf.mxu0
      %v1084 = vadd.f32 %v1019, %v1083
      %v1085 = vpop.f32.mrf.mxu0
      %v1086 = vpop.f32.mrf.mxu0
      %v1087 = vadd.f32 %v1022, %v1086
      %v1088 = vpop.f32.mrf.mxu0
      %1089 = vdwg.mxu0
      %v1090 = vld [vmem:[#allocation2] sm:$0xff]
      %v1091 = vld [vmem:[#allocation2 + $0x8] sm:$0xff]
      %v1092 = vld [vmem:[#allocation2 + $0x10] sm:$0xff]
      %v1093 = vld [vmem:[#allocation2 + $0x18] sm:$0xff]
      %v1094 = vld [vmem:[#allocation2 + $0x20] sm:$0xff]
      %v1095 = vld [vmem:[#allocation2 + $0x28] sm:$0xff]
      %v1096 = vld [vmem:[#allocation2 + $0x30] sm:$0xff]
      %v1097 = vld [vmem:[#allocation2 + $0x38] sm:$0xff]
      %v1098 = vadd.f32 %v1090, %v1060
      %v1099 = vadd.f32 %v1091, %v1063
      %v1100 = vadd.f32 %v1092, %v1068
      %v1101 = vadd.f32 %v1093, %v1071
      %v1102 = vadd.f32 %v1094, %v1076
      %v1103 = vadd.f32 %v1095, %v1079
      %v1104 = vadd.f32 %v1096, %v1084
      %v1105 = vadd.f32 %v1097, %v1087
      %1106 = vst [vmem:[#allocation2] sm:$0xff] %v1098
      %1107 = vst [vmem:[#allocation2 + $0x8] sm:$0xff] %v1099
      %1108 = vst [vmem:[#allocation2 + $0x10] sm:$0xff] %v1100
      %1109 = vst [vmem:[#allocation2 + $0x18] sm:$0xff] %v1101
      %1110 = vst [vmem:[#allocation2 + $0x20] sm:$0xff] %v1102
      %1111 = vst [vmem:[#allocation2 + $0x28] sm:$0xff] %v1103
      %1112 = vst [vmem:[#allocation2 + $0x30] sm:$0xff] %v1104
      %1113 = vst [vmem:[#allocation2 + $0x38] sm:$0xff] %v1105
      %v1114 = vpack.c.bf16 0.0, %v315
      %v1115 = vpack.c.bf16 %v341, %v749
      %v1116 = vpack.c.bf16 %v373, %v753
      %s1117 = scalar_lea.vmem %s3, 384
      %v1118 = vld [vmem:[%s1117] sm:$0xf]
      %v1119 = vld [vmem:[%s1117 + $0x4] sm:$0xf]
      %v1120 = vld [vmem:[%s1117 + $0x8] sm:$0xf]
      %v1121 = vld [vmem:[%s1117 + $0xc] sm:$0xf]
      %v1122 = vld [vmem:[%s1117 + $0x10] sm:$0xf]
      %v1123 = vld [vmem:[%s1117 + $0x14] sm:$0xf]
      %v1124 = vld [vmem:[%s1117 + $0x18] sm:$0xf]
      %v1125 = vld [vmem:[%s1117 + $0x1c] sm:$0xf]
      %v1126 = vld [vmem:[%s1117 + $0x20] sm:$0xf]
      %v1127 = vld [vmem:[%s1117 + $0x24] sm:$0xf]
      %v1128 = vld [vmem:[%s1117 + $0x28] sm:$0xf]
      %v1129 = vld [vmem:[%s1117 + $0x2c] sm:$0xf]
      %v1130 = vld [vmem:[%s1117 + $0x30] sm:$0xf]
      %v1131 = vld [vmem:[%s1117 + $0x34] sm:$0xf]
      %v1132 = vld [vmem:[%s1117 + $0x38] sm:$0xf]
      %v1133 = vld [vmem:[%s1117 + $0x3c] sm:$0xf]
      %v1134 = vld [vmem:[%s1117 + $0x40] sm:$0xf]
      %v1135 = vld [vmem:[%s1117 + $0x44] sm:$0xf]
      %v1136 = vld [vmem:[%s1117 + $0x48] sm:$0xf]
      %v1137 = vld [vmem:[%s1117 + $0x4c] sm:$0xf]
      %v1138 = vld [vmem:[%s1117 + $0x50] sm:$0xf]
      %v1139 = vld [vmem:[%s1117 + $0x54] sm:$0xf]
      %v1140 = vld [vmem:[%s1117 + $0x58] sm:$0xf]
      %v1141 = vld [vmem:[%s1117 + $0x5c] sm:$0xf]
      %v1142 = vld [vmem:[%s1117 + $0x60] sm:$0xf]
      %v1143 = vld [vmem:[%s1117 + $0x64] sm:$0xf]
      %v1144 = vld [vmem:[%s1117 + $0x68] sm:$0xf]
      %v1145 = vld [vmem:[%s1117 + $0x6c] sm:$0xf]
      %v1146 = vld [vmem:[%s1117 + $0x70] sm:$0xf]
      %v1147 = vld [vmem:[%s1117 + $0x74] sm:$0xf]
      %v1148 = vld [vmem:[%s1117 + $0x78] sm:$0xf]
      %v1149 = vld [vmem:[%s1117 + $0x7c] sm:$0xf]
      %v1150 = vld [vmem:[%s1117 + $0x80] sm:$0xf]
      %v1151 = vld [vmem:[%s1117 + $0x84] sm:$0xf]
      %v1152 = vld [vmem:[%s1117 + $0x88] sm:$0xf]
      %v1153 = vld [vmem:[%s1117 + $0x8c] sm:$0xf]
      %v1154 = vld [vmem:[%s1117 + $0x90] sm:$0xf]
      %v1155 = vld [vmem:[%s1117 + $0x94] sm:$0xf]
      %v1156 = vld [vmem:[%s1117 + $0x98] sm:$0xf]
      %v1157 = vld [vmem:[%s1117 + $0x9c] sm:$0xf]
      %v1158 = vld [vmem:[%s1117 + $0xa0] sm:$0xf]
      %v1159 = vld [vmem:[%s1117 + $0xa4] sm:$0xf]
      %v1160 = vld [vmem:[%s1117 + $0xa8] sm:$0xf]
      %v1161 = vld [vmem:[%s1117 + $0xac] sm:$0xf]
      %v1162 = vld [vmem:[%s1117 + $0xb0] sm:$0xf]
      %v1163 = vld [vmem:[%s1117 + $0xb4] sm:$0xf]
      %v1164 = vld [vmem:[%s1117 + $0xb8] sm:$0xf]
      %v1165 = vld [vmem:[%s1117 + $0xbc] sm:$0xf]
      %v1214 = vunpack.c.l.b16 %v1118
      %v1215 = vunpack.c.l.b16 %v1119
      %v1216 = vunpack.c.l.b16 %v1120
      %v1217 = vunpack.c.l.b16 %v1121
      %v1218 = vunpack.c.l.b16 %v1122
      %v1219 = vunpack.c.l.b16 %v1123
      %v1220 = vunpack.c.l.b16 %v1124
      %v1221 = vunpack.c.l.b16 %v1125
      %v1222 = vunpack.c.l.b16 %v1126
      %v1223 = vunpack.c.l.b16 %v1127
      %v1224 = vunpack.c.l.b16 %v1128
      %v1225 = vunpack.c.l.b16 %v1129
      %v1226 = vunpack.c.l.b16 %v1130
      %v1227 = vunpack.c.l.b16 %v1131
      %v1228 = vunpack.c.l.b16 %v1132
      %v1229 = vunpack.c.l.b16 %v1133
      %v1230 = vunpack.c.l.b16 %v1134
      %v1231 = vunpack.c.l.b16 %v1135
      %v1232 = vunpack.c.l.b16 %v1136
      %v1233 = vunpack.c.l.b16 %v1137
      %v1234 = vunpack.c.l.b16 %v1138
      %v1235 = vunpack.c.l.b16 %v1139
      %v1236 = vunpack.c.l.b16 %v1140
      %v1237 = vunpack.c.l.b16 %v1141
      %v1238 = vunpack.c.l.b16 %v1142
      %v1239 = vunpack.c.l.b16 %v1143
      %v1240 = vunpack.c.l.b16 %v1144
      %v1241 = vunpack.c.l.b16 %v1145
      %v1242 = vunpack.c.l.b16 %v1146
      %v1243 = vunpack.c.l.b16 %v1147
      %v1244 = vunpack.c.l.b16 %v1148
      %v1245 = vunpack.c.l.b16 %v1149
      %v1246 = vunpack.c.l.b16 %v1150
      %v1247 = vunpack.c.l.b16 %v1151
      %v1248 = vunpack.c.l.b16 %v1152
      %v1249 = vunpack.c.l.b16 %v1153
      %v1250 = vunpack.c.l.b16 %v1154
      %v1251 = vunpack.c.l.b16 %v1155
      %v1252 = vunpack.c.l.b16 %v1156
      %v1253 = vunpack.c.l.b16 %v1157
      %v1254 = vunpack.c.l.b16 %v1158
      %v1255 = vunpack.c.l.b16 %v1159
      %v1256 = vunpack.c.l.b16 %v1160
      %v1257 = vunpack.c.l.b16 %v1161
      %v1258 = vunpack.c.l.b16 %v1162
      %v1259 = vunpack.c.l.b16 %v1163
      %v1260 = vunpack.c.l.b16 %v1164
      %v1261 = vunpack.c.l.b16 %v1165
      %v1262 = vpack.c.b16 %v1215, %v1214
      %v1263 = vpack.c.b16 %v1217, %v1216
      %v1264 = vpack.c.b16 %v1219, %v1218
      %v1265 = vpack.c.b16 %v1221, %v1220
      %v1266 = vpack.c.b16 %v1223, %v1222
      %v1267 = vpack.c.b16 %v1225, %v1224
      %v1268 = vpack.c.b16 %v1227, %v1226
      %v1269 = vpack.c.b16 %v1229, %v1228
      %v1270 = vpack.c.b16 %v1231, %v1230
      %v1271 = vpack.c.b16 %v1233, %v1232
      %v1272 = vpack.c.b16 %v1235, %v1234
      %v1273 = vpack.c.b16 %v1237, %v1236
      %v1274 = vpack.c.b16 %v1239, %v1238
      %v1275 = vpack.c.b16 %v1241, %v1240
      %v1276 = vpack.c.b16 %v1243, %v1242
      %v1277 = vpack.c.b16 %v1245, %v1244
      %v1278 = vpack.c.b16 %v1247, %v1246
      %v1279 = vpack.c.b16 %v1249, %v1248
      %v1280 = vpack.c.b16 %v1251, %v1250
      %v1281 = vpack.c.b16 %v1253, %v1252
      %v1282 = vpack.c.b16 %v1255, %v1254
      %v1283 = vpack.c.b16 %v1257, %v1256
      %v1284 = vpack.c.b16 %v1259, %v1258
      %v1285 = vpack.c.b16 %v1261, %v1260
      %1310 = vmatprep.subr.bf16.mxu0 0
      %1311 = vmatpush1.bf16.msra.mxu0 %v1269
      %1312 = vmatprep.subr.bf16.mxu0 0
      %1313 = vmatpush1.bf16.msra.mxu0 %v1268
      %1314 = vmatprep.subr.bf16.mxu0 0
      %1315 = vmatpush1.bf16.msra.mxu0 %v1267
      %1316 = vmatprep.subr.bf16.mxu0 0
      %1317 = vmatpush1.bf16.msra.mxu0 %v1266
      %1318 = vmatprep.subr.bf16.mxu0 0
      %1319 = vmatpush1.bf16.msra.mxu0 %v1265
      %1320 = vmatprep.subr.bf16.mxu0 0
      %1321 = vmatpush1.bf16.msra.mxu0 %v1264
      %1322 = vmatprep.subr.bf16.mxu0 0
      %1323 = vmatpush1.bf16.msra.mxu0 %v1263
      %1324 = vmatprep.subr.bf16.mxu0 0
      %1325 = vmatpush1.bf16.msra.mxu0 %v1262
      %1326 = vmatprep.subr.bf16.mxu0 0
      %1327 = vmatpush2.bf16.msra.mxu0 %v1277
      %1328 = vmatprep.subr.bf16.mxu0 0
      %1329 = vmatpush2.bf16.msra.mxu0 %v1276
      %1330 = vmatprep.subr.bf16.mxu0 0
      %1331 = vmatpush2.bf16.msra.mxu0 %v1275
      %1332 = vmatprep.subr.bf16.mxu0 0
      %1333 = vmatpush2.bf16.msra.mxu0 %v1274
      %1334 = vmatprep.subr.bf16.mxu0 0
      %1335 = vmatpush2.bf16.msra.mxu0 %v1273
      %1336 = vmatprep.subr.bf16.mxu0 0
      %1337 = vmatpush2.bf16.msra.mxu0 %v1272
      %1338 = vmatprep.subr.bf16.mxu0 0
      %1339 = vmatpush2.bf16.msra.mxu0 %v1271
      %1340 = vmatprep.subr.bf16.mxu0 0
      %1341 = vmatpush2.bf16.msra.mxu0 %v1270
      %1342 = vmatprep.mubr.bf16.mxu0 %v407
      %1343 = vmatmul.mubr.bf16.gmra.mxu0 %v406
      %v1344 = vpop.f32.mrf.mxu0
      %v1345 = vadd.f32 0.0, %v1344
      %v1346 = vpop.f32.mrf.mxu0
      %v1347 = vpop.f32.mrf.mxu0
      %v1348 = vadd.f32 0.0, %v1347
      %v1349 = vpop.f32.mrf.mxu0
      %1350 = vmatprep.mubr.bf16.mxu0 %v410
      %1351 = vmatmul.mubr.bf16.gmra.mxu0 %v409
      %v1352 = vpop.f32.mrf.mxu0
      %v1353 = vadd.f32 0.0, %v1352
      %v1354 = vpop.f32.mrf.mxu0
      %v1355 = vpop.f32.mrf.mxu0
      %v1356 = vadd.f32 0.0, %v1355
      %v1357 = vpop.f32.mrf.mxu0
      %1358 = vmatprep.mubr.bf16.mxu0 %v413
      %1359 = vmatmul.mubr.bf16.gmra.mxu0 %v412
      %v1360 = vpop.f32.mrf.mxu0
      %v1361 = vadd.f32 0.0, %v1360
      %v1362 = vpop.f32.mrf.mxu0
      %v1363 = vpop.f32.mrf.mxu0
      %v1364 = vadd.f32 0.0, %v1363
      %v1365 = vpop.f32.mrf.mxu0
      %1366 = vmatprep.mubr.bf16.mxu0 %v1115
      %1367 = vmatmul.mubr.bf16.gmra.mxu0 %v1114
      %v1368 = vpop.f32.mrf.mxu0
      %v1369 = vadd.f32 0.0, %v1368
      %v1370 = vpop.f32.mrf.mxu0
      %v1371 = vpop.f32.mrf.mxu0
      %v1372 = vadd.f32 0.0, %v1371
      %v1373 = vpop.f32.mrf.mxu0
      %1374 = vdwg.mxu0
      %1375 = vmatprep.subr.bf16.mxu0 0
      %1376 = vmatpush1.bf16.msra.mxu0 %v1285
      %1377 = vmatprep.subr.bf16.mxu0 0
      %1378 = vmatpush1.bf16.msra.mxu0 %v1284
      %1379 = vmatprep.subr.bf16.mxu0 0
      %1380 = vmatpush1.bf16.msra.mxu0 %v1283
      %1381 = vmatprep.subr.bf16.mxu0 0
      %1382 = vmatpush1.bf16.msra.mxu0 %v1282
      %1383 = vmatprep.subr.bf16.mxu0 0
      %1384 = vmatpush1.bf16.msra.mxu0 %v1281
      %1385 = vmatprep.subr.bf16.mxu0 0
      %1386 = vmatpush1.bf16.msra.mxu0 %v1280
      %1387 = vmatprep.subr.bf16.mxu0 0
      %1388 = vmatpush1.bf16.msra.mxu0 %v1279
      %1389 = vmatprep.subr.bf16.mxu0 0
      %1390 = vmatpush1.bf16.msra.mxu0 %v1278
      %1391 = vmatprep.subr.bf16.mxu0 0
      %1392 = vmatpush2.bf16.msra.mxu0 0
      %1393 = vmatprep.subr.bf16.mxu0 0
      %1394 = vmatpush2.bf16.msra.mxu0 0
      %1395 = vmatprep.subr.bf16.mxu0 0
      %1396 = vmatpush2.bf16.msra.mxu0 0
      %1397 = vmatprep.subr.bf16.mxu0 0
      %1398 = vmatpush2.bf16.msra.mxu0 0
      %1399 = vmatprep.subr.bf16.mxu0 0
      %1400 = vmatpush2.bf16.msra.mxu0 0
      %1401 = vmatprep.subr.bf16.mxu0 0
      %1402 = vmatpush2.bf16.msra.mxu0 0
      %1403 = vmatprep.subr.bf16.mxu0 0
      %1404 = vmatpush2.bf16.msra.mxu0 0
      %1405 = vmatprep.subr.bf16.mxu0 0
      %1406 = vmatpush2.bf16.msra.mxu0 0
      %1407 = vmatprep.mubr.bf16.mxu0 0
      %1408 = vmatmul.mubr.bf16.gmra.mxu0 %v408
      %v1409 = vpop.f32.mrf.mxu0
      %v1410 = vadd.f32 %v1345, %v1409
      %v1411 = vpop.f32.mrf.mxu0
      %v1412 = vpop.f32.mrf.mxu0
      %v1413 = vadd.f32 %v1348, %v1412
      %v1414 = vpop.f32.mrf.mxu0
      %1415 = vmatprep.mubr.bf16.mxu0 0
      %1416 = vmatmul.mubr.bf16.gmra.mxu0 %v411
      %v1417 = vpop.f32.mrf.mxu0
      %v1418 = vadd.f32 %v1353, %v1417
      %v1419 = vpop.f32.mrf.mxu0
      %v1420 = vpop.f32.mrf.mxu0
      %v1421 = vadd.f32 %v1356, %v1420
      %v1422 = vpop.f32.mrf.mxu0
      %1423 = vmatprep.mubr.bf16.mxu0 0
      %1424 = vmatmul.mubr.bf16.gmra.mxu0 %v414
      %v1425 = vpop.f32.mrf.mxu0
      %v1426 = vadd.f32 %v1361, %v1425
      %v1427 = vpop.f32.mrf.mxu0
      %v1428 = vpop.f32.mrf.mxu0
      %v1429 = vadd.f32 %v1364, %v1428
      %v1430 = vpop.f32.mrf.mxu0
      %1431 = vmatprep.mubr.bf16.mxu0 0
      %1432 = vmatmul.mubr.bf16.gmra.mxu0 %v1116
      %v1433 = vpop.f32.mrf.mxu0
      %v1434 = vadd.f32 %v1369, %v1433
      %v1435 = vpop.f32.mrf.mxu0
      %v1436 = vpop.f32.mrf.mxu0
      %v1437 = vadd.f32 %v1372, %v1436
      %v1438 = vpop.f32.mrf.mxu0
      %1439 = vdwg.mxu0
      %v1440 = vld [vmem:[#allocation2] sm:$0xff]
      %v1441 = vld [vmem:[#allocation2 + $0x8] sm:$0xff]
      %v1442 = vld [vmem:[#allocation2 + $0x10] sm:$0xff]
      %v1443 = vld [vmem:[#allocation2 + $0x18] sm:$0xff]
      %v1444 = vld [vmem:[#allocation2 + $0x20] sm:$0xff]
      %v1445 = vld [vmem:[#allocation2 + $0x28] sm:$0xff]
      %v1446 = vld [vmem:[#allocation2 + $0x30] sm:$0xff]
      %v1447 = vld [vmem:[#allocation2 + $0x38] sm:$0xff]
      %v1448 = vadd.f32 %v1440, %v1410
      %v1449 = vadd.f32 %v1441, %v1413
      %v1450 = vadd.f32 %v1442, %v1418
      %v1451 = vadd.f32 %v1443, %v1421
      %v1452 = vadd.f32 %v1444, %v1426
      %v1453 = vadd.f32 %v1445, %v1429
      %v1454 = vadd.f32 %v1446, %v1434
      %v1455 = vadd.f32 %v1447, %v1437
      %1456 = vst [vmem:[#allocation2] sm:$0xff] %v1448
      %1457 = vst [vmem:[#allocation2 + $0x8] sm:$0xff] %v1449
      %1458 = vst [vmem:[#allocation2 + $0x10] sm:$0xff] %v1450
      %1459 = vst [vmem:[#allocation2 + $0x18] sm:$0xff] %v1451
      %1460 = vst [vmem:[#allocation2 + $0x20] sm:$0xff] %v1452
      %1461 = vst [vmem:[#allocation2 + $0x28] sm:$0xff] %v1453
      %1462 = vst [vmem:[#allocation2 + $0x30] sm:$0xff] %v1454
      %1463 = vst [vmem:[#allocation2 + $0x38] sm:$0xff] %v1455
      %v1464 = vld [vmem:[#allocation2] sm:$0xff]
      %v1465 = vld [vmem:[#allocation2 + $0x8] sm:$0xff]
      %v1466 = vld [vmem:[#allocation2 + $0x10] sm:$0xff]
      %v1467 = vld [vmem:[#allocation2 + $0x18] sm:$0xff]
      %v1468 = vld [vmem:[#allocation2 + $0x20] sm:$0xff]
      %v1469 = vld [vmem:[#allocation2 + $0x28] sm:$0xff]
      %v1470 = vld [vmem:[#allocation2 + $0x30] sm:$0xff]
      %v1471 = vld [vmem:[#allocation2 + $0x38] sm:$0xff]
      %v1472 = vadd.f32 %v1464, %v1465
      %v1473 = vadd.f32 %v1472, %v1466
      %v1474 = vadd.f32 %v1473, %v1467
      %v1475 = vadd.f32 %v1474, %v1468
      %v1476 = vadd.f32 %v1475, %v1469
      %v1477 = vadd.f32 %v1476, %v1470
      %v1478 = vadd.f32 %v1477, %v1471
      %v1479 = vrot.slane %v1478, 4
      %v1480 = vadd.f32 %v1478, %v1479
      %v1481 = vrot.slane %v1480, 2
      %v1482 = vadd.f32 %v1480, %v1481
      %v1483 = vrot.slane %v1482, 1
      %v1484 = vadd.f32 %v1482, %v1483
      %v1485 = vmul.f32 %v1464, %v1464
      %v1486 = vmul.f32 %v1465, %v1465
      %v1487 = vmul.f32 %v1466, %v1466
      %v1488 = vmul.f32 %v1467, %v1467
      %v1489 = vmul.f32 %v1468, %v1468
      %v1490 = vmul.f32 %v1469, %v1469
      %v1491 = vmul.f32 %v1470, %v1470
      %v1492 = vmul.f32 %v1471, %v1471
      %v1493 = vadd.f32 %v1485, %v1486
      %v1494 = vadd.f32 %v1493, %v1487
      %v1495 = vadd.f32 %v1494, %v1488
      %v1496 = vadd.f32 %v1495, %v1489
      %v1497 = vadd.f32 %v1496, %v1490
      %v1498 = vadd.f32 %v1497, %v1491
      %v1499 = vadd.f32 %v1498, %v1492
      %v1500 = vrot.slane %v1499, 4
      %v1501 = vadd.f32 %v1499, %v1500
      %v1502 = vrot.slane %v1501, 2
      %v1503 = vadd.f32 %v1501, %v1502
      %v1504 = vrot.slane %v1503, 1
      %v1505 = vadd.f32 %v1503, %v1504
      %v1506 = vsel %vm307, %v1484, %v1505
      %1507 = vst [vmem:[%s235] sm:$0x3] %v1506
      %1508 = vst [vmem:[%s231] sm:$0xff] %v1464
      %1509 = vst [vmem:[%s231 + $0x8] sm:$0xff] %v1465
      %1510 = vst [vmem:[%s231 + $0x10] sm:$0xff] %v1466
      %1511 = vst [vmem:[%s231 + $0x18] sm:$0xff] %v1467
      %1512 = vst [vmem:[%s231 + $0x20] sm:$0xff] %v1468
      %1513 = vst [vmem:[%s231 + $0x28] sm:$0xff] %v1469
      %1514 = vst [vmem:[%s231 + $0x30] sm:$0xff] %v1470
      %1515 = vst [vmem:[%s231 + $0x38] sm:$0xff] %v1471
      %p1516 = scmp.lt.s32.totalorder %s17, 1
      %s1517 = scalar_select %p1516, %s17, 1
      %s1518 = smul.addr %s1517, 8
      %s1519 = smul.addr %s1518, 8
      %s1520 = scalar_lea.vmem %s4, %s1519
      %p1521 = scmp.lt.s32.totalorder %s17, 1
      %s1522 = scalar_select %p1521, %s17, 1
      %s1523 = smul.addr %s1522, 2
      %s1524 = scalar_lea.vmem %s5, %s1523
      // Predicated region
      $region37: #{down_forward_nhwc.4} parent=35 // pred_check
        %p1525 = pneg %p124
      $region38: #{down_forward_nhwc.4} parent=35 // pred_check_branch
        %1527 = sbr.rel (%p1525) target = $region40
      $region39: #{down_forward_nhwc.4} parent=35 // pred_region
        _
      $region40: #{down_forward_nhwc.4} parent=35 // pred_fallthru
        _
      // Predicated region
      $region41: #{down_forward_nhwc.4} parent=35 // pred_check
        %p1528 = pneg %p150
      $region42: #{down_forward_nhwc.4} parent=35 // pred_check_branch
        %1530 = sbr.rel (%p1528) target = $region44
      $region43: #{down_forward_nhwc.4} parent=35 // pred_region
        _
      $region44: #{down_forward_nhwc.4} parent=35 // pred_fallthru
        _
    $region36: #{down_forward_nhwc.4} parent=5 // pred_fallthru
      _
    %p1531 = scmp.le.s32.totalorder 2, %s12
    // Predicated region
    $region45: #{down_forward_nhwc.4} parent=5 // pred_check
      %p1532 = pneg %p1531
    $region46: #{down_forward_nhwc.4} parent=5 // pred_check_branch
      %1534 = sbr.rel (%p1532) target = $region48
    $region47: #{down_forward_nhwc.4} parent=5 // pred_region
      %s1535 = ssub.s32 %s12, 2
      // Predicated region
      $region49: #{down_forward_nhwc.4} parent=47 // pred_check
        %p1536 = pneg %p130
      $region50: #{down_forward_nhwc.4} parent=47 // pred_check_branch
        %1538 = sbr.rel (%p1536) target = $region52
      $region51: #{down_forward_nhwc.4} parent=47 // pred_region
        %p1539 = scmp.lt.s32.totalorder %s18, 1
        %s1540 = scalar_select %p1539, %s18, 1
        %s1541 = smul.addr %s1540, 8
        %s1542 = smul.addr %s1541, 8
        %s1543 = scalar_lea.vmem %s4, %s1542
      $region52: #{down_forward_nhwc.4} parent=47 // pred_fallthru
        _
      // Predicated region
      $region53: #{down_forward_nhwc.4} parent=47 // pred_check
        %p1544 = pneg %p156
      $region54: #{down_forward_nhwc.4} parent=47 // pred_check_branch
        %1546 = sbr.rel (%p1544) target = $region56
      $region55: #{down_forward_nhwc.4} parent=47 // pred_region
        %p1547 = scmp.lt.s32.totalorder %s18, 1
        %s1548 = scalar_select %p1547, %s18, 1
        %s1549 = smul.addr %s1548, 2
        %s1550 = scalar_lea.vmem %s5, %s1549
      $region56: #{down_forward_nhwc.4} parent=47 // pred_fallthru
        _
    $region48: #{down_forward_nhwc.4} parent=5 // pred_fallthru
      _
  $region6: #{down_forward_nhwc.4} parent=0 // loop_footer
    %s16 = sadd.s32 1, %s12
  $region7: #{down_forward_nhwc.4} parent=0 // loop_footer_branch
    %11 = sbr.rel target = $region3
  $region8: #{down_forward_nhwc.4} parent=0 // loop_exit
    _

// kernel: down_forward_nhwc.3
$region0: #{down_forward_nhwc.3}
  #allocation0 [shape = 'u32[]', space=smem, size = 0x4, offset = 0x4, fixed_abs, tag = 'smem constant byte address 0x4 - core index']
  #allocation1 [shape = 'u32[144,128]{1,0:T(1,128)}', space=vmem, size = 0x12000, scoped, tag = 'internal scratch']
  #allocation2 [shape = 'f32[64,128]{1,0:T(8,128)}', space=vmem, size = 0x8000, scoped, tag = 'scratch operand']
  %s0 = inlined_call_operand.vmem [shape: f32[2,8,2,8,2,4], index: 0, kind: input, shape index: {}]
  %s1 = inlined_call_operand.vmem [shape: bf16[3,12,128], index: 1, kind: input, shape index: {}]
  %s2 = inlined_call_operand.vmem [shape: f32[2,8,8,128], index: 2, kind: output, shape index: {0}]
  %s3 = inlined_call_operand.vmem [shape: f32[2,2,128], index: 3, kind: output, shape index: {1}]
  %4 = xla_tuple %s2, %s3
  %s5 = sld [smem:[#allocation0]]
  $region49: #{down_forward_nhwc.3} parent=0
    _
  %s7 = ssub.s32 1, %s5
  %s8 = scalar_select 0, %s7, %s5
  loop: start=0, step=1, limit=4
  $region2: #{down_forward_nhwc.3} parent=0 // loop_pre_header
    _
  $region3: #{down_forward_nhwc.3} parent=0 // loop_header
    %s10 = sphi 0, %s14
    %p11 = scmp.ge.s32.totalorder %s10, 4
    %s20 = sphi 0, %s22
    %s23 = sphi 0, %s20
    %s24 = sphi 0, %s23
    %s40 = sphi 0, %s24
    %s44 = sphi 0, %s44
    %s46 = sphi 0, %s44
    %s47 = sphi 0, %s46
    %s61 = sphi 0, %s47
    %s67 = sphi 0, %s69
    %s70 = sphi 0, %s67
    %s71 = sphi 0, %s70
    %s87 = sphi 0, %s71
    %s93 = sphi 0, %s95
    %s96 = sphi 0, %s93
    %s97 = sphi 0, %s96
    %s113 = sphi 0, %s97
  $region4: #{down_forward_nhwc.3} parent=0 // loop_header_branch
    %13 = sbr.rel (%p11) target = $region8
  $region5: #{down_forward_nhwc.3} parent=0 // loop_body
    %s15 = ssub.s32 %s10, 1
    %s16 = ssub.s32 %s10, 2
    %s17 = sadd.s32 %s10, 1
    %s18 = ssub.s32 %s10, %s17
    %p19 = scmp.eq.s32.totalorder %s18, 0
    %s21 = sadd.s32 %s20, 1
    %s22 = scalar_select %p19, %s20, %s21
    %p25 = pneg %p19
    %p26 = scmp.eq.s32.totalorder %s10, 1
    %p27 = por %p25, %p26
    %p28 = scmp.ne.s32.totalorder %s20, %s23
    %p29 = scmp.eq.s32.totalorder %s10, 0
    %p30 = por %p28, %p29
    %p31 = scmp.ne.s32.totalorder %s20, %s23
    %p32 = scmp.eq.s32.totalorder %s15, 1
    %p33 = por %p31, %p32
    %p34 = scmp.ne.s32.totalorder %s23, %s24
    %p35 = scmp.eq.s32.totalorder %s15, 0
    %p36 = por %p34, %p35
    %p37 = scmp.ne.s32.totalorder %s23, %s24
    %p38 = scmp.eq.s32.totalorder %s16, 1
    %p39 = por %p37, %p38
    %p41 = scmp.ne.s32.totalorder %s24, %s40
    %p42 = scmp.eq.s32.totalorder %s16, 0
    %p43 = por %p41, %p42
    %s45 = sadd.s32 %s44, 1
    %p48 = scmp.eq.s32.totalorder %s10, 1
    %p49 = scmp.ne.s32.totalorder %s44, %s46
    %p50 = scmp.eq.s32.totalorder %s10, 0
    %p51 = por %p49, %p50
    %p52 = scmp.ne.s32.totalorder %s44, %s46
    %p53 = scmp.eq.s32.totalorder %s15, 1
    %p54 = por %p52, %p53
    %p55 = scmp.ne.s32.totalorder %s46, %s47
    %p56 = scmp.eq.s32.totalorder %s15, 0
    %p57 = por %p55, %p56
    %p58 = scmp.ne.s32.totalorder %s46, %s47
    %p59 = scmp.eq.s32.totalorder %s16, 1
    %p60 = por %p58, %p59
    %p62 = scmp.ne.s32.totalorder %s47, %s61
    %p63 = scmp.eq.s32.totalorder %s16, 0
    %p64 = por %p62, %p63
    %s65 = ssub.s32 %s10, %s17
    %p66 = scmp.eq.s32.totalorder %s65, 0
    %s68 = sadd.s32 %s67, 1
    %s69 = scalar_select %p66, %s67, %s68
    %p72 = pneg %p66
    %p73 = scmp.eq.s32.totalorder %s10, 1
    %p74 = por %p72, %p73
    %p75 = scmp.ne.s32.totalorder %s67, %s70
    %p76 = scmp.eq.s32.totalorder %s10, 0
    %p77 = por %p75, %p76
    %p78 = scmp.ne.s32.totalorder %s67, %s70
    %p79 = scmp.eq.s32.totalorder %s15, 1
    %p80 = por %p78, %p79
    %p81 = scmp.ne.s32.totalorder %s70, %s71
    %p82 = scmp.eq.s32.totalorder %s15, 0
    %p83 = por %p81, %p82
    %p84 = scmp.ne.s32.totalorder %s70, %s71
    %p85 = scmp.eq.s32.totalorder %s16, 1
    %p86 = por %p84, %p85
    %p88 = scmp.ne.s32.totalorder %s71, %s87
    %p89 = scmp.eq.s32.totalorder %s16, 0
    %p90 = por %p88, %p89
    %s91 = ssub.s32 %s10, %s17
    %p92 = scmp.eq.s32.totalorder %s91, 0
    %s94 = sadd.s32 %s93, 1
    %s95 = scalar_select %p92, %s93, %s94
    %p98 = pneg %p92
    %p99 = scmp.eq.s32.totalorder %s10, 1
    %p100 = por %p98, %p99
    %p101 = scmp.ne.s32.totalorder %s93, %s96
    %p102 = scmp.eq.s32.totalorder %s10, 0
    %p103 = por %p101, %p102
    %p104 = scmp.ne.s32.totalorder %s93, %s96
    %p105 = scmp.eq.s32.totalorder %s15, 1
    %p106 = por %p104, %p105
    %p107 = scmp.ne.s32.totalorder %s96, %s97
    %p108 = scmp.eq.s32.totalorder %s15, 0
    %p109 = por %p107, %p108
    %p110 = scmp.ne.s32.totalorder %s96, %s97
    %p111 = scmp.eq.s32.totalorder %s16, 1
    %p112 = por %p110, %p111
    %p114 = scmp.ne.s32.totalorder %s97, %s113
    %p115 = scmp.eq.s32.totalorder %s16, 0
    %p116 = por %p114, %p115
    %p117 = scmp.le.s32.totalorder 1, %s10
    %p118 = scmp.lt.s32.totalorder %s10, 3
    %p119 = pnand %p117, %p118
    %p120 = pneg %p119
    // Predicated region
    $region9: #{down_forward_nhwc.3} parent=5 // pred_check
      _
    $region10: #{down_forward_nhwc.3} parent=5 // pred_check_branch
      %122 = sbr.rel (%p119) target = $region12
    $region11: #{down_forward_nhwc.3} parent=5 // pred_region
      %s123 = ssub.s32 %s10, 1
      // Predicated region
      $region13: #{down_forward_nhwc.3} parent=11 // pred_check
        %p124 = pneg %p57
      $region14: #{down_forward_nhwc.3} parent=11 // pred_check_branch
        %126 = sbr.rel (%p124) target = $region16
      $region15: #{down_forward_nhwc.3} parent=11 // pred_region
        _
      $region16: #{down_forward_nhwc.3} parent=11 // pred_fallthru
        _
    $region12: #{down_forward_nhwc.3} parent=5 // pred_fallthru
      _
    %p127 = scmp.lt.s32.totalorder %s10, 2
    // Predicated region
    $region17: #{down_forward_nhwc.3} parent=5 // pred_check
      %p128 = pneg %p127
    $region18: #{down_forward_nhwc.3} parent=5 // pred_check_branch
      %130 = sbr.rel (%p128) target = $region20
    $region19: #{down_forward_nhwc.3} parent=5 // pred_region
      // Predicated region
      $region21: #{down_forward_nhwc.3} parent=19 // pred_check
        %p131 = pneg %p30
      $region22: #{down_forward_nhwc.3} parent=19 // pred_check_branch
        %133 = sbr.rel (%p131) target = $region24
      $region23: #{down_forward_nhwc.3} parent=19 // pred_region
        %p134 = scmp.lt.s32.totalorder %s10, 1
        %s135 = scalar_select %p134, %s10, 1
        %s136 = smul.addr %s135, 128
        %s137 = smul.addr %s136, 2
        %s138 = scalar_lea.vmem %s0, %s137
      $region24: #{down_forward_nhwc.3} parent=19 // pred_fallthru
        _
    $region20: #{down_forward_nhwc.3} parent=5 // pred_fallthru
      _
    %p139 = scmp.le.s32.totalorder 1, %s10
    %p140 = scmp.lt.s32.totalorder %s10, 3
    %p141 = pnand %p139, %p140
    %p142 = pneg %p141
    // Predicated region
    $region25: #{down_forward_nhwc.3} parent=5 // pred_check
      _
    $region26: #{down_forward_nhwc.3} parent=5 // pred_check_branch
      %144 = sbr.rel (%p141) target = $region28
    $region27: #{down_forward_nhwc.3} parent=5 // pred_region
      %s145 = ssub.s32 %s10, 1
      %p146 = scmp.lt.s32.totalorder %s15, 1
      %s147 = scalar_select %p146, %s15, 1
      %s148 = smul.addr %s147, 128
      %s149 = smul.addr %s148, 2
      %s150 = scalar_lea.vmem %s0, %s149
      %p151 = pneg %p36
      %p152 = pneg %p33
      %p153 = pneg %p57
      %p154 = pneg %p54
      %p155 = pneg %p83
      %p156 = pneg %p80
      %p157 = scmp.lt.s32.totalorder %s15, 1
      %s158 = scalar_select %p157, %s15, 1
      %s159 = smul.addr %s158, 8
      %s160 = smul.addr %s159, 8
      %s161 = scalar_lea.vmem %s2, %s160
      %p162 = pneg %p109
      %p163 = pneg %p106
      %p164 = scmp.lt.s32.totalorder %s15, 1
      %s165 = scalar_select %p164, %s15, 1
      %s166 = smul.addr %s165, 2
      %s167 = scalar_lea.vmem %s3, %s166
      %p168 = scmp.lt.s32.totalorder %s15, 1
      %s169 = scalar_select %p168, %s15, 1
      %s170 = smul.addr %s169, 128
      %s171 = smul.addr %s170, 2
      %s172 = scalar_lea.vmem %s0, %s171
      %p173 = scmp.lt.s32.totalorder %s15, 1
      %s174 = scalar_select %p173, %s15, 1
      %s175 = smul.addr %s174, 8
      %s176 = smul.addr %s175, 8
      %s177 = scalar_lea.vmem %s2, %s176
      %p178 = scmp.lt.s32.totalorder %s15, 1
      %s179 = scalar_select %p178, %s15, 1
      %s180 = smul.addr %s179, 2
      %s181 = scalar_lea.vmem %s3, %s180
      %v183 = vld [vmem:[%s172] sm:$0x3]
      %v184 = vld [vmem:[%s172 + $0x2] sm:$0x3]
      %v185 = vld [vmem:[%s172 + $0x4] sm:$0x3]
      %v186 = vld [vmem:[%s172 + $0x6] sm:$0x3]
      %v187 = vld [vmem:[%s172 + $0x8] sm:$0x3]
      %v188 = vld [vmem:[%s172 + $0xa] sm:$0x3]
      %v189 = vld [vmem:[%s172 + $0xc] sm:$0x3]
      %v190 = vld [vmem:[%s172 + $0xe] sm:$0x3]
      %v191 = vld [vmem:[%s172 + $0x10] sm:$0x3]
      %v192 = vld [vmem:[%s172 + $0x12] sm:$0x3]
      %v193 = vld [vmem:[%s172 + $0x14] sm:$0x3]
      %v194 = vld [vmem:[%s172 + $0x16] sm:$0x3]
      %v195 = vld [vmem:[%s172 + $0x18] sm:$0x3]
      %v196 = vld [vmem:[%s172 + $0x1a] sm:$0x3]
      %v197 = vld [vmem:[%s172 + $0x1c] sm:$0x3]
      %v198 = vld [vmem:[%s172 + $0x1e] sm:$0x3]
      %v199 = vld [vmem:[%s172 + $0x20] sm:$0x3]
      %v200 = vld [vmem:[%s172 + $0x22] sm:$0x3]
      %v201 = vld [vmem:[%s172 + $0x24] sm:$0x3]
      %v202 = vld [vmem:[%s172 + $0x26] sm:$0x3]
      %v203 = vld [vmem:[%s172 + $0x28] sm:$0x3]
      %v204 = vld [vmem:[%s172 + $0x2a] sm:$0x3]
      %v205 = vld [vmem:[%s172 + $0x2c] sm:$0x3]
      %v206 = vld [vmem:[%s172 + $0x2e] sm:$0x3]
      %v207 = vld [vmem:[%s172 + $0x30] sm:$0x3]
      %v208 = vld [vmem:[%s172 + $0x32] sm:$0x3]
      %v209 = vld [vmem:[%s172 + $0x34] sm:$0x3]
      %v210 = vld [vmem:[%s172 + $0x36] sm:$0x3]
      %v211 = vld [vmem:[%s172 + $0x38] sm:$0x3]
      %v212 = vld [vmem:[%s172 + $0x3a] sm:$0x3]
      %v213 = vld [vmem:[%s172 + $0x3c] sm:$0x3]
      %v214 = vld [vmem:[%s172 + $0x3e] sm:$0x3]
      %v215 = vld [vmem:[%s172 + $0x40] sm:$0x3]
      %v216 = vld [vmem:[%s172 + $0x42] sm:$0x3]
      %v217 = vld [vmem:[%s172 + $0x44] sm:$0x3]
      %v218 = vld [vmem:[%s172 + $0x46] sm:$0x3]
      %v219 = vld [vmem:[%s172 + $0x48] sm:$0x3]
      %v220 = vld [vmem:[%s172 + $0x4a] sm:$0x3]
      %v221 = vld [vmem:[%s172 + $0x4c] sm:$0x3]
      %v222 = vld [vmem:[%s172 + $0x4e] sm:$0x3]
      %v223 = vld [vmem:[%s172 + $0x50] sm:$0x3]
      %v224 = vld [vmem:[%s172 + $0x52] sm:$0x3]
      %v225 = vld [vmem:[%s172 + $0x54] sm:$0x3]
      %v226 = vld [vmem:[%s172 + $0x56] sm:$0x3]
      %v227 = vld [vmem:[%s172 + $0x58] sm:$0x3]
      %v228 = vld [vmem:[%s172 + $0x5a] sm:$0x3]
      %v229 = vld [vmem:[%s172 + $0x5c] sm:$0x3]
      %v230 = vld [vmem:[%s172 + $0x5e] sm:$0x3]
      %v231 = vld [vmem:[%s172 + $0x60] sm:$0x3]
      %v232 = vld [vmem:[%s172 + $0x62] sm:$0x3]
      %v233 = vld [vmem:[%s172 + $0x64] sm:$0x3]
      %v234 = vld [vmem:[%s172 + $0x66] sm:$0x3]
      %v235 = vld [vmem:[%s172 + $0x68] sm:$0x3]
      %v236 = vld [vmem:[%s172 + $0x6a] sm:$0x3]
      %v237 = vld [vmem:[%s172 + $0x6c] sm:$0x3]
      %v238 = vld [vmem:[%s172 + $0x6e] sm:$0x3]
      %v239 = vld [vmem:[%s172 + $0x70] sm:$0x3]
      %v240 = vld [vmem:[%s172 + $0x72] sm:$0x3]
      %v241 = vld [vmem:[%s172 + $0x74] sm:$0x3]
      %v242 = vld [vmem:[%s172 + $0x76] sm:$0x3]
      %v243 = vld [vmem:[%s172 + $0x78] sm:$0x3]
      %v244 = vld [vmem:[%s172 + $0x7a] sm:$0x3]
      %v245 = vld [vmem:[%s172 + $0x7c] sm:$0x3]
      %v246 = vld [vmem:[%s172 + $0x7e] sm:$0x3]
      %v247 = vld [vmem:[%s172 + $0x80] sm:$0x3]
      %v248 = vld [vmem:[%s172 + $0x82] sm:$0x3]
      %v249 = vld [vmem:[%s172 + $0x84] sm:$0x3]
      %v250 = vld [vmem:[%s172 + $0x86] sm:$0x3]
      %v251 = vld [vmem:[%s172 + $0x88] sm:$0x3]
      %v252 = vld [vmem:[%s172 + $0x8a] sm:$0x3]
      %v253 = vld [vmem:[%s172 + $0x8c] sm:$0x3]
      %v254 = vld [vmem:[%s172 + $0x8e] sm:$0x3]
      %v255 = vld [vmem:[%s172 + $0x90] sm:$0x3]
      %v256 = vld [vmem:[%s172 + $0x92] sm:$0x3]
      %v257 = vld [vmem:[%s172 + $0x94] sm:$0x3]
      %v258 = vld [vmem:[%s172 + $0x96] sm:$0x3]
      %v259 = vld [vmem:[%s172 + $0x98] sm:$0x3]
      %v260 = vld [vmem:[%s172 + $0x9a] sm:$0x3]
      %v261 = vld [vmem:[%s172 + $0x9c] sm:$0x3]
      %v262 = vld [vmem:[%s172 + $0x9e] sm:$0x3]
      %v263 = vld [vmem:[%s172 + $0xa0] sm:$0x3]
      %v264 = vld [vmem:[%s172 + $0xa2] sm:$0x3]
      %v265 = vld [vmem:[%s172 + $0xa4] sm:$0x3]
      %v266 = vld [vmem:[%s172 + $0xa6] sm:$0x3]
      %v267 = vld [vmem:[%s172 + $0xa8] sm:$0x3]
      %v268 = vld [vmem:[%s172 + $0xaa] sm:$0x3]
      %v269 = vld [vmem:[%s172 + $0xac] sm:$0x3]
      %v270 = vld [vmem:[%s172 + $0xae] sm:$0x3]
      %v271 = vld [vmem:[%s172 + $0xb0] sm:$0x3]
      %v272 = vld [vmem:[%s172 + $0xb2] sm:$0x3]
      %v273 = vld [vmem:[%s172 + $0xb4] sm:$0x3]
      %v274 = vld [vmem:[%s172 + $0xb6] sm:$0x3]
      %v275 = vld [vmem:[%s172 + $0xb8] sm:$0x3]
      %v276 = vld [vmem:[%s172 + $0xba] sm:$0x3]
      %v277 = vld [vmem:[%s172 + $0xbc] sm:$0x3]
      %v278 = vld [vmem:[%s172 + $0xbe] sm:$0x3]
      %v279 = vld [vmem:[%s172 + $0xc0] sm:$0x3]
      %v280 = vld [vmem:[%s172 + $0xc2] sm:$0x3]
      %v281 = vld [vmem:[%s172 + $0xc4] sm:$0x3]
      %v282 = vld [vmem:[%s172 + $0xc6] sm:$0x3]
      %v283 = vld [vmem:[%s172 + $0xc8] sm:$0x3]
      %v284 = vld [vmem:[%s172 + $0xca] sm:$0x3]
      %v285 = vld [vmem:[%s172 + $0xcc] sm:$0x3]
      %v286 = vld [vmem:[%s172 + $0xce] sm:$0x3]
      %v287 = vld [vmem:[%s172 + $0xd0] sm:$0x3]
      %v288 = vld [vmem:[%s172 + $0xd2] sm:$0x3]
      %v289 = vld [vmem:[%s172 + $0xd4] sm:$0x3]
      %v290 = vld [vmem:[%s172 + $0xd6] sm:$0x3]
      %v291 = vld [vmem:[%s172 + $0xd8] sm:$0x3]
      %v292 = vld [vmem:[%s172 + $0xda] sm:$0x3]
      %v293 = vld [vmem:[%s172 + $0xdc] sm:$0x3]
      %v294 = vld [vmem:[%s172 + $0xde] sm:$0x3]
      %v295 = vld [vmem:[%s172 + $0xe0] sm:$0x3]
      %v296 = vld [vmem:[%s172 + $0xe2] sm:$0x3]
      %v297 = vld [vmem:[%s172 + $0xe4] sm:$0x3]
      %v298 = vld [vmem:[%s172 + $0xe6] sm:$0x3]
      %v299 = vld [vmem:[%s172 + $0xe8] sm:$0x3]
      %v300 = vld [vmem:[%s172 + $0xea] sm:$0x3]
      %v301 = vld [vmem:[%s172 + $0xec] sm:$0x3]
      %v302 = vld [vmem:[%s172 + $0xee] sm:$0x3]
      %v303 = vld [vmem:[%s172 + $0xf0] sm:$0x3]
      %v304 = vld [vmem:[%s172 + $0xf2] sm:$0x3]
      %v305 = vld [vmem:[%s172 + $0xf4] sm:$0x3]
      %v306 = vld [vmem:[%s172 + $0xf6] sm:$0x3]
      %v307 = vld [vmem:[%s172 + $0xf8] sm:$0x3]
      %v308 = vld [vmem:[%s172 + $0xfa] sm:$0x3]
      %v309 = vld [vmem:[%s172 + $0xfc] sm:$0x3]
      %v310 = vld [vmem:[%s172 + $0xfe] sm:$0x3]
      %vm311 = vcmask 25600
      %v312 = vsel %vm311, %v183, -inf
      %v313 = vrot.slane %v312, 4
      %v314 = vmax.f32 %v312, %v313
      %v315 = vrot.slane %v314, 2
      %v316 = vmax.f32 %v314, %v315
      %v317 = vrot.slane %v316, 1
      %v318 = vmax.f32 %v316, %v317
      %v319 = vsel %vm311, %v184, -inf
      %v320 = vrot.slane %v319, 4
      %v321 = vmax.f32 %v319, %v320
      %v322 = vrot.slane %v321, 2
      %v323 = vmax.f32 %v321, %v322
      %v324 = vrot.slane %v323, 1
      %v325 = vmax.f32 %v323, %v324
      %v326 = vsel %vm311, %v185, -inf
      %v327 = vrot.slane %v326, 4
      %v328 = vmax.f32 %v326, %v327
      %v329 = vrot.slane %v328, 2
      %v330 = vmax.f32 %v328, %v329
      %v331 = vrot.slane %v330, 1
      %v332 = vmax.f32 %v330, %v331
      %v333 = vsel %vm311, %v186, -inf
      %v334 = vrot.slane %v333, 4
      %v335 = vmax.f32 %v333, %v334
      %v336 = vrot.slane %v335, 2
      %v337 = vmax.f32 %v335, %v336
      %v338 = vrot.slane %v337, 1
      %v339 = vmax.f32 %v337, %v338
      %v340 = vsel %vm311, %v187, -inf
      %v341 = vrot.slane %v340, 4
      %v342 = vmax.f32 %v340, %v341
      %v343 = vrot.slane %v342, 2
      %v344 = vmax.f32 %v342, %v343
      %v345 = vrot.slane %v344, 1
      %v346 = vmax.f32 %v344, %v345
      %v347 = vsel %vm311, %v188, -inf
      %v348 = vrot.slane %v347, 4
      %v349 = vmax.f32 %v347, %v348
      %v350 = vrot.slane %v349, 2
      %v351 = vmax.f32 %v349, %v350
      %v352 = vrot.slane %v351, 1
      %v353 = vmax.f32 %v351, %v352
      %v354 = vsel %vm311, %v189, -inf
      %v355 = vrot.slane %v354, 4
      %v356 = vmax.f32 %v354, %v355
      %v357 = vrot.slane %v356, 2
      %v358 = vmax.f32 %v356, %v357
      %v359 = vrot.slane %v358, 1
      %v360 = vmax.f32 %v358, %v359
      %v361 = vsel %vm311, %v190, -inf
      %v362 = vrot.slane %v361, 4
      %v363 = vmax.f32 %v361, %v362
      %v364 = vrot.slane %v363, 2
      %v365 = vmax.f32 %v363, %v364
      %v366 = vrot.slane %v365, 1
      %v367 = vmax.f32 %v365, %v366
      %v368 = vsel %vm311, %v191, -inf
      %v369 = vrot.slane %v368, 4
      %v370 = vmax.f32 %v368, %v369
      %v371 = vrot.slane %v370, 2
      %v372 = vmax.f32 %v370, %v371
      %v373 = vrot.slane %v372, 1
      %v374 = vmax.f32 %v372, %v373
      %v375 = vsel %vm311, %v192, -inf
      %v376 = vrot.slane %v375, 4
      %v377 = vmax.f32 %v375, %v376
      %v378 = vrot.slane %v377, 2
      %v379 = vmax.f32 %v377, %v378
      %v380 = vrot.slane %v379, 1
      %v381 = vmax.f32 %v379, %v380
      %v382 = vsel %vm311, %v193, -inf
      %v383 = vrot.slane %v382, 4
      %v384 = vmax.f32 %v382, %v383
      %v385 = vrot.slane %v384, 2
      %v386 = vmax.f32 %v384, %v385
      %v387 = vrot.slane %v386, 1
      %v388 = vmax.f32 %v386, %v387
      %v389 = vsel %vm311, %v194, -inf
      %v390 = vrot.slane %v389, 4
      %v391 = vmax.f32 %v389, %v390
      %v392 = vrot.slane %v391, 2
      %v393 = vmax.f32 %v391, %v392
      %v394 = vrot.slane %v393, 1
      %v395 = vmax.f32 %v393, %v394
      %v396 = vsel %vm311, %v195, -inf
      %v397 = vrot.slane %v396, 4
      %v398 = vmax.f32 %v396, %v397
      %v399 = vrot.slane %v398, 2
      %v400 = vmax.f32 %v398, %v399
      %v401 = vrot.slane %v400, 1
      %v402 = vmax.f32 %v400, %v401
      %v403 = vsel %vm311, %v196, -inf
      %v404 = vrot.slane %v403, 4
      %v405 = vmax.f32 %v403, %v404
      %v406 = vrot.slane %v405, 2
      %v407 = vmax.f32 %v405, %v406
      %v408 = vrot.slane %v407, 1
      %v409 = vmax.f32 %v407, %v408
      %v410 = vsel %vm311, %v197, -inf
      %v411 = vrot.slane %v410, 4
      %v412 = vmax.f32 %v410, %v411
      %v413 = vrot.slane %v412, 2
      %v414 = vmax.f32 %v412, %v413
      %v415 = vrot.slane %v414, 1
      %v416 = vmax.f32 %v414, %v415
      %v417 = vsel %vm311, %v198, -inf
      %v418 = vrot.slane %v417, 4
      %v419 = vmax.f32 %v417, %v418
      %v420 = vrot.slane %v419, 2
      %v421 = vmax.f32 %v419, %v420
      %v422 = vrot.slane %v421, 1
      %v423 = vmax.f32 %v421, %v422
      %v424 = vsel %vm311, %v199, -inf
      %v425 = vrot.slane %v424, 4
      %v426 = vmax.f32 %v424, %v425
      %v427 = vrot.slane %v426, 2
      %v428 = vmax.f32 %v426, %v427
      %v429 = vrot.slane %v428, 1
      %v430 = vmax.f32 %v428, %v429
      %v431 = vsel %vm311, %v200, -inf
      %v432 = vrot.slane %v431, 4
      %v433 = vmax.f32 %v431, %v432
      %v434 = vrot.slane %v433, 2
      %v435 = vmax.f32 %v433, %v434
      %v436 = vrot.slane %v435, 1
      %v437 = vmax.f32 %v435, %v436
      %v438 = vsel %vm311, %v201, -inf
      %v439 = vrot.slane %v438, 4
      %v440 = vmax.f32 %v438, %v439
      %v441 = vrot.slane %v440, 2
      %v442 = vmax.f32 %v440, %v441
      %v443 = vrot.slane %v442, 1
      %v444 = vmax.f32 %v442, %v443
      %v445 = vsel %vm311, %v202, -inf
      %v446 = vrot.slane %v445, 4
      %v447 = vmax.f32 %v445, %v446
      %v448 = vrot.slane %v447, 2
      %v449 = vmax.f32 %v447, %v448
      %v450 = vrot.slane %v449, 1
      %v451 = vmax.f32 %v449, %v450
      %v452 = vsel %vm311, %v203, -inf
      %v453 = vrot.slane %v452, 4
      %v454 = vmax.f32 %v452, %v453
      %v455 = vrot.slane %v454, 2
      %v456 = vmax.f32 %v454, %v455
      %v457 = vrot.slane %v456, 1
      %v458 = vmax.f32 %v456, %v457
      %v459 = vsel %vm311, %v204, -inf
      %v460 = vrot.slane %v459, 4
      %v461 = vmax.f32 %v459, %v460
      %v462 = vrot.slane %v461, 2
      %v463 = vmax.f32 %v461, %v462
      %v464 = vrot.slane %v463, 1
      %v465 = vmax.f32 %v463, %v464
      %v466 = vsel %vm311, %v205, -inf
      %v467 = vrot.slane %v466, 4
      %v468 = vmax.f32 %v466, %v467
      %v469 = vrot.slane %v468, 2
      %v470 = vmax.f32 %v468, %v469
      %v471 = vrot.slane %v470, 1
      %v472 = vmax.f32 %v470, %v471
      %v473 = vsel %vm311, %v206, -inf
      %v474 = vrot.slane %v473, 4
      %v475 = vmax.f32 %v473, %v474
      %v476 = vrot.slane %v475, 2
      %v477 = vmax.f32 %v475, %v476
      %v478 = vrot.slane %v477, 1
      %v479 = vmax.f32 %v477, %v478
      %v480 = vsel %vm311, %v207, -inf
      %v481 = vrot.slane %v480, 4
      %v482 = vmax.f32 %v480, %v481
      %v483 = vrot.slane %v482, 2
      %v484 = vmax.f32 %v482, %v483
      %v485 = vrot.slane %v484, 1
      %v486 = vmax.f32 %v484, %v485
      %v487 = vsel %vm311, %v208, -inf
      %v488 = vrot.slane %v487, 4
      %v489 = vmax.f32 %v487, %v488
      %v490 = vrot.slane %v489, 2
      %v491 = vmax.f32 %v489, %v490
      %v492 = vrot.slane %v491, 1
      %v493 = vmax.f32 %v491, %v492
      %v494 = vsel %vm311, %v209, -inf
      %v495 = vrot.slane %v494, 4
      %v496 = vmax.f32 %v494, %v495
      %v497 = vrot.slane %v496, 2
      %v498 = vmax.f32 %v496, %v497
      %v499 = vrot.slane %v498, 1
      %v500 = vmax.f32 %v498, %v499
      %v501 = vsel %vm311, %v210, -inf
      %v502 = vrot.slane %v501, 4
      %v503 = vmax.f32 %v501, %v502
      %v504 = vrot.slane %v503, 2
      %v505 = vmax.f32 %v503, %v504
      %v506 = vrot.slane %v505, 1
      %v507 = vmax.f32 %v505, %v506
      %v508 = vsel %vm311, %v211, -inf
      %v509 = vrot.slane %v508, 4
      %v510 = vmax.f32 %v508, %v509
      %v511 = vrot.slane %v510, 2
      %v512 = vmax.f32 %v510, %v511
      %v513 = vrot.slane %v512, 1
      %v514 = vmax.f32 %v512, %v513
      %v515 = vsel %vm311, %v212, -inf
      %v516 = vrot.slane %v515, 4
      %v517 = vmax.f32 %v515, %v516
      %v518 = vrot.slane %v517, 2
      %v519 = vmax.f32 %v517, %v518
      %v520 = vrot.slane %v519, 1
      %v521 = vmax.f32 %v519, %v520
      %v522 = vsel %vm311, %v213, -inf
      %v523 = vrot.slane %v522, 4
      %v524 = vmax.f32 %v522, %v523
      %v525 = vrot.slane %v524, 2
      %v526 = vmax.f32 %v524, %v525
      %v527 = vrot.slane %v526, 1
      %v528 = vmax.f32 %v526, %v527
      %v529 = vsel %vm311, %v214, -inf
      %v530 = vrot.slane %v529, 4
      %v531 = vmax.f32 %v529, %v530
      %v532 = vrot.slane %v531, 2
      %v533 = vmax.f32 %v531, %v532
      %v534 = vrot.slane %v533, 1
      %v535 = vmax.f32 %v533, %v534
      %v536 = vsel %vm311, %v215, -inf
      %v537 = vrot.slane %v536, 4
      %v538 = vmax.f32 %v536, %v537
      %v539 = vrot.slane %v538, 2
      %v540 = vmax.f32 %v538, %v539
      %v541 = vrot.slane %v540, 1
      %v542 = vmax.f32 %v540, %v541
      %v543 = vsel %vm311, %v216, -inf
      %v544 = vrot.slane %v543, 4
      %v545 = vmax.f32 %v543, %v544
      %v546 = vrot.slane %v545, 2
      %v547 = vmax.f32 %v545, %v546
      %v548 = vrot.slane %v547, 1
      %v549 = vmax.f32 %v547, %v548
      %v550 = vsel %vm311, %v217, -inf
      %v551 = vrot.slane %v550, 4
      %v552 = vmax.f32 %v550, %v551
      %v553 = vrot.slane %v552, 2
      %v554 = vmax.f32 %v552, %v553
      %v555 = vrot.slane %v554, 1
      %v556 = vmax.f32 %v554, %v555
      %v557 = vsel %vm311, %v218, -inf
      %v558 = vrot.slane %v557, 4
      %v559 = vmax.f32 %v557, %v558
      %v560 = vrot.slane %v559, 2
      %v561 = vmax.f32 %v559, %v560
      %v562 = vrot.slane %v561, 1
      %v563 = vmax.f32 %v561, %v562
      %v564 = vsel %vm311, %v219, -inf
      %v565 = vrot.slane %v564, 4
      %v566 = vmax.f32 %v564, %v565
      %v567 = vrot.slane %v566, 2
      %v568 = vmax.f32 %v566, %v567
      %v569 = vrot.slane %v568, 1
      %v570 = vmax.f32 %v568, %v569
      %v571 = vsel %vm311, %v220, -inf
      %v572 = vrot.slane %v571, 4
      %v573 = vmax.f32 %v571, %v572
      %v574 = vrot.slane %v573, 2
      %v575 = vmax.f32 %v573, %v574
      %v576 = vrot.slane %v575, 1
      %v577 = vmax.f32 %v575, %v576
      %v578 = vsel %vm311, %v221, -inf
      %v579 = vrot.slane %v578, 4
      %v580 = vmax.f32 %v578, %v579
      %v581 = vrot.slane %v580, 2
      %v582 = vmax.f32 %v580, %v581
      %v583 = vrot.slane %v582, 1
      %v584 = vmax.f32 %v582, %v583
      %v585 = vsel %vm311, %v222, -inf
      %v586 = vrot.slane %v585, 4
      %v587 = vmax.f32 %v585, %v586
      %v588 = vrot.slane %v587, 2
      %v589 = vmax.f32 %v587, %v588
      %v590 = vrot.slane %v589, 1
      %v591 = vmax.f32 %v589, %v590
      %v592 = vsel %vm311, %v223, -inf
      %v593 = vrot.slane %v592, 4
      %v594 = vmax.f32 %v592, %v593
      %v595 = vrot.slane %v594, 2
      %v596 = vmax.f32 %v594, %v595
      %v597 = vrot.slane %v596, 1
      %v598 = vmax.f32 %v596, %v597
      %v599 = vsel %vm311, %v224, -inf
      %v600 = vrot.slane %v599, 4
      %v601 = vmax.f32 %v599, %v600
      %v602 = vrot.slane %v601, 2
      %v603 = vmax.f32 %v601, %v602
      %v604 = vrot.slane %v603, 1
      %v605 = vmax.f32 %v603, %v604
      %v606 = vsel %vm311, %v225, -inf
      %v607 = vrot.slane %v606, 4
      %v608 = vmax.f32 %v606, %v607
      %v609 = vrot.slane %v608, 2
      %v610 = vmax.f32 %v608, %v609
      %v611 = vrot.slane %v610, 1
      %v612 = vmax.f32 %v610, %v611
      %v613 = vsel %vm311, %v226, -inf
      %v614 = vrot.slane %v613, 4
      %v615 = vmax.f32 %v613, %v614
      %v616 = vrot.slane %v615, 2
      %v617 = vmax.f32 %v615, %v616
      %v618 = vrot.slane %v617, 1
      %v619 = vmax.f32 %v617, %v618
      %v620 = vsel %vm311, %v227, -inf
      %v621 = vrot.slane %v620, 4
      %v622 = vmax.f32 %v620, %v621
      %v623 = vrot.slane %v622, 2
      %v624 = vmax.f32 %v622, %v623
      %v625 = vrot.slane %v624, 1
      %v626 = vmax.f32 %v624, %v625
      %v627 = vsel %vm311, %v228, -inf
      %v628 = vrot.slane %v627, 4
      %v629 = vmax.f32 %v627, %v628
      %v630 = vrot.slane %v629, 2
      %v631 = vmax.f32 %v629, %v630
      %v632 = vrot.slane %v631, 1
      %v633 = vmax.f32 %v631, %v632
      %v634 = vsel %vm311, %v229, -inf
      %v635 = vrot.slane %v634, 4
      %v636 = vmax.f32 %v634, %v635
      %v637 = vrot.slane %v636, 2
      %v638 = vmax.f32 %v636, %v637
      %v639 = vrot.slane %v638, 1
      %v640 = vmax.f32 %v638, %v639
      %v641 = vsel %vm311, %v230, -inf
      %v642 = vrot.slane %v641, 4
      %v643 = vmax.f32 %v641, %v642
      %v644 = vrot.slane %v643, 2
      %v645 = vmax.f32 %v643, %v644
      %v646 = vrot.slane %v645, 1
      %v647 = vmax.f32 %v645, %v646
      %v648 = vsel %vm311, %v231, -inf
      %v649 = vrot.slane %v648, 4
      %v650 = vmax.f32 %v648, %v649
      %v651 = vrot.slane %v650, 2
      %v652 = vmax.f32 %v650, %v651
      %v653 = vrot.slane %v652, 1
      %v654 = vmax.f32 %v652, %v653
      %v655 = vsel %vm311, %v232, -inf
      %v656 = vrot.slane %v655, 4
      %v657 = vmax.f32 %v655, %v656
      %v658 = vrot.slane %v657, 2
      %v659 = vmax.f32 %v657, %v658
      %v660 = vrot.slane %v659, 1
      %v661 = vmax.f32 %v659, %v660
      %v662 = vsel %vm311, %v233, -inf
      %v663 = vrot.slane %v662, 4
      %v664 = vmax.f32 %v662, %v663
      %v665 = vrot.slane %v664, 2
      %v666 = vmax.f32 %v664, %v665
      %v667 = vrot.slane %v666, 1
      %v668 = vmax.f32 %v666, %v667
      %v669 = vsel %vm311, %v234, -inf
      %v670 = vrot.slane %v669, 4
      %v671 = vmax.f32 %v669, %v670
      %v672 = vrot.slane %v671, 2
      %v673 = vmax.f32 %v671, %v672
      %v674 = vrot.slane %v673, 1
      %v675 = vmax.f32 %v673, %v674
      %v676 = vsel %vm311, %v235, -inf
      %v677 = vrot.slane %v676, 4
      %v678 = vmax.f32 %v676, %v677
      %v679 = vrot.slane %v678, 2
      %v680 = vmax.f32 %v678, %v679
      %v681 = vrot.slane %v680, 1
      %v682 = vmax.f32 %v680, %v681
      %v683 = vsel %vm311, %v236, -inf
      %v684 = vrot.slane %v683, 4
      %v685 = vmax.f32 %v683, %v684
      %v686 = vrot.slane %v685, 2
      %v687 = vmax.f32 %v685, %v686
      %v688 = vrot.slane %v687, 1
      %v689 = vmax.f32 %v687, %v688
      %v690 = vsel %vm311, %v237, -inf
      %v691 = vrot.slane %v690, 4
      %v692 = vmax.f32 %v690, %v691
      %v693 = vrot.slane %v692, 2
      %v694 = vmax.f32 %v692, %v693
      %v695 = vrot.slane %v694, 1
      %v696 = vmax.f32 %v694, %v695
      %v697 = vsel %vm311, %v238, -inf
      %v698 = vrot.slane %v697, 4
      %v699 = vmax.f32 %v697, %v698
      %v700 = vrot.slane %v699, 2
      %v701 = vmax.f32 %v699, %v700
      %v702 = vrot.slane %v701, 1
      %v703 = vmax.f32 %v701, %v702
      %v704 = vsel %vm311, %v239, -inf
      %v705 = vrot.slane %v704, 4
      %v706 = vmax.f32 %v704, %v705
      %v707 = vrot.slane %v706, 2
      %v708 = vmax.f32 %v706, %v707
      %v709 = vrot.slane %v708, 1
      %v710 = vmax.f32 %v708, %v709
      %v711 = vsel %vm311, %v240, -inf
      %v712 = vrot.slane %v711, 4
      %v713 = vmax.f32 %v711, %v712
      %v714 = vrot.slane %v713, 2
      %v715 = vmax.f32 %v713, %v714
      %v716 = vrot.slane %v715, 1
      %v717 = vmax.f32 %v715, %v716
      %v718 = vsel %vm311, %v241, -inf
      %v719 = vrot.slane %v718, 4
      %v720 = vmax.f32 %v718, %v719
      %v721 = vrot.slane %v720, 2
      %v722 = vmax.f32 %v720, %v721
      %v723 = vrot.slane %v722, 1
      %v724 = vmax.f32 %v722, %v723
      %v725 = vsel %vm311, %v242, -inf
      %v726 = vrot.slane %v725, 4
      %v727 = vmax.f32 %v725, %v726
      %v728 = vrot.slane %v727, 2
      %v729 = vmax.f32 %v727, %v728
      %v730 = vrot.slane %v729, 1
      %v731 = vmax.f32 %v729, %v730
      %v732 = vsel %vm311, %v243, -inf
      %v733 = vrot.slane %v732, 4
      %v734 = vmax.f32 %v732, %v733
      %v735 = vrot.slane %v734, 2
      %v736 = vmax.f32 %v734, %v735
      %v737 = vrot.slane %v736, 1
      %v738 = vmax.f32 %v736, %v737
      %v739 = vsel %vm311, %v244, -inf
      %v740 = vrot.slane %v739, 4
      %v741 = vmax.f32 %v739, %v740
      %v742 = vrot.slane %v741, 2
      %v743 = vmax.f32 %v741, %v742
      %v744 = vrot.slane %v743, 1
      %v745 = vmax.f32 %v743, %v744
      %v746 = vsel %vm311, %v245, -inf
      %v747 = vrot.slane %v746, 4
      %v748 = vmax.f32 %v746, %v747
      %v749 = vrot.slane %v748, 2
      %v750 = vmax.f32 %v748, %v749
      %v751 = vrot.slane %v750, 1
      %v752 = vmax.f32 %v750, %v751
      %v753 = vsel %vm311, %v246, -inf
      %v754 = vrot.slane %v753, 4
      %v755 = vmax.f32 %v753, %v754
      %v756 = vrot.slane %v755, 2
      %v757 = vmax.f32 %v755, %v756
      %v758 = vrot.slane %v757, 1
      %v759 = vmax.f32 %v757, %v758
      %v760 = vsel %vm311, %v247, -inf
      %v761 = vrot.slane %v760, 4
      %v762 = vmax.f32 %v760, %v761
      %v763 = vrot.slane %v762, 2
      %v764 = vmax.f32 %v762, %v763
      %v765 = vrot.slane %v764, 1
      %v766 = vmax.f32 %v764, %v765
      %v767 = vsel %vm311, %v248, -inf
      %v768 = vrot.slane %v767, 4
      %v769 = vmax.f32 %v767, %v768
      %v770 = vrot.slane %v769, 2
      %v771 = vmax.f32 %v769, %v770
      %v772 = vrot.slane %v771, 1
      %v773 = vmax.f32 %v771, %v772
      %v774 = vsel %vm311, %v249, -inf
      %v775 = vrot.slane %v774, 4
      %v776 = vmax.f32 %v774, %v775
      %v777 = vrot.slane %v776, 2
      %v778 = vmax.f32 %v776, %v777
      %v779 = vrot.slane %v778, 1
      %v780 = vmax.f32 %v778, %v779
      %v781 = vsel %vm311, %v250, -inf
      %v782 = vrot.slane %v781, 4
      %v783 = vmax.f32 %v781, %v782
      %v784 = vrot.slane %v783, 2
      %v785 = vmax.f32 %v783, %v784
      %v786 = vrot.slane %v785, 1
      %v787 = vmax.f32 %v785, %v786
      %v788 = vsel %vm311, %v251, -inf
      %v789 = vrot.slane %v788, 4
      %v790 = vmax.f32 %v788, %v789
      %v791 = vrot.slane %v790, 2
      %v792 = vmax.f32 %v790, %v791
      %v793 = vrot.slane %v792, 1
      %v794 = vmax.f32 %v792, %v793
      %v795 = vsel %vm311, %v252, -inf
      %v796 = vrot.slane %v795, 4
      %v797 = vmax.f32 %v795, %v796
      %v798 = vrot.slane %v797, 2
      %v799 = vmax.f32 %v797, %v798
      %v800 = vrot.slane %v799, 1
      %v801 = vmax.f32 %v799, %v800
      %v802 = vsel %vm311, %v253, -inf
      %v803 = vrot.slane %v802, 4
      %v804 = vmax.f32 %v802, %v803
      %v805 = vrot.slane %v804, 2
      %v806 = vmax.f32 %v804, %v805
      %v807 = vrot.slane %v806, 1
      %v808 = vmax.f32 %v806, %v807
      %v809 = vsel %vm311, %v254, -inf
      %v810 = vrot.slane %v809, 4
      %v811 = vmax.f32 %v809, %v810
      %v812 = vrot.slane %v811, 2
      %v813 = vmax.f32 %v811, %v812
      %v814 = vrot.slane %v813, 1
      %v815 = vmax.f32 %v813, %v814
      %v816 = vsel %vm311, %v255, -inf
      %v817 = vrot.slane %v816, 4
      %v818 = vmax.f32 %v816, %v817
      %v819 = vrot.slane %v818, 2
      %v820 = vmax.f32 %v818, %v819
      %v821 = vrot.slane %v820, 1
      %v822 = vmax.f32 %v820, %v821
      %v823 = vsel %vm311, %v256, -inf
      %v824 = vrot.slane %v823, 4
      %v825 = vmax.f32 %v823, %v824
      %v826 = vrot.slane %v825, 2
      %v827 = vmax.f32 %v825, %v826
      %v828 = vrot.slane %v827, 1
      %v829 = vmax.f32 %v827, %v828
      %v830 = vsel %vm311, %v257, -inf
      %v831 = vrot.slane %v830, 4
      %v832 = vmax.f32 %v830, %v831
      %v833 = vrot.slane %v832, 2
      %v834 = vmax.f32 %v832, %v833
      %v835 = vrot.slane %v834, 1
      %v836 = vmax.f32 %v834, %v835
      %v837 = vsel %vm311, %v258, -inf
      %v838 = vrot.slane %v837, 4
      %v839 = vmax.f32 %v837, %v838
      %v840 = vrot.slane %v839, 2
      %v841 = vmax.f32 %v839, %v840
      %v842 = vrot.slane %v841, 1
      %v843 = vmax.f32 %v841, %v842
      %v844 = vsel %vm311, %v259, -inf
      %v845 = vrot.slane %v844, 4
      %v846 = vmax.f32 %v844, %v845
      %v847 = vrot.slane %v846, 2
      %v848 = vmax.f32 %v846, %v847
      %v849 = vrot.slane %v848, 1
      %v850 = vmax.f32 %v848, %v849
      %v851 = vsel %vm311, %v260, -inf
      %v852 = vrot.slane %v851, 4
      %v853 = vmax.f32 %v851, %v852
      %v854 = vrot.slane %v853, 2
      %v855 = vmax.f32 %v853, %v854
      %v856 = vrot.slane %v855, 1
      %v857 = vmax.f32 %v855, %v856
      %v858 = vsel %vm311, %v261, -inf
      %v859 = vrot.slane %v858, 4
      %v860 = vmax.f32 %v858, %v859
      %v861 = vrot.slane %v860, 2
      %v862 = vmax.f32 %v860, %v861
      %v863 = vrot.slane %v862, 1
      %v864 = vmax.f32 %v862, %v863
      %v865 = vsel %vm311, %v262, -inf
      %v866 = vrot.slane %v865, 4
      %v867 = vmax.f32 %v865, %v866
      %v868 = vrot.slane %v867, 2
      %v869 = vmax.f32 %v867, %v868
      %v870 = vrot.slane %v869, 1
      %v871 = vmax.f32 %v869, %v870
      %v872 = vsel %vm311, %v263, -inf
      %v873 = vrot.slane %v872, 4
      %v874 = vmax.f32 %v872, %v873
      %v875 = vrot.slane %v874, 2
      %v876 = vmax.f32 %v874, %v875
      %v877 = vrot.slane %v876, 1
      %v878 = vmax.f32 %v876, %v877
      %v879 = vsel %vm311, %v264, -inf
      %v880 = vrot.slane %v879, 4
      %v881 = vmax.f32 %v879, %v880
      %v882 = vrot.slane %v881, 2
      %v883 = vmax.f32 %v881, %v882
      %v884 = vrot.slane %v883, 1
      %v885 = vmax.f32 %v883, %v884
      %v886 = vsel %vm311, %v265, -inf
      %v887 = vrot.slane %v886, 4
      %v888 = vmax.f32 %v886, %v887
      %v889 = vrot.slane %v888, 2
      %v890 = vmax.f32 %v888, %v889
      %v891 = vrot.slane %v890, 1
      %v892 = vmax.f32 %v890, %v891
      %v893 = vsel %vm311, %v266, -inf
      %v894 = vrot.slane %v893, 4
      %v895 = vmax.f32 %v893, %v894
      %v896 = vrot.slane %v895, 2
      %v897 = vmax.f32 %v895, %v896
      %v898 = vrot.slane %v897, 1
      %v899 = vmax.f32 %v897, %v898
      %v900 = vsel %vm311, %v267, -inf
      %v901 = vrot.slane %v900, 4
      %v902 = vmax.f32 %v900, %v901
      %v903 = vrot.slane %v902, 2
      %v904 = vmax.f32 %v902, %v903
      %v905 = vrot.slane %v904, 1
      %v906 = vmax.f32 %v904, %v905
      %v907 = vsel %vm311, %v268, -inf
      %v908 = vrot.slane %v907, 4
      %v909 = vmax.f32 %v907, %v908
      %v910 = vrot.slane %v909, 2
      %v911 = vmax.f32 %v909, %v910
      %v912 = vrot.slane %v911, 1
      %v913 = vmax.f32 %v911, %v912
      %v914 = vsel %vm311, %v269, -inf
      %v915 = vrot.slane %v914, 4
      %v916 = vmax.f32 %v914, %v915
      %v917 = vrot.slane %v916, 2
      %v918 = vmax.f32 %v916, %v917
      %v919 = vrot.slane %v918, 1
      %v920 = vmax.f32 %v918, %v919
      %v921 = vsel %vm311, %v270, -inf
      %v922 = vrot.slane %v921, 4
      %v923 = vmax.f32 %v921, %v922
      %v924 = vrot.slane %v923, 2
      %v925 = vmax.f32 %v923, %v924
      %v926 = vrot.slane %v925, 1
      %v927 = vmax.f32 %v925, %v926
      %v928 = vsel %vm311, %v271, -inf
      %v929 = vrot.slane %v928, 4
      %v930 = vmax.f32 %v928, %v929
      %v931 = vrot.slane %v930, 2
      %v932 = vmax.f32 %v930, %v931
      %v933 = vrot.slane %v932, 1
      %v934 = vmax.f32 %v932, %v933
      %v935 = vsel %vm311, %v272, -inf
      %v936 = vrot.slane %v935, 4
      %v937 = vmax.f32 %v935, %v936
      %v938 = vrot.slane %v937, 2
      %v939 = vmax.f32 %v937, %v938
      %v940 = vrot.slane %v939, 1
      %v941 = vmax.f32 %v939, %v940
      %v942 = vsel %vm311, %v273, -inf
      %v943 = vrot.slane %v942, 4
      %v944 = vmax.f32 %v942, %v943
      %v945 = vrot.slane %v944, 2
      %v946 = vmax.f32 %v944, %v945
      %v947 = vrot.slane %v946, 1
      %v948 = vmax.f32 %v946, %v947
      %v949 = vsel %vm311, %v274, -inf
      %v950 = vrot.slane %v949, 4
      %v951 = vmax.f32 %v949, %v950
      %v952 = vrot.slane %v951, 2
      %v953 = vmax.f32 %v951, %v952
      %v954 = vrot.slane %v953, 1
      %v955 = vmax.f32 %v953, %v954
      %v956 = vsel %vm311, %v275, -inf
      %v957 = vrot.slane %v956, 4
      %v958 = vmax.f32 %v956, %v957
      %v959 = vrot.slane %v958, 2
      %v960 = vmax.f32 %v958, %v959
      %v961 = vrot.slane %v960, 1
      %v962 = vmax.f32 %v960, %v961
      %v963 = vsel %vm311, %v276, -inf
      %v964 = vrot.slane %v963, 4
      %v965 = vmax.f32 %v963, %v964
      %v966 = vrot.slane %v965, 2
      %v967 = vmax.f32 %v965, %v966
      %v968 = vrot.slane %v967, 1
      %v969 = vmax.f32 %v967, %v968
      %v970 = vsel %vm311, %v277, -inf
      %v971 = vrot.slane %v970, 4
      %v972 = vmax.f32 %v970, %v971
      %v973 = vrot.slane %v972, 2
      %v974 = vmax.f32 %v972, %v973
      %v975 = vrot.slane %v974, 1
      %v976 = vmax.f32 %v974, %v975
      %v977 = vsel %vm311, %v278, -inf
      %v978 = vrot.slane %v977, 4
      %v979 = vmax.f32 %v977, %v978
      %v980 = vrot.slane %v979, 2
      %v981 = vmax.f32 %v979, %v980
      %v982 = vrot.slane %v981, 1
      %v983 = vmax.f32 %v981, %v982
      %v984 = vsel %vm311, %v279, -inf
      %v985 = vrot.slane %v984, 4
      %v986 = vmax.f32 %v984, %v985
      %v987 = vrot.slane %v986, 2
      %v988 = vmax.f32 %v986, %v987
      %v989 = vrot.slane %v988, 1
      %v990 = vmax.f32 %v988, %v989
      %v991 = vsel %vm311, %v280, -inf
      %v992 = vrot.slane %v991, 4
      %v993 = vmax.f32 %v991, %v992
      %v994 = vrot.slane %v993, 2
      %v995 = vmax.f32 %v993, %v994
      %v996 = vrot.slane %v995, 1
      %v997 = vmax.f32 %v995, %v996
      %v998 = vsel %vm311, %v281, -inf
      %v999 = vrot.slane %v998, 4
      %v1000 = vmax.f32 %v998, %v999
      %v1001 = vrot.slane %v1000, 2
      %v1002 = vmax.f32 %v1000, %v1001
      %v1003 = vrot.slane %v1002, 1
      %v1004 = vmax.f32 %v1002, %v1003
      %v1005 = vsel %vm311, %v282, -inf
      %v1006 = vrot.slane %v1005, 4
      %v1007 = vmax.f32 %v1005, %v1006
      %v1008 = vrot.slane %v1007, 2
      %v1009 = vmax.f32 %v1007, %v1008
      %v1010 = vrot.slane %v1009, 1
      %v1011 = vmax.f32 %v1009, %v1010
      %v1012 = vsel %vm311, %v283, -inf
      %v1013 = vrot.slane %v1012, 4
      %v1014 = vmax.f32 %v1012, %v1013
      %v1015 = vrot.slane %v1014, 2
      %v1016 = vmax.f32 %v1014, %v1015
      %v1017 = vrot.slane %v1016, 1
      %v1018 = vmax.f32 %v1016, %v1017
      %v1019 = vsel %vm311, %v284, -inf
      %v1020 = vrot.slane %v1019, 4
      %v1021 = vmax.f32 %v1019, %v1020
      %v1022 = vrot.slane %v1021, 2
      %v1023 = vmax.f32 %v1021, %v1022
      %v1024 = vrot.slane %v1023, 1
      %v1025 = vmax.f32 %v1023, %v1024
      %v1026 = vsel %vm311, %v285, -inf
      %v1027 = vrot.slane %v1026, 4
      %v1028 = vmax.f32 %v1026, %v1027
      %v1029 = vrot.slane %v1028, 2
      %v1030 = vmax.f32 %v1028, %v1029
      %v1031 = vrot.slane %v1030, 1
      %v1032 = vmax.f32 %v1030, %v1031
      %v1033 = vsel %vm311, %v286, -inf
      %v1034 = vrot.slane %v1033, 4
      %v1035 = vmax.f32 %v1033, %v1034
      %v1036 = vrot.slane %v1035, 2
      %v1037 = vmax.f32 %v1035, %v1036
      %v1038 = vrot.slane %v1037, 1
      %v1039 = vmax.f32 %v1037, %v1038
      %v1040 = vsel %vm311, %v287, -inf
      %v1041 = vrot.slane %v1040, 4
      %v1042 = vmax.f32 %v1040, %v1041
      %v1043 = vrot.slane %v1042, 2
      %v1044 = vmax.f32 %v1042, %v1043
      %v1045 = vrot.slane %v1044, 1
      %v1046 = vmax.f32 %v1044, %v1045
      %v1047 = vsel %vm311, %v288, -inf
      %v1048 = vrot.slane %v1047, 4
      %v1049 = vmax.f32 %v1047, %v1048
      %v1050 = vrot.slane %v1049, 2
      %v1051 = vmax.f32 %v1049, %v1050
      %v1052 = vrot.slane %v1051, 1
      %v1053 = vmax.f32 %v1051, %v1052
      %v1054 = vsel %vm311, %v289, -inf
      %v1055 = vrot.slane %v1054, 4
      %v1056 = vmax.f32 %v1054, %v1055
      %v1057 = vrot.slane %v1056, 2
      %v1058 = vmax.f32 %v1056, %v1057
      %v1059 = vrot.slane %v1058, 1
      %v1060 = vmax.f32 %v1058, %v1059
      %v1061 = vsel %vm311, %v290, -inf
      %v1062 = vrot.slane %v1061, 4
      %v1063 = vmax.f32 %v1061, %v1062
      %v1064 = vrot.slane %v1063, 2
      %v1065 = vmax.f32 %v1063, %v1064
      %v1066 = vrot.slane %v1065, 1
      %v1067 = vmax.f32 %v1065, %v1066
      %v1068 = vsel %vm311, %v291, -inf
      %v1069 = vrot.slane %v1068, 4
      %v1070 = vmax.f32 %v1068, %v1069
      %v1071 = vrot.slane %v1070, 2
      %v1072 = vmax.f32 %v1070, %v1071
      %v1073 = vrot.slane %v1072, 1
      %v1074 = vmax.f32 %v1072, %v1073
      %v1075 = vsel %vm311, %v292, -inf
      %v1076 = vrot.slane %v1075, 4
      %v1077 = vmax.f32 %v1075, %v1076
      %v1078 = vrot.slane %v1077, 2
      %v1079 = vmax.f32 %v1077, %v1078
      %v1080 = vrot.slane %v1079, 1
      %v1081 = vmax.f32 %v1079, %v1080
      %v1082 = vsel %vm311, %v293, -inf
      %v1083 = vrot.slane %v1082, 4
      %v1084 = vmax.f32 %v1082, %v1083
      %v1085 = vrot.slane %v1084, 2
      %v1086 = vmax.f32 %v1084, %v1085
      %v1087 = vrot.slane %v1086, 1
      %v1088 = vmax.f32 %v1086, %v1087
      %v1089 = vsel %vm311, %v294, -inf
      %v1090 = vrot.slane %v1089, 4
      %v1091 = vmax.f32 %v1089, %v1090
      %v1092 = vrot.slane %v1091, 2
      %v1093 = vmax.f32 %v1091, %v1092
      %v1094 = vrot.slane %v1093, 1
      %v1095 = vmax.f32 %v1093, %v1094
      %v1096 = vsel %vm311, %v295, -inf
      %v1097 = vrot.slane %v1096, 4
      %v1098 = vmax.f32 %v1096, %v1097
      %v1099 = vrot.slane %v1098, 2
      %v1100 = vmax.f32 %v1098, %v1099
      %v1101 = vrot.slane %v1100, 1
      %v1102 = vmax.f32 %v1100, %v1101
      %v1103 = vsel %vm311, %v296, -inf
      %v1104 = vrot.slane %v1103, 4
      %v1105 = vmax.f32 %v1103, %v1104
      %v1106 = vrot.slane %v1105, 2
      %v1107 = vmax.f32 %v1105, %v1106
      %v1108 = vrot.slane %v1107, 1
      %v1109 = vmax.f32 %v1107, %v1108
      %v1110 = vsel %vm311, %v297, -inf
      %v1111 = vrot.slane %v1110, 4
      %v1112 = vmax.f32 %v1110, %v1111
      %v1113 = vrot.slane %v1112, 2
      %v1114 = vmax.f32 %v1112, %v1113
      %v1115 = vrot.slane %v1114, 1
      %v1116 = vmax.f32 %v1114, %v1115
      %v1117 = vsel %vm311, %v298, -inf
      %v1118 = vrot.slane %v1117, 4
      %v1119 = vmax.f32 %v1117, %v1118
      %v1120 = vrot.slane %v1119, 2
      %v1121 = vmax.f32 %v1119, %v1120
      %v1122 = vrot.slane %v1121, 1
      %v1123 = vmax.f32 %v1121, %v1122
      %v1124 = vsel %vm311, %v299, -inf
      %v1125 = vrot.slane %v1124, 4
      %v1126 = vmax.f32 %v1124, %v1125
      %v1127 = vrot.slane %v1126, 2
      %v1128 = vmax.f32 %v1126, %v1127
      %v1129 = vrot.slane %v1128, 1
      %v1130 = vmax.f32 %v1128, %v1129
      %v1131 = vsel %vm311, %v300, -inf
      %v1132 = vrot.slane %v1131, 4
      %v1133 = vmax.f32 %v1131, %v1132
      %v1134 = vrot.slane %v1133, 2
      %v1135 = vmax.f32 %v1133, %v1134
      %v1136 = vrot.slane %v1135, 1
      %v1137 = vmax.f32 %v1135, %v1136
      %v1138 = vsel %vm311, %v301, -inf
      %v1139 = vrot.slane %v1138, 4
      %v1140 = vmax.f32 %v1138, %v1139
      %v1141 = vrot.slane %v1140, 2
      %v1142 = vmax.f32 %v1140, %v1141
      %v1143 = vrot.slane %v1142, 1
      %v1144 = vmax.f32 %v1142, %v1143
      %v1145 = vsel %vm311, %v302, -inf
      %v1146 = vrot.slane %v1145, 4
      %v1147 = vmax.f32 %v1145, %v1146
      %v1148 = vrot.slane %v1147, 2
      %v1149 = vmax.f32 %v1147, %v1148
      %v1150 = vrot.slane %v1149, 1
      %v1151 = vmax.f32 %v1149, %v1150
      %v1152 = vsel %vm311, %v303, -inf
      %v1153 = vrot.slane %v1152, 4
      %v1154 = vmax.f32 %v1152, %v1153
      %v1155 = vrot.slane %v1154, 2
      %v1156 = vmax.f32 %v1154, %v1155
      %v1157 = vrot.slane %v1156, 1
      %v1158 = vmax.f32 %v1156, %v1157
      %v1159 = vsel %vm311, %v304, -inf
      %v1160 = vrot.slane %v1159, 4
      %v1161 = vmax.f32 %v1159, %v1160
      %v1162 = vrot.slane %v1161, 2
      %v1163 = vmax.f32 %v1161, %v1162
      %v1164 = vrot.slane %v1163, 1
      %v1165 = vmax.f32 %v1163, %v1164
      %v1166 = vsel %vm311, %v305, -inf
      %v1167 = vrot.slane %v1166, 4
      %v1168 = vmax.f32 %v1166, %v1167
      %v1169 = vrot.slane %v1168, 2
      %v1170 = vmax.f32 %v1168, %v1169
      %v1171 = vrot.slane %v1170, 1
      %v1172 = vmax.f32 %v1170, %v1171
      %v1173 = vsel %vm311, %v306, -inf
      %v1174 = vrot.slane %v1173, 4
      %v1175 = vmax.f32 %v1173, %v1174
      %v1176 = vrot.slane %v1175, 2
      %v1177 = vmax.f32 %v1175, %v1176
      %v1178 = vrot.slane %v1177, 1
      %v1179 = vmax.f32 %v1177, %v1178
      %v1180 = vsel %vm311, %v307, -inf
      %v1181 = vrot.slane %v1180, 4
      %v1182 = vmax.f32 %v1180, %v1181
      %v1183 = vrot.slane %v1182, 2
      %v1184 = vmax.f32 %v1182, %v1183
      %v1185 = vrot.slane %v1184, 1
      %v1186 = vmax.f32 %v1184, %v1185
      %v1187 = vsel %vm311, %v308, -inf
      %v1188 = vrot.slane %v1187, 4
      %v1189 = vmax.f32 %v1187, %v1188
      %v1190 = vrot.slane %v1189, 2
      %v1191 = vmax.f32 %v1189, %v1190
      %v1192 = vrot.slane %v1191, 1
      %v1193 = vmax.f32 %v1191, %v1192
      %v1194 = vsel %vm311, %v309, -inf
      %v1195 = vrot.slane %v1194, 4
      %v1196 = vmax.f32 %v1194, %v1195
      %v1197 = vrot.slane %v1196, 2
      %v1198 = vmax.f32 %v1196, %v1197
      %v1199 = vrot.slane %v1198, 1
      %v1200 = vmax.f32 %v1198, %v1199
      %v1201 = vsel %vm311, %v310, -inf
      %v1202 = vrot.slane %v1201, 4
      %v1203 = vmax.f32 %v1201, %v1202
      %v1204 = vrot.slane %v1203, 2
      %v1205 = vmax.f32 %v1203, %v1204
      %v1206 = vrot.slane %v1205, 1
      %v1207 = vmax.f32 %v1205, %v1206
      %vm1208 = vcmask 31744
      %v1209 = vsel %vm1208, %v318, -inf
      %v1210 = vsel %vm1208, %v374, -inf
      %v1211 = vmax.f32 %v1209, %v1210
      %v1212 = vsel %vm1208, %v325, -inf
      %v1213 = vsel %vm1208, %v381, -inf
      %v1214 = vmax.f32 %v1212, %v1213
      %v1215 = vsel %vm1208, %v332, -inf
      %v1216 = vsel %vm1208, %v388, -inf
      %v1217 = vmax.f32 %v1215, %v1216
      %v1218 = vsel %vm1208, %v339, -inf
      %v1219 = vsel %vm1208, %v395, -inf
      %v1220 = vmax.f32 %v1218, %v1219
      %v1221 = vsel %vm1208, %v346, -inf
      %v1222 = vsel %vm1208, %v402, -inf
      %v1223 = vmax.f32 %v1221, %v1222
      %v1224 = vsel %vm1208, %v353, -inf
      %v1225 = vsel %vm1208, %v409, -inf
      %v1226 = vmax.f32 %v1224, %v1225
      %v1227 = vsel %vm1208, %v360, -inf
      %v1228 = vsel %vm1208, %v416, -inf
      %v1229 = vmax.f32 %v1227, %v1228
      %v1230 = vsel %vm1208, %v367, -inf
      %v1231 = vsel %vm1208, %v423, -inf
      %v1232 = vmax.f32 %v1230, %v1231
      %v1233 = vsel %vm1208, %v430, -inf
      %v1234 = vsel %vm1208, %v486, -inf
      %v1235 = vmax.f32 %v1233, %v1234
      %v1236 = vsel %vm1208, %v437, -inf
      %v1237 = vsel %vm1208, %v493, -inf
      %v1238 = vmax.f32 %v1236, %v1237
      %v1239 = vsel %vm1208, %v444, -inf
      %v1240 = vsel %vm1208, %v500, -inf
      %v1241 = vmax.f32 %v1239, %v1240
      %v1242 = vsel %vm1208, %v451, -inf
      %v1243 = vsel %vm1208, %v507, -inf
      %v1244 = vmax.f32 %v1242, %v1243
      %v1245 = vsel %vm1208, %v458, -inf
      %v1246 = vsel %vm1208, %v514, -inf
      %v1247 = vmax.f32 %v1245, %v1246
      %v1248 = vsel %vm1208, %v465, -inf
      %v1249 = vsel %vm1208, %v521, -inf
      %v1250 = vmax.f32 %v1248, %v1249
      %v1251 = vsel %vm1208, %v472, -inf
      %v1252 = vsel %vm1208, %v528, -inf
      %v1253 = vmax.f32 %v1251, %v1252
      %v1254 = vsel %vm1208, %v479, -inf
      %v1255 = vsel %vm1208, %v535, -inf
      %v1256 = vmax.f32 %v1254, %v1255
      %v1257 = vsel %vm1208, %v542, -inf
      %v1258 = vsel %vm1208, %v598, -inf
      %v1259 = vmax.f32 %v1257, %v1258
      %v1260 = vsel %vm1208, %v549, -inf
      %v1261 = vsel %vm1208, %v605, -inf
      %v1262 = vmax.f32 %v1260, %v1261
      %v1263 = vsel %vm1208, %v556, -inf
      %v1264 = vsel %vm1208, %v612, -inf
      %v1265 = vmax.f32 %v1263, %v1264
      %v1266 = vsel %vm1208, %v563, -inf
      %v1267 = vsel %vm1208, %v619, -inf
      %v1268 = vmax.f32 %v1266, %v1267
      %v1269 = vsel %vm1208, %v570, -inf
      %v1270 = vsel %vm1208, %v626, -inf
      %v1271 = vmax.f32 %v1269, %v1270
      %v1272 = vsel %vm1208, %v577, -inf
      %v1273 = vsel %vm1208, %v633, -inf
      %v1274 = vmax.f32 %v1272, %v1273
      %v1275 = vsel %vm1208, %v584, -inf
      %v1276 = vsel %vm1208, %v640, -inf
      %v1277 = vmax.f32 %v1275, %v1276
      %v1278 = vsel %vm1208, %v591, -inf
      %v1279 = vsel %vm1208, %v647, -inf
      %v1280 = vmax.f32 %v1278, %v1279
      %v1281 = vsel %vm1208, %v654, -inf
      %v1282 = vsel %vm1208, %v710, -inf
      %v1283 = vmax.f32 %v1281, %v1282
      %v1284 = vsel %vm1208, %v661, -inf
      %v1285 = vsel %vm1208, %v717, -inf
      %v1286 = vmax.f32 %v1284, %v1285
      %v1287 = vsel %vm1208, %v668, -inf
      %v1288 = vsel %vm1208, %v724, -inf
      %v1289 = vmax.f32 %v1287, %v1288
      %v1290 = vsel %vm1208, %v675, -inf
      %v1291 = vsel %vm1208, %v731, -inf
      %v1292 = vmax.f32 %v1290, %v1291
      %v1293 = vsel %vm1208, %v682, -inf
      %v1294 = vsel %vm1208, %v738, -inf
      %v1295 = vmax.f32 %v1293, %v1294
      %v1296 = vsel %vm1208, %v689, -inf
      %v1297 = vsel %vm1208, %v745, -inf
      %v1298 = vmax.f32 %v1296, %v1297
      %v1299 = vsel %vm1208, %v696, -inf
      %v1300 = vsel %vm1208, %v752, -inf
      %v1301 = vmax.f32 %v1299, %v1300
      %v1302 = vsel %vm1208, %v703, -inf
      %v1303 = vsel %vm1208, %v759, -inf
      %v1304 = vmax.f32 %v1302, %v1303
      %v1305 = vsel %vm1208, %v766, -inf
      %v1306 = vsel %vm1208, %v822, -inf
      %v1307 = vmax.f32 %v1305, %v1306
      %v1308 = vsel %vm1208, %v773, -inf
      %v1309 = vsel %vm1208, %v829, -inf
      %v1310 = vmax.f32 %v1308, %v1309
      %v1311 = vsel %vm1208, %v780, -inf
      %v1312 = vsel %vm1208, %v836, -inf
      %v1313 = vmax.f32 %v1311, %v1312
      %v1314 = vsel %vm1208, %v787, -inf
      %v1315 = vsel %vm1208, %v843, -inf
      %v1316 = vmax.f32 %v1314, %v1315
      %v1317 = vsel %vm1208, %v794, -inf
      %v1318 = vsel %vm1208, %v850, -inf
      %v1319 = vmax.f32 %v1317, %v1318
      %v1320 = vsel %vm1208, %v801, -inf
      %v1321 = vsel %vm1208, %v857, -inf
      %v1322 = vmax.f32 %v1320, %v1321
      %v1323 = vsel %vm1208, %v808, -inf
      %v1324 = vsel %vm1208, %v864, -inf
      %v1325 = vmax.f32 %v1323, %v1324
      %v1326 = vsel %vm1208, %v815, -inf
      %v1327 = vsel %vm1208, %v871, -inf
      %v1328 = vmax.f32 %v1326, %v1327
      %v1329 = vsel %vm1208, %v878, -inf
      %v1330 = vsel %vm1208, %v934, -inf
      %v1331 = vmax.f32 %v1329, %v1330
      %v1332 = vsel %vm1208, %v885, -inf
      %v1333 = vsel %vm1208, %v941, -inf
      %v1334 = vmax.f32 %v1332, %v1333
      %v1335 = vsel %vm1208, %v892, -inf
      %v1336 = vsel %vm1208, %v948, -inf
      %v1337 = vmax.f32 %v1335, %v1336
      %v1338 = vsel %vm1208, %v899, -inf
      %v1339 = vsel %vm1208, %v955, -inf
      %v1340 = vmax.f32 %v1338, %v1339
      %v1341 = vsel %vm1208, %v906, -inf
      %v1342 = vsel %vm1208, %v962, -inf
      %v1343 = vmax.f32 %v1341, %v1342
      %v1344 = vsel %vm1208, %v913, -inf
      %v1345 = vsel %vm1208, %v969, -inf
      %v1346 = vmax.f32 %v1344, %v1345
      %v1347 = vsel %vm1208, %v920, -inf
      %v1348 = vsel %vm1208, %v976, -inf
      %v1349 = vmax.f32 %v1347, %v1348
      %v1350 = vsel %vm1208, %v927, -inf
      %v1351 = vsel %vm1208, %v983, -inf
      %v1352 = vmax.f32 %v1350, %v1351
      %v1353 = vsel %vm1208, %v990, -inf
      %v1354 = vsel %vm1208, %v1046, -inf
      %v1355 = vmax.f32 %v1353, %v1354
      %v1356 = vsel %vm1208, %v997, -inf
      %v1357 = vsel %vm1208, %v1053, -inf
      %v1358 = vmax.f32 %v1356, %v1357
      %v1359 = vsel %vm1208, %v1004, -inf
      %v1360 = vsel %vm1208, %v1060, -inf
      %v1361 = vmax.f32 %v1359, %v1360
      %v1362 = vsel %vm1208, %v1011, -inf
      %v1363 = vsel %vm1208, %v1067, -inf
      %v1364 = vmax.f32 %v1362, %v1363
      %v1365 = vsel %vm1208, %v1018, -inf
      %v1366 = vsel %vm1208, %v1074, -inf
      %v1367 = vmax.f32 %v1365, %v1366
      %v1368 = vsel %vm1208, %v1025, -inf
      %v1369 = vsel %vm1208, %v1081, -inf
      %v1370 = vmax.f32 %v1368, %v1369
      %v1371 = vsel %vm1208, %v1032, -inf
      %v1372 = vsel %vm1208, %v1088, -inf
      %v1373 = vmax.f32 %v1371, %v1372
      %v1374 = vsel %vm1208, %v1039, -inf
      %v1375 = vsel %vm1208, %v1095, -inf
      %v1376 = vmax.f32 %v1374, %v1375
      %v1377 = vsel %vm1208, %v1102, -inf
      %v1378 = vsel %vm1208, %v1158, -inf
      %v1379 = vmax.f32 %v1377, %v1378
      %v1380 = vsel %vm1208, %v1109, -inf
      %v1381 = vsel %vm1208, %v1165, -inf
      %v1382 = vmax.f32 %v1380, %v1381
      %v1383 = vsel %vm1208, %v1116, -inf
      %v1384 = vsel %vm1208, %v1172, -inf
      %v1385 = vmax.f32 %v1383, %v1384
      %v1386 = vsel %vm1208, %v1123, -inf
      %v1387 = vsel %vm1208, %v1179, -inf
      %v1388 = vmax.f32 %v1386, %v1387
      %v1389 = vsel %vm1208, %v1130, -inf
      %v1390 = vsel %vm1208, %v1186, -inf
      %v1391 = vmax.f32 %v1389, %v1390
      %v1392 = vsel %vm1208, %v1137, -inf
      %v1393 = vsel %vm1208, %v1193, -inf
      %v1394 = vmax.f32 %v1392, %v1393
      %v1395 = vsel %vm1208, %v1144, -inf
      %v1396 = vsel %vm1208, %v1200, -inf
      %v1397 = vmax.f32 %v1395, %v1396
      %v1398 = vsel %vm1208, %v1151, -inf
      %v1399 = vsel %vm1208, %v1207, -inf
      %v1400 = vmax.f32 %v1398, %v1399
      %vm1465 = vcmask 1042434
      %v1466 = vsel %vm1465, %v1214, %v1211
      %vm1467 = vcmask 1043459
      %v1468 = vsel %vm1467, %v1217, %v1466
      %vm1469 = vcmask 1044484
      %v1470 = vsel %vm1469, %v1220, %v1468
      %vm1471 = vcmask 1045509
      %v1472 = vsel %vm1471, %v1223, %v1470
      %vm1473 = vcmask 1046534
      %v1474 = vsel %vm1473, %v1226, %v1472
      %vm1475 = vcmask 1047559
      %v1476 = vsel %vm1475, %v1229, %v1474
      %v1477 = vsel %vm1465, %v1238, %v1235
      %v1478 = vsel %vm1467, %v1241, %v1477
      %v1479 = vsel %vm1469, %v1244, %v1478
      %v1480 = vsel %vm1471, %v1247, %v1479
      %v1481 = vsel %vm1473, %v1250, %v1480
      %v1482 = vsel %vm1475, %v1253, %v1481
      %v1483 = vsel %vm1465, %v1262, %v1259
      %v1484 = vsel %vm1467, %v1265, %v1483
      %v1485 = vsel %vm1469, %v1268, %v1484
      %v1486 = vsel %vm1471, %v1271, %v1485
      %v1487 = vsel %vm1473, %v1274, %v1486
      %v1488 = vsel %vm1475, %v1277, %v1487
      %v1489 = vsel %vm1465, %v1286, %v1283
      %v1490 = vsel %vm1467, %v1289, %v1489
      %v1491 = vsel %vm1469, %v1292, %v1490
      %v1492 = vsel %vm1471, %v1295, %v1491
      %v1493 = vsel %vm1473, %v1298, %v1492
      %v1494 = vsel %vm1475, %v1301, %v1493
      %v1495 = vsel %vm1465, %v1310, %v1307
      %v1496 = vsel %vm1467, %v1313, %v1495
      %v1497 = vsel %vm1469, %v1316, %v1496
      %v1498 = vsel %vm1471, %v1319, %v1497
      %v1499 = vsel %vm1473, %v1322, %v1498
      %v1500 = vsel %vm1475, %v1325, %v1499
      %v1501 = vsel %vm1465, %v1334, %v1331
      %v1502 = vsel %vm1467, %v1337, %v1501
      %v1503 = vsel %vm1469, %v1340, %v1502
      %v1504 = vsel %vm1471, %v1343, %v1503
      %v1505 = vsel %vm1473, %v1346, %v1504
      %v1506 = vsel %vm1475, %v1349, %v1505
      %v1507 = vsel %vm1465, %v1358, %v1355
      %v1508 = vsel %vm1467, %v1361, %v1507
      %v1509 = vsel %vm1469, %v1364, %v1508
      %v1510 = vsel %vm1471, %v1367, %v1509
      %v1511 = vsel %vm1473, %v1370, %v1510
      %v1512 = vsel %vm1475, %v1373, %v1511
      %v1513 = vsel %vm1465, %v1382, %v1379
      %v1514 = vsel %vm1467, %v1385, %v1513
      %v1515 = vsel %vm1469, %v1388, %v1514
      %v1516 = vsel %vm1471, %v1391, %v1515
      %v1517 = vsel %vm1473, %v1394, %v1516
      %v1518 = vsel %vm1475, %v1397, %v1517
      %vm1535 = vcmask 1040384
      %v1536 = vsel %vm1535, 0.0, %v1476
      %v1537 = vsel %vm1535, 0.0, %v1482
      %v1538 = vsel %vm1535, 0.0, %v1488
      %v1539 = vsel %vm1535, 0.0, %v1494
      %v1540 = vsel %vm1535, 0.0, %v1500
      %v1541 = vsel %vm1535, 0.0, %v1506
      %v1542 = vsel %vm1535, 0.0, %v1512
      %v1543 = vsel %vm1535, 0.0, %v1518
      %v1544 = vsel %vm1535, %v1232, 0.0
      %v1545 = vsel %vm1535, %v1256, 0.0
      %v1546 = vsel %vm1535, %v1280, 0.0
      %v1547 = vsel %vm1535, %v1304, 0.0
      %v1548 = vsel %vm1535, %v1328, 0.0
      %v1549 = vsel %vm1535, %v1352, 0.0
      %v1550 = vsel %vm1535, %v1376, 0.0
      %v1551 = vsel %vm1535, %v1400, 0.0
      %vm1567 = vcmask 1046528
      %v1568 = vrot.slane 0.0, 1
      %v1569 = vsel %vm1567, %v1568, %v1568
      %v1570 = vrot.slane %v1536, 1
      %v1571 = vrot.slane %v1544, 1
      %v1572 = vsel %vm1567, %v1570, %v1571
      %v1573 = vrot.slane %v1537, 1
      %v1574 = vrot.slane %v1545, 1
      %v1575 = vsel %vm1567, %v1573, %v1574
      %v1576 = vrot.slane %v1538, 1
      %v1577 = vrot.slane %v1546, 1
      %v1578 = vsel %vm1567, %v1576, %v1577
      %v1579 = vrot.slane %v1539, 1
      %v1580 = vrot.slane %v1547, 1
      %v1581 = vsel %vm1567, %v1579, %v1580
      %v1582 = vrot.slane %v1540, 1
      %v1583 = vrot.slane %v1548, 1
      %v1584 = vsel %vm1567, %v1582, %v1583
      %v1585 = vrot.slane %v1541, 1
      %v1586 = vrot.slane %v1549, 1
      %v1587 = vsel %vm1567, %v1585, %v1586
      %v1588 = vrot.slane %v1542, 1
      %v1589 = vrot.slane %v1550, 1
      %v1590 = vsel %vm1567, %v1588, %v1589
      %1591 = vrot.lane.b32.xlu0 %v1569, 4
      %v1592 = vpop.permute.xlu0 %1591
      %1593 = vrot.lane.b32.xlu0 %v1572, 4
      %v1594 = vpop.permute.xlu0 %1593
      %1595 = vrot.lane.b32.xlu0 %v1575, 4
      %v1596 = vpop.permute.xlu0 %1595
      %1597 = vrot.lane.b32.xlu0 %v1578, 4
      %v1598 = vpop.permute.xlu0 %1597
      %1599 = vrot.lane.b32.xlu0 %v1581, 4
      %v1600 = vpop.permute.xlu0 %1599
      %1601 = vrot.lane.b32.xlu0 %v1584, 4
      %v1602 = vpop.permute.xlu0 %1601
      %1603 = vrot.lane.b32.xlu0 %v1587, 4
      %v1604 = vpop.permute.xlu0 %1603
      %1605 = vrot.lane.b32.xlu0 %v1590, 4
      %v1606 = vpop.permute.xlu0 %1605
      %vm1615 = vcmask 1045504
      %v1616 = vrot.slane 0.0, 2
      %v1617 = vsel %vm1615, %v1616, %v1616
      %v1618 = vrot.slane %v1536, 2
      %v1619 = vrot.slane %v1544, 2
      %v1620 = vsel %vm1615, %v1618, %v1619
      %v1621 = vrot.slane %v1537, 2
      %v1622 = vrot.slane %v1545, 2
      %v1623 = vsel %vm1615, %v1621, %v1622
      %v1624 = vrot.slane %v1538, 2
      %v1625 = vrot.slane %v1546, 2
      %v1626 = vsel %vm1615, %v1624, %v1625
      %v1627 = vrot.slane %v1539, 2
      %v1628 = vrot.slane %v1547, 2
      %v1629 = vsel %vm1615, %v1627, %v1628
      %v1630 = vrot.slane %v1540, 2
      %v1631 = vrot.slane %v1548, 2
      %v1632 = vsel %vm1615, %v1630, %v1631
      %v1633 = vrot.slane %v1541, 2
      %v1634 = vrot.slane %v1549, 2
      %v1635 = vsel %vm1615, %v1633, %v1634
      %v1636 = vrot.slane %v1542, 2
      %v1637 = vrot.slane %v1550, 2
      %v1638 = vsel %vm1615, %v1636, %v1637
      %1639 = vrot.lane.b32.xlu0 %v1617, 8
      %v1640 = vpop.permute.xlu0 %1639
      %1641 = vrot.lane.b32.xlu0 %v1620, 8
      %v1642 = vpop.permute.xlu0 %1641
      %1643 = vrot.lane.b32.xlu0 %v1623, 8
      %v1644 = vpop.permute.xlu0 %1643
      %1645 = vrot.lane.b32.xlu0 %v1626, 8
      %v1646 = vpop.permute.xlu0 %1645
      %1647 = vrot.lane.b32.xlu0 %v1629, 8
      %v1648 = vpop.permute.xlu0 %1647
      %1649 = vrot.lane.b32.xlu0 %v1632, 8
      %v1650 = vpop.permute.xlu0 %1649
      %1651 = vrot.lane.b32.xlu0 %v1635, 8
      %v1652 = vpop.permute.xlu0 %1651
      %1653 = vrot.lane.b32.xlu0 %v1638, 8
      %v1654 = vpop.permute.xlu0 %1653
      %v1663 = vsel %vm1208, 0.0, %v1592
      %v1664 = vsel %vm1208, %v1536, %v1594
      %v1665 = vsel %vm1208, %v1537, %v1596
      %v1666 = vsel %vm1208, %v1538, %v1598
      %v1667 = vsel %vm1208, %v1539, %v1600
      %v1668 = vsel %vm1208, %v1540, %v1602
      %v1669 = vsel %vm1208, %v1541, %v1604
      %v1670 = vsel %vm1208, %v1542, %v1606
      %vm1671 = vcmask 64512
      %v1672 = vsel %vm1671, %v1663, %v1640
      %v1673 = vsel %vm1671, %v1664, %v1642
      %v1674 = vsel %vm1671, %v1665, %v1644
      %v1675 = vsel %vm1671, %v1666, %v1646
      %v1676 = vsel %vm1671, %v1667, %v1648
      %v1677 = vsel %vm1671, %v1668, %v1650
      %v1678 = vsel %vm1671, %v1669, %v1652
      %v1679 = vsel %vm1671, %v1670, %v1654
      %v1680 = vpack.c.bf16 %v1673, %v1672
      %v1681 = vpack.c.bf16 %v1675, %v1674
      %v1682 = vpack.c.bf16 %v1677, %v1676
      %v1683 = vpack.c.bf16 %v1679, %v1678
      %v1684 = vld [vmem:[%s1] sm:$0xf]
      %v1685 = vld [vmem:[%s1 + $0x4] sm:$0x3]
      %v1688 = vunpack.c.l.b16 %v1684
      %v1689 = vunpack.c.l.b16 %v1685
      %v1690 = vpack.c.b16 %v1689, %v1688
      %vm1691 = vcmask 97280
      %v1693 = vsel %vm1691, %v1680, 0
      %v1696 = vsel %vm1691, %v1681, 0
      %v1699 = vsel %vm1691, %v1682, 0
      %v1702 = vsel %vm1691, %v1683, 0
      %v1705 = vsel %vm1615, %v1690, 0
      %1707 = vmatprep.subr.bf16.mxu0 0
      %1708 = vmatpush1.bf16.msra.mxu0 0
      %1709 = vmatprep.subr.bf16.mxu0 0
      %1710 = vmatpush1.bf16.msra.mxu0 0
      %1711 = vmatprep.subr.bf16.mxu0 0
      %1712 = vmatpush1.bf16.msra.mxu0 0
      %1713 = vmatprep.subr.bf16.mxu0 0
      %1714 = vmatpush1.bf16.msra.mxu0 0
      %1715 = vmatprep.subr.bf16.mxu0 0
      %1716 = vmatpush1.bf16.msra.mxu0 0
      %1717 = vmatprep.subr.bf16.mxu0 0
      %1718 = vmatpush1.bf16.msra.mxu0 0
      %1719 = vmatprep.subr.bf16.mxu0 0
      %1720 = vmatpush1.bf16.msra.mxu0 0
      %1721 = vmatprep.subr.bf16.mxu0 0
      %1722 = vmatpush1.bf16.msra.mxu0 %v1705
      %1723 = vmatprep.subr.bf16.mxu0 0
      %1724 = vmatpush2.bf16.msra.mxu0 0
      %1725 = vmatprep.subr.bf16.mxu0 0
      %1726 = vmatpush2.bf16.msra.mxu0 0
      %1727 = vmatprep.subr.bf16.mxu0 0
      %1728 = vmatpush2.bf16.msra.mxu0 0
      %1729 = vmatprep.subr.bf16.mxu0 0
      %1730 = vmatpush2.bf16.msra.mxu0 0
      %1731 = vmatprep.subr.bf16.mxu0 0
      %1732 = vmatpush2.bf16.msra.mxu0 0
      %1733 = vmatprep.subr.bf16.mxu0 0
      %1734 = vmatpush2.bf16.msra.mxu0 0
      %1735 = vmatprep.subr.bf16.mxu0 0
      %1736 = vmatpush2.bf16.msra.mxu0 0
      %1737 = vmatprep.subr.bf16.mxu0 0
      %1738 = vmatpush2.bf16.msra.mxu0 0
      %1739 = vmatprep.mubr.bf16.mxu0 0
      %1740 = vmatmul.mubr.bf16.gmra.mxu0 %v1693
      %v1741 = vpop.f32.mrf.mxu0
      %v1742 = vadd.f32 0.0, %v1741
      %v1743 = vpop.f32.mrf.mxu0
      %v1744 = vpop.f32.mrf.mxu0
      %v1745 = vadd.f32 0.0, %v1744
      %v1746 = vpop.f32.mrf.mxu0
      %1747 = vmatprep.mubr.bf16.mxu0 0
      %1748 = vmatmul.mubr.bf16.gmra.mxu0 %v1696
      %v1749 = vpop.f32.mrf.mxu0
      %v1750 = vadd.f32 0.0, %v1749
      %v1751 = vpop.f32.mrf.mxu0
      %v1752 = vpop.f32.mrf.mxu0
      %v1753 = vadd.f32 0.0, %v1752
      %v1754 = vpop.f32.mrf.mxu0
      %1755 = vmatprep.mubr.bf16.mxu0 0
      %1756 = vmatmul.mubr.bf16.gmra.mxu0 %v1699
      %v1757 = vpop.f32.mrf.mxu0
      %v1758 = vadd.f32 0.0, %v1757
      %v1759 = vpop.f32.mrf.mxu0
      %v1760 = vpop.f32.mrf.mxu0
      %v1761 = vadd.f32 0.0, %v1760
      %v1762 = vpop.f32.mrf.mxu0
      %1763 = vmatprep.mubr.bf16.mxu0 0
      %1764 = vmatmul.mubr.bf16.gmra.mxu0 %v1702
      %v1765 = vpop.f32.mrf.mxu0
      %v1766 = vadd.f32 0.0, %v1765
      %v1767 = vpop.f32.mrf.mxu0
      %v1768 = vpop.f32.mrf.mxu0
      %v1769 = vadd.f32 0.0, %v1768
      %v1770 = vpop.f32.mrf.mxu0
      %1771 = vdwg.mxu0
      %1772 = vst [vmem:[#allocation2] sm:$0xff] %v1742
      %1773 = vst [vmem:[#allocation2 + $0x8] sm:$0xff] %v1745
      %1774 = vst [vmem:[#allocation2 + $0x10] sm:$0xff] %v1750
      %1775 = vst [vmem:[#allocation2 + $0x18] sm:$0xff] %v1753
      %1776 = vst [vmem:[#allocation2 + $0x20] sm:$0xff] %v1758
      %1777 = vst [vmem:[#allocation2 + $0x28] sm:$0xff] %v1761
      %1778 = vst [vmem:[#allocation2 + $0x30] sm:$0xff] %v1766
      %1779 = vst [vmem:[#allocation2 + $0x38] sm:$0xff] %v1769
      %v1782 = vrot.slane %v1543, 1
      %v1783 = vrot.slane %v1551, 1
      %v1784 = vsel %vm1567, %v1782, %v1783
      %1785 = vrot.lane.b32.xlu0 %v1784, 4
      %v1786 = vpop.permute.xlu0 %1785
      %v1788 = vrot.slane %v1543, 2
      %v1789 = vrot.slane %v1551, 2
      %v1790 = vsel %vm1615, %v1788, %v1789
      %1791 = vrot.lane.b32.xlu0 %v1790, 8
      %v1792 = vpop.permute.xlu0 %1791
      %v1794 = vsel %vm1208, %v1543, %v1786
      %v1795 = vsel %vm1671, %v1794, %v1792
      %v1796 = vpack.c.bf16 %v1674, %v1673
      %v1797 = vpack.c.bf16 %v1676, %v1675
      %v1798 = vpack.c.bf16 %v1678, %v1677
      %v1799 = vpack.c.bf16 %v1795, %v1679
      %s1800 = scalar_lea.vmem %s1, 8
      %v1801 = vld [vmem:[%s1800] sm:$0xf]
      %v1802 = vld [vmem:[%s1800 + $0x4] sm:$0x3]
      %v1805 = vunpack.c.l.b16 %v1801
      %v1806 = vunpack.c.l.b16 %v1802
      %v1807 = vpack.c.b16 %v1806, %v1805
      %v1809 = vsel %vm1691, %v1796, 0
      %v1812 = vsel %vm1691, %v1797, 0
      %v1815 = vsel %vm1691, %v1798, 0
      %v1818 = vsel %vm1691, %v1799, 0
      %v1821 = vsel %vm1615, %v1807, 0
      %1823 = vmatprep.subr.bf16.mxu0 0
      %1824 = vmatpush1.bf16.msra.mxu0 0
      %1825 = vmatprep.subr.bf16.mxu0 0
      %1826 = vmatpush1.bf16.msra.mxu0 0
      %1827 = vmatprep.subr.bf16.mxu0 0
      %1828 = vmatpush1.bf16.msra.mxu0 0
      %1829 = vmatprep.subr.bf16.mxu0 0
      %1830 = vmatpush1.bf16.msra.mxu0 0
      %1831 = vmatprep.subr.bf16.mxu0 0
      %1832 = vmatpush1.bf16.msra.mxu0 0
      %1833 = vmatprep.subr.bf16.mxu0 0
      %1834 = vmatpush1.bf16.msra.mxu0 0
      %1835 = vmatprep.subr.bf16.mxu0 0
      %1836 = vmatpush1.bf16.msra.mxu0 0
      %1837 = vmatprep.subr.bf16.mxu0 0
      %1838 = vmatpush1.bf16.msra.mxu0 %v1821
      %1839 = vmatprep.subr.bf16.mxu0 0
      %1840 = vmatpush2.bf16.msra.mxu0 0
      %1841 = vmatprep.subr.bf16.mxu0 0
      %1842 = vmatpush2.bf16.msra.mxu0 0
      %1843 = vmatprep.subr.bf16.mxu0 0
      %1844 = vmatpush2.bf16.msra.mxu0 0
      %1845 = vmatprep.subr.bf16.mxu0 0
      %1846 = vmatpush2.bf16.msra.mxu0 0
      %1847 = vmatprep.subr.bf16.mxu0 0
      %1848 = vmatpush2.bf16.msra.mxu0 0
      %1849 = vmatprep.subr.bf16.mxu0 0
      %1850 = vmatpush2.bf16.msra.mxu0 0
      %1851 = vmatprep.subr.bf16.mxu0 0
      %1852 = vmatpush2.bf16.msra.mxu0 0
      %1853 = vmatprep.subr.bf16.mxu0 0
      %1854 = vmatpush2.bf16.msra.mxu0 0
      %1855 = vmatprep.mubr.bf16.mxu0 0
      %1856 = vmatmul.mubr.bf16.gmra.mxu0 %v1809
      %v1857 = vpop.f32.mrf.mxu0
      %v1858 = vadd.f32 0.0, %v1857
      %v1859 = vpop.f32.mrf.mxu0
      %v1860 = vpop.f32.mrf.mxu0
      %v1861 = vadd.f32 0.0, %v1860
      %v1862 = vpop.f32.mrf.mxu0
      %1863 = vmatprep.mubr.bf16.mxu0 0
      %1864 = vmatmul.mubr.bf16.gmra.mxu0 %v1812
      %v1865 = vpop.f32.mrf.mxu0
      %v1866 = vadd.f32 0.0, %v1865
      %v1867 = vpop.f32.mrf.mxu0
      %v1868 = vpop.f32.mrf.mxu0
      %v1869 = vadd.f32 0.0, %v1868
      %v1870 = vpop.f32.mrf.mxu0
      %1871 = vmatprep.mubr.bf16.mxu0 0
      %1872 = vmatmul.mubr.bf16.gmra.mxu0 %v1815
      %v1873 = vpop.f32.mrf.mxu0
      %v1874 = vadd.f32 0.0, %v1873
      %v1875 = vpop.f32.mrf.mxu0
      %v1876 = vpop.f32.mrf.mxu0
      %v1877 = vadd.f32 0.0, %v1876
      %v1878 = vpop.f32.mrf.mxu0
      %1879 = vmatprep.mubr.bf16.mxu0 0
      %1880 = vmatmul.mubr.bf16.gmra.mxu0 %v1818
      %v1881 = vpop.f32.mrf.mxu0
      %v1882 = vadd.f32 0.0, %v1881
      %v1883 = vpop.f32.mrf.mxu0
      %v1884 = vpop.f32.mrf.mxu0
      %v1885 = vadd.f32 0.0, %v1884
      %v1886 = vpop.f32.mrf.mxu0
      %1887 = vdwg.mxu0
      %v1888 = vld [vmem:[#allocation2] sm:$0xff]
      %v1889 = vld [vmem:[#allocation2 + $0x8] sm:$0xff]
      %v1890 = vld [vmem:[#allocation2 + $0x10] sm:$0xff]
      %v1891 = vld [vmem:[#allocation2 + $0x18] sm:$0xff]
      %v1892 = vld [vmem:[#allocation2 + $0x20] sm:$0xff]
      %v1893 = vld [vmem:[#allocation2 + $0x28] sm:$0xff]
      %v1894 = vld [vmem:[#allocation2 + $0x30] sm:$0xff]
      %v1895 = vld [vmem:[#allocation2 + $0x38] sm:$0xff]
      %v1896 = vadd.f32 %v1888, %v1858
      %v1897 = vadd.f32 %v1889, %v1861
      %v1898 = vadd.f32 %v1890, %v1866
      %v1899 = vadd.f32 %v1891, %v1869
      %v1900 = vadd.f32 %v1892, %v1874
      %v1901 = vadd.f32 %v1893, %v1877
      %v1902 = vadd.f32 %v1894, %v1882
      %v1903 = vadd.f32 %v1895, %v1885
      %1904 = vst [vmem:[#allocation2] sm:$0xff] %v1896
      %1905 = vst [vmem:[#allocation2 + $0x8] sm:$0xff] %v1897
      %1906 = vst [vmem:[#allocation2 + $0x10] sm:$0xff] %v1898
      %1907 = vst [vmem:[#allocation2 + $0x18] sm:$0xff] %v1899
      %1908 = vst [vmem:[#allocation2 + $0x20] sm:$0xff] %v1900
      %1909 = vst [vmem:[#allocation2 + $0x28] sm:$0xff] %v1901
      %1910 = vst [vmem:[#allocation2 + $0x30] sm:$0xff] %v1902
      %1911 = vst [vmem:[#allocation2 + $0x38] sm:$0xff] %v1903
      %v1912 = vpack.c.bf16 %v1672, %v1795
      %s1913 = scalar_lea.vmem %s1, 16
      %v1914 = vld [vmem:[%s1913] sm:$0xf]
      %v1915 = vld [vmem:[%s1913 + $0x4] sm:$0x3]
      %v1918 = vunpack.c.l.b16 %v1914
      %v1919 = vunpack.c.l.b16 %v1915
      %v1920 = vpack.c.b16 %v1919, %v1918
      %v1922 = vsel %vm1691, %v1912, 0
      %v1925 = vsel %vm1615, %v1920, 0
      %1927 = vmatprep.subr.bf16.mxu0 0
      %1928 = vmatpush1.bf16.msra.mxu0 0
      %1929 = vmatprep.subr.bf16.mxu0 0
      %1930 = vmatpush1.bf16.msra.mxu0 0
      %1931 = vmatprep.subr.bf16.mxu0 0
      %1932 = vmatpush1.bf16.msra.mxu0 0
      %1933 = vmatprep.subr.bf16.mxu0 0
      %1934 = vmatpush1.bf16.msra.mxu0 0
      %1935 = vmatprep.subr.bf16.mxu0 0
      %1936 = vmatpush1.bf16.msra.mxu0 0
      %1937 = vmatprep.subr.bf16.mxu0 0
      %1938 = vmatpush1.bf16.msra.mxu0 0
      %1939 = vmatprep.subr.bf16.mxu0 0
      %1940 = vmatpush1.bf16.msra.mxu0 0
      %1941 = vmatprep.subr.bf16.mxu0 0
      %1942 = vmatpush1.bf16.msra.mxu0 %v1925
      %1943 = vmatprep.subr.bf16.mxu0 0
      %1944 = vmatpush2.bf16.msra.mxu0 0
      %1945 = vmatprep.subr.bf16.mxu0 0
      %1946 = vmatpush2.bf16.msra.mxu0 0
      %1947 = vmatprep.subr.bf16.mxu0 0
      %1948 = vmatpush2.bf16.msra.mxu0 0
      %1949 = vmatprep.subr.bf16.mxu0 0
      %1950 = vmatpush2.bf16.msra.mxu0 0
      %1951 = vmatprep.subr.bf16.mxu0 0
      %1952 = vmatpush2.bf16.msra.mxu0 0
      %1953 = vmatprep.subr.bf16.mxu0 0
      %1954 = vmatpush2.bf16.msra.mxu0 0
      %1955 = vmatprep.subr.bf16.mxu0 0
      %1956 = vmatpush2.bf16.msra.mxu0 0
      %1957 = vmatprep.subr.bf16.mxu0 0
      %1958 = vmatpush2.bf16.msra.mxu0 0
      %1959 = vmatprep.mubr.bf16.mxu0 0
      %1960 = vmatmul.mubr.bf16.gmra.mxu0 %v1696
      %v1961 = vpop.f32.mrf.mxu0
      %v1962 = vadd.f32 0.0, %v1961
      %v1963 = vpop.f32.mrf.mxu0
      %v1964 = vpop.f32.mrf.mxu0
      %v1965 = vadd.f32 0.0, %v1964
      %v1966 = vpop.f32.mrf.mxu0
      %1967 = vmatprep.mubr.bf16.mxu0 0
      %1968 = vmatmul.mubr.bf16.gmra.mxu0 %v1699
      %v1969 = vpop.f32.mrf.mxu0
      %v1970 = vadd.f32 0.0, %v1969
      %v1971 = vpop.f32.mrf.mxu0
      %v1972 = vpop.f32.mrf.mxu0
      %v1973 = vadd.f32 0.0, %v1972
      %v1974 = vpop.f32.mrf.mxu0
      %1975 = vmatprep.mubr.bf16.mxu0 0
      %1976 = vmatmul.mubr.bf16.gmra.mxu0 %v1702
      %v1977 = vpop.f32.mrf.mxu0
      %v1978 = vadd.f32 0.0, %v1977
      %v1979 = vpop.f32.mrf.mxu0
      %v1980 = vpop.f32.mrf.mxu0
      %v1981 = vadd.f32 0.0, %v1980
      %v1982 = vpop.f32.mrf.mxu0
      %1983 = vmatprep.mubr.bf16.mxu0 0
      %1984 = vmatmul.mubr.bf16.gmra.mxu0 %v1922
      %v1985 = vpop.f32.mrf.mxu0
      %v1986 = vadd.f32 0.0, %v1985
      %v1987 = vpop.f32.mrf.mxu0
      %v1988 = vpop.f32.mrf.mxu0
      %v1989 = vadd.f32 0.0, %v1988
      %v1990 = vpop.f32.mrf.mxu0
      %1991 = vdwg.mxu0
      %v1992 = vld [vmem:[#allocation2] sm:$0xff]
      %v1993 = vld [vmem:[#allocation2 + $0x8] sm:$0xff]
      %v1994 = vld [vmem:[#allocation2 + $0x10] sm:$0xff]
      %v1995 = vld [vmem:[#allocation2 + $0x18] sm:$0xff]
      %v1996 = vld [vmem:[#allocation2 + $0x20] sm:$0xff]
      %v1997 = vld [vmem:[#allocation2 + $0x28] sm:$0xff]
      %v1998 = vld [vmem:[#allocation2 + $0x30] sm:$0xff]
      %v1999 = vld [vmem:[#allocation2 + $0x38] sm:$0xff]
      %v2000 = vadd.f32 %v1992, %v1962
      %v2001 = vadd.f32 %v1993, %v1965
      %v2002 = vadd.f32 %v1994, %v1970
      %v2003 = vadd.f32 %v1995, %v1973
      %v2004 = vadd.f32 %v1996, %v1978
      %v2005 = vadd.f32 %v1997, %v1981
      %v2006 = vadd.f32 %v1998, %v1986
      %v2007 = vadd.f32 %v1999, %v1989
      %2008 = vst [vmem:[#allocation2] sm:$0xff] %v2000
      %2009 = vst [vmem:[#allocation2 + $0x8] sm:$0xff] %v2001
      %2010 = vst [vmem:[#allocation2 + $0x10] sm:$0xff] %v2002
      %2011 = vst [vmem:[#allocation2 + $0x18] sm:$0xff] %v2003
      %2012 = vst [vmem:[#allocation2 + $0x20] sm:$0xff] %v2004
      %2013 = vst [vmem:[#allocation2 + $0x28] sm:$0xff] %v2005
      %2014 = vst [vmem:[#allocation2 + $0x30] sm:$0xff] %v2006
      %2015 = vst [vmem:[#allocation2 + $0x38] sm:$0xff] %v2007
      %v2016 = vld [vmem:[#allocation2] sm:$0xff]
      %v2017 = vld [vmem:[#allocation2 + $0x8] sm:$0xff]
      %v2018 = vld [vmem:[#allocation2 + $0x10] sm:$0xff]
      %v2019 = vld [vmem:[#allocation2 + $0x18] sm:$0xff]
      %v2020 = vld [vmem:[#allocation2 + $0x20] sm:$0xff]
      %v2021 = vld [vmem:[#allocation2 + $0x28] sm:$0xff]
      %v2022 = vld [vmem:[#allocation2 + $0x30] sm:$0xff]
      %v2023 = vld [vmem:[#allocation2 + $0x38] sm:$0xff]
      %v2024 = vadd.f32 %v2016, %v2017
      %v2025 = vadd.f32 %v2024, %v2018
      %v2026 = vadd.f32 %v2025, %v2019
      %v2027 = vadd.f32 %v2026, %v2020
      %v2028 = vadd.f32 %v2027, %v2021
      %v2029 = vadd.f32 %v2028, %v2022
      %v2030 = vadd.f32 %v2029, %v2023
      %v2031 = vrot.slane %v2030, 4
      %v2032 = vadd.f32 %v2030, %v2031
      %v2033 = vrot.slane %v2032, 2
      %v2034 = vadd.f32 %v2032, %v2033
      %v2035 = vrot.slane %v2034, 1
      %v2036 = vadd.f32 %v2034, %v2035
      %v2037 = vmul.f32 %v2016, %v2016
      %v2038 = vmul.f32 %v2017, %v2017
      %v2039 = vmul.f32 %v2018, %v2018
      %v2040 = vmul.f32 %v2019, %v2019
      %v2041 = vmul.f32 %v2020, %v2020
      %v2042 = vmul.f32 %v2021, %v2021
      %v2043 = vmul.f32 %v2022, %v2022
      %v2044 = vmul.f32 %v2023, %v2023
      %v2045 = vadd.f32 %v2037, %v2038
      %v2046 = vadd.f32 %v2045, %v2039
      %v2047 = vadd.f32 %v2046, %v2040
      %v2048 = vadd.f32 %v2047, %v2041
      %v2049 = vadd.f32 %v2048, %v2042
      %v2050 = vadd.f32 %v2049, %v2043
      %v2051 = vadd.f32 %v2050, %v2044
      %v2052 = vrot.slane %v2051, 4
      %v2053 = vadd.f32 %v2051, %v2052
      %v2054 = vrot.slane %v2053, 2
      %v2055 = vadd.f32 %v2053, %v2054
      %v2056 = vrot.slane %v2055, 1
      %v2057 = vadd.f32 %v2055, %v2056
      %v2058 = vsel %vm1535, %v2036, %v2057
      %2059 = vst [vmem:[%s181] sm:$0x3] %v2058
      %2060 = vst [vmem:[%s177] sm:$0xff] %v2016
      %2061 = vst [vmem:[%s177 + $0x8] sm:$0xff] %v2017
      %2062 = vst [vmem:[%s177 + $0x10] sm:$0xff] %v2018
      %2063 = vst [vmem:[%s177 + $0x18] sm:$0xff] %v2019
      %2064 = vst [vmem:[%s177 + $0x20] sm:$0xff] %v2020
      %2065 = vst [vmem:[%s177 + $0x28] sm:$0xff] %v2021
      %2066 = vst [vmem:[%s177 + $0x30] sm:$0xff] %v2022
      %2067 = vst [vmem:[%s177 + $0x38] sm:$0xff] %v2023
      %p2068 = scmp.lt.s32.totalorder %s15, 1
      %s2069 = scalar_select %p2068, %s15, 1
      %s2070 = smul.addr %s2069, 8
      %s2071 = smul.addr %s2070, 8
      %s2072 = scalar_lea.vmem %s2, %s2071
      %p2073 = scmp.lt.s32.totalorder %s15, 1
      %s2074 = scalar_select %p2073, %s15, 1
      %s2075 = smul.addr %s2074, 2
      %s2076 = scalar_lea.vmem %s3, %s2075
      // Predicated region
      $region29: #{down_forward_nhwc.3} parent=27 // pred_check
        %p2077 = pneg %p80
      $region30: #{down_forward_nhwc.3} parent=27 // pred_check_branch
        %2079 = sbr.rel (%p2077) target = $region32
      $region31: #{down_forward_nhwc.3} parent=27 // pred_region
        _
      $region32: #{down_forward_nhwc.3} parent=27 // pred_fallthru
        _
      // Predicated region
      $region33: #{down_forward_nhwc.3} parent=27 // pred_check
        %p2080 = pneg %p106
      $region34: #{down_forward_nhwc.3} parent=27 // pred_check_branch
        %2082 = sbr.rel (%p2080) target = $region36
      $region35: #{down_forward_nhwc.3} parent=27 // pred_region
        _
      $region36: #{down_forward_nhwc.3} parent=27 // pred_fallthru
        _
    $region28: #{down_forward_nhwc.3} parent=5 // pred_fallthru
      _
    %p2083 = scmp.le.s32.totalorder 2, %s10
    // Predicated region
    $region37: #{down_forward_nhwc.3} parent=5 // pred_check
      %p2084 = pneg %p2083
    $region38: #{down_forward_nhwc.3} parent=5 // pred_check_branch
      %2086 = sbr.rel (%p2084) target = $region40
    $region39: #{down_forward_nhwc.3} parent=5 // pred_region
      %s2087 = ssub.s32 %s10, 2
      // Predicated region
      $region41: #{down_forward_nhwc.3} parent=39 // pred_check
        %p2088 = pneg %p86
      $region42: #{down_forward_nhwc.3} parent=39 // pred_check_branch
        %2090 = sbr.rel (%p2088) target = $region44
      $region43: #{down_forward_nhwc.3} parent=39 // pred_region
        %p2091 = scmp.lt.s32.totalorder %s16, 1
        %s2092 = scalar_select %p2091, %s16, 1
        %s2093 = smul.addr %s2092, 8
        %s2094 = smul.addr %s2093, 8
        %s2095 = scalar_lea.vmem %s2, %s2094
      $region44: #{down_forward_nhwc.3} parent=39 // pred_fallthru
        _
      // Predicated region
      $region45: #{down_forward_nhwc.3} parent=39 // pred_check
        %p2096 = pneg %p112
      $region46: #{down_forward_nhwc.3} parent=39 // pred_check_branch
        %2098 = sbr.rel (%p2096) target = $region48
      $region47: #{down_forward_nhwc.3} parent=39 // pred_region
        %p2099 = scmp.lt.s32.totalorder %s16, 1
        %s2100 = scalar_select %p2099, %s16, 1
        %s2101 = smul.addr %s2100, 2
        %s2102 = scalar_lea.vmem %s3, %s2101
      $region48: #{down_forward_nhwc.3} parent=39 // pred_fallthru
        _
    $region40: #{down_forward_nhwc.3} parent=5 // pred_fallthru
      _
  $region6: #{down_forward_nhwc.3} parent=0 // loop_footer
    %s14 = sadd.s32 1, %s10
  $region7: #{down_forward_nhwc.3} parent=0 // loop_footer_branch
    %9 = sbr.rel target = $region3
  $region8: #{down_forward_nhwc.3} parent=0 // loop_exit
    _

</llo_original>
